<compile_context>
chip_gen: v5e
topology: v5e:2x2
jax: 0.10.0
libtpu: 0.0.40
codegen_flags: <defaults>
</compile_context>

<pallas_src>
import functools

import jax
import jax.numpy as jnp
from jax import lax
from jax.experimental import pallas as pl
from jax.experimental.pallas import tpu as pltpu

EPS = 1e-4  # matches get_norm_layer(..., norm_type='bn') eps


def _round_up(x, m):
    return ((x + m - 1) // m) * m


def _row_tile(m, cap=1024):
    """Largest row-tile <= cap that divides m and is a multiple of 8."""
    for t in range(min(m, cap), 7, -1):
        if t % 8 == 0 and m % t == 0:
            return t
    return m


def _pick_strip_rows(h2, w2, max_rows):
    """Largest TH dividing h2 with TH*w2 <= max_rows (w2 is a multiple of 8)."""
    best = 1
    for th in range(1, h2 + 1):
        if h2 % th == 0 and th * w2 <= max_rows:
            best = th
    return best


def _elu(x):
    # ELU(alpha=1): x if x > 0 else exp(x) - 1 (clamp arg of untaken branch).
    return jnp.where(x > 0, x, jnp.exp(jnp.minimum(x, 0.0)) - 1.0)


def _compiler_params(semantics, block_bytes, scratch_bytes=0, temp_bytes=0):
    """dimension_semantics + an explicit scoped-VMEM limit with headroom."""
    est = 2 * block_bytes + scratch_bytes + temp_bytes  # double-buffered blocks
    lim = max(32 << 20, min(int(est * 1.5), 64 << 20))  # stay under v7x physical
    return pltpu.CompilerParams(dimension_semantics=semantics,
                                vmem_limit_bytes=lim)


# ----------------------------------------------------------------------------
# Kernel 1: per-column sum / sum-of-squares partials (BN1 batch statistics).
#   Emits per-tile partials with a "parallel" grid (megacore friendly); the
#   tiny (T, 2, C) result is reduced in JAX.
# ----------------------------------------------------------------------------
def _stats_kernel(x_ref, o_ref):
    x = x_ref[...].astype(jnp.float32)
    s = jnp.sum(x, axis=0, keepdims=True)
    q = jnp.sum(x * x, axis=0, keepdims=True)
    o_ref[...] = jnp.concatenate([s, q], axis=0).reshape(o_ref.shape)


def _col_stats(x2d):
    M, C = x2d.shape
    tile = _row_tile(M)
    T = M // tile
    cp = _compiler_params(
        ("parallel",),
        block_bytes=tile * C * x2d.dtype.itemsize + 2 * C * 4,
        temp_bytes=tile * C * 4)
    return pl.pallas_call(
        _stats_kernel,
        out_shape=jax.ShapeDtypeStruct((T, 2, C), jnp.float32),
        grid=(T,),
        in_specs=[pl.BlockSpec((tile, C), lambda i: (i, 0))],
        out_specs=pl.BlockSpec((1, 2, C), lambda i: (i, 0, 0)),
        compiler_params=cp,
    )(x2d)


# ----------------------------------------------------------------------------
# Kernel 2: fused BN1-apply + ELU + conv1 (stride-2 3x3 == 2x2 conv on the
#   space-to-depth layout) + fused BN2 partial statistics.
#   One grid step = one TH-row strip of one image.  Emits lane-dense bf16
#   `skip` and `mid` plus f32 per-strip sum/sumsq of mid.
# ----------------------------------------------------------------------------
def _conv1_kernel(x_ref, xh_ref, sc_ref, sh_ref, w_ref, b_ref,
                  skip_ref, mid_ref, st_ref, scr_ref):
    THp1, Wp1, C = scr_ref.shape        # scratch = (TH+1, W2+1, C4p) bf16
    TH, W2 = THp1 - 1, Wp1 - 1
    R = TH * W2
    Coutp = skip_ref.shape[1]
    Cmidp = mid_ref.shape[1]

    scale = sc_ref[...]                 # (1, C4p) f32
    shift = sh_ref[...]

    def bn_act_bf16(v):
        v = v.astype(jnp.float32) * scale + shift
        return _elu(v).astype(jnp.bfloat16)

    s = pl.program_id(1)

    # Halo: top row is the previous strip's last row (zeros at the image top);
    # left column is conv zero-padding.  Only the halo is (re)initialized each
    # step -- the interior is fully overwritten below.
    top = bn_act_bf16(xh_ref[...])                       # (W2, C4p)
    top = jnp.where(s == 0, jnp.zeros_like(top), top)
    scr_ref[0:1, 1:Wp1, :] = top.reshape(1, W2, C)
    scr_ref[:, 0:1, :] = jnp.zeros((THp1, 1, C), jnp.bfloat16)
    scr_ref[1:THp1, 1:Wp1, :] = bn_act_bf16(x_ref[...]).reshape(TH, W2, C)

    # stride-2 3x3 conv == 2x2 conv on s2d layout: one deep-K MXU matmul
    # against the tap/output-concatenated weight (4*C4p, Coutp+Cmidp).
    taps = []
    for dy in range(2):
        for dx in range(2):
            taps.append(scr_ref[dy:dy + TH, dx:dx + W2, :].reshape(R, C))
    t = jnp.concatenate(taps, axis=-1)                   # (R, 4*C4p) bf16
    acc = jnp.dot(t, w_ref[...], preferred_element_type=jnp.float32) + b_ref[...]

    skip = acc[:, :Coutp]                                # 128-aligned slices
    mid = acc[:, Coutp:]
    skip_ref[...] = skip.astype(skip_ref.dtype)
    mid_ref[...] = mid.astype(mid_ref.dtype)

    # fused BN2 partial statistics for this strip (f32, before the bf16 store)
    m_sum = jnp.sum(mid, axis=0, keepdims=True)
    m_sq = jnp.sum(mid * mid, axis=0, keepdims=True)
    st_ref[...] = jnp.concatenate([m_sum, m_sq], axis=0).reshape(1, 1, 2, Cmidp)


def _fused_bn_elu_conv1(x_s2d, scale1p, shift1p, w1, b1c,
                        N, H2, W2, TH, Coutp, Cmidp):
    M, C4p = x_s2d.shape
    S = H2 // TH
    R = TH * W2
    Cw = Coutp + Cmidp
    xib = x_s2d.dtype.itemsize
    cp = _compiler_params(
        ("parallel", "parallel"),
        block_bytes=(R * C4p * xib + W2 * C4p * xib + 2 * C4p * 4
                     + 4 * C4p * Cw * 2 + Cw * 4
                     + R * Coutp * 2 + R * Cmidp * 2 + 2 * Cmidp * 4),
        scratch_bytes=(TH + 1) * (W2 + 1) * C4p * 2,
        temp_bytes=R * 4 * C4p * 2 + R * Cw * 4 + R * C4p * 4)
    return pl.pallas_call(
        _conv1_kernel,
        out_shape=(jax.ShapeDtypeStruct((M, Coutp), jnp.bfloat16),
                   jax.ShapeDtypeStruct((M, Cmidp), jnp.bfloat16),
                   jax.ShapeDtypeStruct((N, S, 2, Cmidp), jnp.float32)),
        grid=(N, S),
        in_specs=[
            # TH-row strip of the current image
            pl.BlockSpec((R, C4p), lambda n, s: (n * S + s, 0)),
            # 1-row top halo (previous strip's last row; clamped at the top)
            pl.BlockSpec((W2, C4p),
                         lambda n, s: (jnp.maximum(n * H2 + s * TH - 1,
                                                   n * H2), 0)),
            pl.BlockSpec((1, C4p), lambda n, s: (0, 0)),
            pl.BlockSpec((1, C4p), lambda n, s: (0, 0)),
            pl.BlockSpec((4 * C4p, Cw), lambda n, s: (0, 0)),
            pl.BlockSpec((1, Cw), lambda n, s: (0, 0)),
        ],
        out_specs=(
            pl.BlockSpec((R, Coutp), lambda n, s: (n * S + s, 0)),
            pl.BlockSpec((R, Cmidp), lambda n, s: (n * S + s, 0)),
            pl.BlockSpec((1, 1, 2, Cmidp), lambda n, s: (n, s, 0, 0)),
        ),
        scratch_shapes=[pltpu.VMEM((TH + 1, W2 + 1, C4p), jnp.bfloat16)],
        compiler_params=cp,
    )(x_s2d, x_s2d, scale1p, shift1p, w1, b1c)


# ----------------------------------------------------------------------------
# Kernel 3: fused BN2-apply + ELU + conv2 (stride-1 3x3) + residual add.
#   One grid step = one TH-row strip; top/bottom halo rows fetched as 1-row
#   blocks of the same mid2d array.
# ----------------------------------------------------------------------------
def _conv2_kernel(m_ref, mt_ref, mb_ref, sc_ref, sh_ref, w_ref, b_ref,
                  skip_ref, o_ref, scr_ref):
    THp2, Wp2, C = scr_ref.shape        # scratch = (TH+2, W2+2, Cmidp) bf16
    TH, W2 = THp2 - 2, Wp2 - 2
    R = TH * W2

    scale = sc_ref[...]
    shift = sh_ref[...]

    def bn_act_bf16(v):
        v = v.astype(jnp.float32) * scale + shift
        return _elu(v).astype(jnp.bfloat16)

    s = pl.program_id(1)
    S = pl.num_programs(1)

    top = bn_act_bf16(mt_ref[...])
    top = jnp.where(s == 0, jnp.zeros_like(top), top)
    bot = bn_act_bf16(mb_ref[...])
    bot = jnp.where(s == S - 1, jnp.zeros_like(bot), bot)

    # halo rows / columns only; interior fully overwritten below
    scr_ref[0:1, 1:Wp2 - 1, :] = top.reshape(1, W2, C)
    scr_ref[THp2 - 1:THp2, 1:Wp2 - 1, :] = bot.reshape(1, W2, C)
    scr_ref[:, 0:1, :] = jnp.zeros((THp2, 1, C), jnp.bfloat16)
    scr_ref[:, Wp2 - 1:Wp2, :] = jnp.zeros((THp2, 1, C), jnp.bfloat16)
    scr_ref[1:THp2 - 1, 1:Wp2 - 1, :] = bn_act_bf16(m_ref[...]).reshape(TH, W2, C)

    taps = []
    for ky in range(3):
        for kx in range(3):
            taps.append(scr_ref[ky:ky + TH, kx:kx + W2, :].reshape(R, C))
    t = jnp.concatenate(taps, axis=-1)                   # (R, 9*Cmidp) bf16
    acc = jnp.dot(t, w_ref[...], preferred_element_type=jnp.float32)
    acc = acc + b_ref[...] + skip_ref[...].astype(jnp.float32)
    o_ref[...] = acc.astype(o_ref.dtype)


def _fused_bn_elu_conv2_res(mid2d, scale2p, shift2p, w2, b2, skip2d,
                            N, H2, W2, TH):
    M, Cmidp = mid2d.shape
    Coutp = w2.shape[-1]
    S = H2 // TH
    R = TH * W2
    cp = _compiler_params(
        ("parallel", "parallel"),
        block_bytes=(R * Cmidp * 2 + 2 * W2 * Cmidp * 2 + 2 * Cmidp * 4
                     + 9 * Cmidp * Coutp * 2 + Coutp * 4
                     + R * Coutp * 2 + R * Coutp * 4),
        scratch_bytes=(TH + 2) * (W2 + 2) * Cmidp * 2,
        temp_bytes=R * 9 * Cmidp * 2 + R * Coutp * 4 + R * Cmidp * 4)
    return pl.pallas_call(
        _conv2_kernel,
        out_shape=jax.ShapeDtypeStruct((M, Coutp), jnp.float32),
        grid=(N, S),
        in_specs=[
            pl.BlockSpec((R, Cmidp), lambda n, s: (n * S + s, 0)),
            # top halo row (clamped + zeroed at the image top)
            pl.BlockSpec((W2, Cmidp),
                         lambda n, s: (jnp.maximum(n * H2 + s * TH - 1,
                                                   n * H2), 0)),
            # bottom halo row (clamped + zeroed at the image bottom)
            pl.BlockSpec((W2, Cmidp),
                         lambda n, s: (jnp.minimum(n * H2 + (s + 1) * TH,
                                                   n * H2 + H2 - 1), 0)),
            pl.BlockSpec((1, Cmidp), lambda n, s: (0, 0)),
            pl.BlockSpec((1, Cmidp), lambda n, s: (0, 0)),
            pl.BlockSpec((9 * Cmidp, Coutp), lambda n, s: (0, 0)),
            pl.BlockSpec((1, Coutp), lambda n, s: (0, 0)),
            pl.BlockSpec((R, Coutp), lambda n, s: (n * S + s, 0)),
        ],
        out_specs=pl.BlockSpec((R, Coutp), lambda n, s: (n * S + s, 0)),
        scratch_shapes=[pltpu.VMEM((TH + 2, W2 + 2, Cmidp), jnp.bfloat16)],
        compiler_params=cp,
    )(mid2d, mid2d, mid2d, scale2p, shift2p, w2, b2, skip2d)


# ----------------------------------------------------------------------------
# Weight transforms (tiny, done in JAX on parameters only)
# ----------------------------------------------------------------------------
def _conv1_weight_s2d(w_oihw):
    """(C1, Cin, 3, 3) stride-2 conv weight -> (4, 4*Cin, C1) taps on the
    space-to-depth layout (tap index dy*2+dx, channel index (p*2+q)*Cin+c)."""
    C1, Cin, KH, KW = w_oihw.shape
    assert KH == 3 and KW == 3
    kmap = {0: (0, 1), 1: (1, 0), 2: (1, 1)}   # orig tap k -> (delta+1, phase)
    wt = jnp.zeros((2, 2, 2, 2, Cin, C1), w_oihw.dtype)
    for ky in range(3):
        dy, p = kmap[ky]
        for kx in range(3):
            dx, q = kmap[kx]
            wt = wt.at[dy, dx, p, q].set(jnp.transpose(w_oihw[:, :, ky, kx]))
    return wt.reshape(4, 4 * Cin, C1)


# ----------------------------------------------------------------------------
# ResDown parameters and forward
# ----------------------------------------------------------------------------
def init_resdown_params(key, channel_in, channel_out, k=3):
    c1_out = channel_out // 2 + channel_out
    c_mid = channel_out // 2
    k1, k2, k3, k4 = jax.random.split(key, 4)

    def conv_w(kk, co, ci):
        bound = 1.0 / (ci * k * k) ** 0.5
        return jax.random.uniform(kk, (co, ci, k, k), jnp.float32, -bound, bound)

    return dict(
        bn1_gamma=jnp.ones((channel_in,), jnp.float32),
        bn1_beta=jnp.zeros((channel_in,), jnp.float32),
        conv1_w=conv_w(k1, c1_out, channel_in),
        conv1_b=jax.random.uniform(k2, (c1_out,), jnp.float32, -0.1, 0.1),
        bn2_gamma=jnp.ones((c_mid,), jnp.float32),
        bn2_beta=jnp.zeros((c_mid,), jnp.float32),
        conv2_w=conv_w(k3, channel_out, c_mid),
        conv2_b=jax.random.uniform(k4, (channel_out,), jnp.float32, -0.1, 0.1),
    )


def res_down_forward(params, x_nchw, channel_out, k=3, max_strip_rows=1024):
    """ResDown.forward.  x_nchw: (N, C_in, H, W) -> (N, C_out, H/2, W/2)."""
    assert k == 3, "only kernel_size=3 supported"
    N, Cin, H, W = x_nchw.shape
    assert H % 2 == 0 and W % 2 == 0
    H2, W2 = H // 2, W // 2
    assert W2 % 8 == 0, "W/2 must be a multiple of 8"
    Cout = channel_out
    Cmid = Cout // 2
    C4 = 4 * Cin
    C4p = _round_up(C4, 128)         # lane-dense contraction channels
    Coutp = _round_up(Cout, 128)     # lane-dense output channels
    Cmidp = _round_up(Cmid, 128)
    Cw = Coutp + Cmidp
    M = N * H2 * W2

    # Row-strip size (bounds per-step VMEM independent of image resolution).
    TH = _pick_strip_rows(H2, W2, max_strip_rows)

    # Space-to-depth + lane padding (single copy; folds conv1's stride 2 so all
    # in-kernel tap reads are contiguous VMEM slices).
    x_s2d = x_nchw.reshape(N, Cin, H2, 2, W2, 2).transpose(0, 2, 4, 3, 5, 1)
    x_s2d = x_s2d.reshape(N, H2, W2, C4)
    x_s2d = jnp.pad(x_s2d, ((0, 0), (0, 0), (0, 0), (0, C4p - C4)))
    x_s2d = x_s2d.reshape(M, C4p)

    # ---- BN1 batch statistics (parallel partial reduction), fold phases ----
    parts = _col_stats(x_s2d)                        # (T, 2, C4p)
    tot = jnp.sum(parts, axis=0)                     # (2, C4p)
    cnt1 = float(N * H * W)
    s1 = jnp.sum(tot[0, :C4].reshape(4, Cin), axis=0)
    q1 = jnp.sum(tot[1, :C4].reshape(4, Cin), axis=0)
    mean1 = s1 / cnt1
    var1 = jnp.maximum(q1 / cnt1 - mean1 * mean1, 0.0)    # biased var
    scale1 = params["bn1_gamma"] * lax.rsqrt(var1 + EPS)
    shift1 = params["bn1_beta"] - mean1 * scale1
    scale1p = jnp.pad(jnp.tile(scale1, 4), (0, C4p - C4)).reshape(1, C4p)
    shift1p = jnp.pad(jnp.tile(shift1, 4), (0, C4p - C4)).reshape(1, C4p)

    # ---- conv1 weights -> s2d taps, concat skip+mid outputs, pad, bf16 ----
    w1t = _conv1_weight_s2d(params["conv1_w"])            # (4, C4, Cout+Cmid)
    w1s = jnp.pad(w1t[..., :Cout],
                  ((0, 0), (0, C4p - C4), (0, Coutp - Cout)))
    w1m = jnp.pad(w1t[..., Cout:],
                  ((0, 0), (0, C4p - C4), (0, Cmidp - Cmid)))
    w1 = jnp.concatenate([w1s, w1m], axis=-1)             # (4, C4p, Cw)
    w1 = w1.reshape(4 * C4p, Cw).astype(jnp.bfloat16)     # deep-K operand
    b1 = params["conv1_b"]
    b1c = jnp.concatenate([jnp.pad(b1[:Cout], (0, Coutp - Cout)),
                           jnp.pad(b1[Cout:], (0, Cmidp - Cmid))]).reshape(1, Cw)

    # x = act(norm1(x)); x_cat = conv1(x) -> skip, mid (+ fused BN2 partials)
    skip2d, mid2d, st_parts = _fused_bn_elu_conv1(
        x_s2d, scale1p, shift1p, w1, b1c, N, H2, W2, TH, Coutp, Cmidp)

    # ---- BN2 statistics from the fused per-strip partials ----
    st = jnp.sum(st_parts, axis=(0, 1))                   # (2, Cmidp)
    mean2 = st[0, :Cmid] / M
    var2 = jnp.maximum(st[1, :Cmid] / M - mean2 * mean2, 0.0)
    scale2 = params["bn2_gamma"] * lax.rsqrt(var2 + EPS)
    shift2 = params["bn2_beta"] - mean2 * scale2
    scale2p = jnp.pad(scale2, (0, Cmidp - Cmid)).reshape(1, Cmidp)
    shift2p = jnp.pad(shift2, (0, Cmidp - Cmid)).reshape(1, Cmidp)

    # ---- conv2 weights: (Cout, Cmid, 3, 3) -> (9*Cmidp, Coutp) bf16 ----
    w2 = jnp.transpose(params["conv2_w"], (2, 3, 1, 0)).reshape(9, Cmid, Cout)
    w2 = jnp.pad(w2, ((0, 0), (0, Cmidp - Cmid), (0, Coutp - Cout)))
    w2 = w2.reshape(9 * Cmidp, Coutp).astype(jnp.bfloat16)
    b2 = jnp.pad(params["conv2_b"], (0, Coutp - Cout)).reshape(1, Coutp)

    # x = act(norm2(x)); x = conv2(x) + skip  (one fused kernel)
    out2d = _fused_bn_elu_conv2_res(mid2d, scale2p, shift2p, w2, b2, skip2d,
                                    N, H2, W2, TH)

    out = out2d.reshape(N, H2, W2, Coutp)[..., :Cout]
    return jnp.transpose(out, (0, 3, 1, 2))               # back to NCHW


# ----------------------------------------------------------------------------
# Pure-JAX (XLA) reference of the PyTorch module, f32 throughout.
# ----------------------------------------------------------------------------
def _reference_forward(params, x, channel_out):
    def bn(v, gamma, beta):
        mean = jnp.mean(v, axis=(0, 2, 3))
        var = jnp.var(v, axis=(0, 2, 3))
        scale = gamma * lax.rsqrt(var + EPS)
        shift = beta - mean * scale
        return v * scale[None, :, None, None] + shift[None, :, None, None]

    def conv(v, w, b, stride):
        o = lax.conv_general_dilated(
            v, w, (stride, stride), ((1, 1), (1, 1)),
            dimension_numbers=("NCHW", "OIHW", "NCHW"))
        return o + b[None, :, None, None]

    a = _elu(bn(x, params["bn1_gamma"], params["bn1_beta"]))
    x_cat = conv(a, params["conv1_w"], params["conv1_b"], 2)
    skip = x_cat[:, :channel_out]
    mid = x_cat[:, channel_out:]
    a2 = _elu(bn(mid, params["bn2_gamma"], params["bn2_beta"]))
    return conv(a2, params["conv2_w"], params["conv2_b"], 1) + skip


if __name__ == "__main__":
    key = jax.random.PRNGKey(0)
    kx, kp = jax.random.split(key)

    N, Cin, Cout, H, W = 2, 4, 8, 16, 16
    x = jax.random.normal(kx, (N, Cin, H, W), jnp.float32)
    params = init_resdown_params(kp, Cin, Cout)

    # max_strip_rows=32 -> TH=4 row strips (2 strips per image) so the halo
    # paths are exercised even at this small test resolution.
    fwd = jax.jit(functools.partial(res_down_forward, channel_out=Cout,
                                    max_strip_rows=32))
    y = fwd(params, x)
    jax.block_until_ready(y)

    assert y.shape == (N, Cout, H // 2, W // 2), y.shape
    assert bool(jnp.all(jnp.isfinite(y)))

    # Correctness vs. a pure-f32 XLA reference (bf16 weights/activations in the
    # kernel -> loose tolerance).
    y_ref = _reference_forward(params, x, Cout)
    err = float(jnp.max(jnp.abs(y - y_ref)))
    assert err < 0.2, f"max abs error vs reference: {err}"
    print("KERNEL_OK")
</pallas_src>

<mosaic_0001>
module attributes {stable_mosaic.version = 11 : i64} {
  func.func @_stats_kernel(%arg0: i32, %arg1: memref<128x128xf32, #tpu.memory_space<vmem>>, %arg2: memref<1x2x128xf32, #tpu.memory_space<vmem>>) attributes {dimension_semantics = [#tpu.dimension_semantics<parallel>], iteration_bounds = array<i64: 1>, scalar_prefetch = 0 : i64, scratch_operands = 0 : i64, tpu.core_type = #tpu.core_type<tc>, window_params = [{transform_indices = @transform_0, window_bounds = array<i64: 128, 128>}, {transform_indices = @transform_1, window_bounds = array<i64: 1, 2, 128>}]} {
    %c0 = arith.constant 0 : index
    %c0_0 = arith.constant 0 : index
    %0 = vector.load %arg1[%c0, %c0_0] : memref<128x128xf32, #tpu.memory_space<vmem>>, vector<128x128xf32>
    %cst = arith.constant dense<0.000000e+00> : vector<128xf32>
    %1 = vector.multi_reduction <add>, %0, %cst [0] : vector<128x128xf32> to vector<128xf32>
    %2 = vector.shape_cast %1 : vector<128xf32> to vector<1x128xf32>
    %3 = arith.mulf %0, %0 : vector<128x128xf32>
    %cst_1 = arith.constant dense<0.000000e+00> : vector<128xf32>
    %4 = vector.multi_reduction <add>, %3, %cst_1 [0] : vector<128x128xf32> to vector<128xf32>
    %5 = vector.shape_cast %4 : vector<128xf32> to vector<1x128xf32>
    %6 = tpu.concatenate %2, %5 in 0 : vector<1x128xf32>, vector<1x128xf32> -> vector<2x128xf32>
    %7 = vector.shape_cast %6 : vector<2x128xf32> to vector<1x2x128xf32>
    %c0_2 = arith.constant 0 : index
    %c0_3 = arith.constant 0 : index
    %c0_4 = arith.constant 0 : index
    %8 = vector.load %arg2[%c0_2, %c0_3, %c0_4] : memref<1x2x128xf32, #tpu.memory_space<vmem>>, vector<1x2x128xf32>
    tpu.vector_store %arg2[%c0_2, %c0_3, %c0_4], %7 {strides = array<i32>} : memref<1x2x128xf32, #tpu.memory_space<vmem>>, vector<1x2x128xf32>,
    return
  }
  func.func @transform_0(%arg0: i32) -> (i32, i32) {
    %c0_i32 = arith.constant 0 : i32
    %c0_i32_0 = arith.constant 0 : i32
    return %arg0, %c0_i32 : i32, i32
  }
  func.func @transform_1(%arg0: i32) -> (i32, i32, i32) {
    %c0_i32 = arith.constant 0 : i32
    %c0_i32_0 = arith.constant 0 : i32
    %c0_i32_1 = arith.constant 0 : i32
    return %arg0, %c0_i32, %c0_i32_0 : i32, i32, i32
  }
}

module attributes {stable_mosaic.version = 11 : i64} {
  func.func @_conv1_kernel(%arg0: i32, %arg1: i32, %arg2: memref<32x128xf32, #tpu.memory_space<vmem>>, %arg3: memref<8x128xf32, #tpu.memory_space<vmem>>, %arg4: memref<1x128xf32, #tpu.memory_space<vmem>>, %arg5: memref<1x128xf32, #tpu.memory_space<vmem>>, %arg6: memref<512x256xbf16, #tpu.memory_space<vmem>>, %arg7: memref<1x256xf32, #tpu.memory_space<vmem>>, %arg8: memref<32x128xbf16, #tpu.memory_space<vmem>>, %arg9: memref<32x128xbf16, #tpu.memory_space<vmem>>, %arg10: memref<1x1x2x128xf32, #tpu.memory_space<vmem>>, %arg11: memref<5x9x128xbf16, #tpu.memory_space<vmem>>) attributes {dimension_semantics = [#tpu.dimension_semantics<parallel>, #tpu.dimension_semantics<parallel>], iteration_bounds = array<i64: 2, 2>, scalar_prefetch = 0 : i64, scratch_operands = 1 : i64, tpu.core_type = #tpu.core_type<tc>, window_params = [{transform_indices = @transform_0, window_bounds = array<i64: 32, 128>}, {transform_indices = @transform_1, window_bounds = array<i64: 8, 128>}, {pipeline_mode = #tpu.pipeline_mode<synchronous>, transform_indices = @transform_2, window_bounds = array<i64: 1, 128>}, {pipeline_mode = #tpu.pipeline_mode<synchronous>, transform_indices = @transform_3, window_bounds = array<i64: 1, 128>}, {pipeline_mode = #tpu.pipeline_mode<synchronous>, transform_indices = @transform_4, window_bounds = array<i64: 512, 256>}, {pipeline_mode = #tpu.pipeline_mode<synchronous>, transform_indices = @transform_5, window_bounds = array<i64: 1, 256>}, {transform_indices = @transform_6, window_bounds = array<i64: 32, 128>}, {transform_indices = @transform_7, window_bounds = array<i64: 32, 128>}, {transform_indices = @transform_8, window_bounds = array<i64: 1, 1, 2, 128>}]} {
    %c0 = arith.constant 0 : index
    %c0_0 = arith.constant 0 : index
    %0 = vector.load %arg4[%c0, %c0_0] : memref<1x128xf32, #tpu.memory_space<vmem>>, vector<1x128xf32>
    %c0_1 = arith.constant 0 : index
    %c0_2 = arith.constant 0 : index
    %1 = vector.load %arg5[%c0_1, %c0_2] : memref<1x128xf32, #tpu.memory_space<vmem>>, vector<1x128xf32>
    %c0_3 = arith.constant 0 : index
    %c0_4 = arith.constant 0 : index
    %2 = vector.load %arg3[%c0_3, %c0_4] : memref<8x128xf32, #tpu.memory_space<vmem>>, vector<8x128xf32>
    %3 = vector.broadcast %0 : vector<1x128xf32> to vector<8x128xf32>
    %4 = arith.mulf %2, %3 : vector<8x128xf32>
    %5 = vector.broadcast %1 : vector<1x128xf32> to vector<8x128xf32>
    %6 = arith.addf %4, %5 : vector<8x128xf32>
    %cst = arith.constant 0.000000e+00 : f32
    %7 = vector.broadcast %cst : f32 to vector<8x128xf32>
    %8 = arith.cmpf ogt, %6, %7 : vector<8x128xf32>
    %cst_5 = arith.constant 0.000000e+00 : f32
    %9 = vector.broadcast %cst_5 : f32 to vector<8x128xf32>
    %10 = arith.minimumf %6, %9 : vector<8x128xf32>
    %11 = math.exp %10 : vector<8x128xf32>
    %cst_6 = arith.constant 1.000000e+00 : f32
    %12 = vector.broadcast %cst_6 : f32 to vector<8x128xf32>
    %13 = arith.subf %11, %12 : vector<8x128xf32>
    %14 = arith.select %8, %6, %13 : vector<8x128xi1>, vector<8x128xf32>
    %15 = arith.truncf %14 : vector<8x128xf32> to vector<8x128xbf16>
    %c0_i32 = arith.constant 0 : i32
    %16 = arith.cmpi eq, %arg1, %c0_i32 : i32
    %cst_7 = arith.constant 0.000000e+00 : bf16
    %17 = vector.broadcast %cst_7 : bf16 to vector<8x128xbf16>
    %18 = arith.select %16, %17, %15 : vector<8x128xbf16>
    %19 = vector.shape_cast %18 : vector<8x128xbf16> to vector<1x8x128xbf16>
    %c0_8 = arith.constant 0 : index
    %c1 = arith.constant 1 : index
    %c0_9 = arith.constant 0 : index
    %20 = vector.load %arg11[%c0_8, %c1, %c0_9] : memref<5x9x128xbf16, #tpu.memory_space<vmem>>, vector<1x8x128xbf16>
    tpu.vector_store %arg11[%c0_8, %c1, %c0_9], %19 {strides = array<i32>} : memref<5x9x128xbf16, #tpu.memory_space<vmem>>, vector<1x8x128xbf16>,
    %cst_10 = arith.constant 0.000000e+00 : bf16
    %21 = vector.broadcast %cst_10 : bf16 to vector<5x1x128xbf16>
    %c0_11 = arith.constant 0 : index
    %c0_12 = arith.constant 0 : index
    %c0_13 = arith.constant 0 : index
    %22 = vector.load %arg11[%c0_11, %c0_12, %c0_13] : memref<5x9x128xbf16, #tpu.memory_space<vmem>>, vector<5x1x128xbf16>
    tpu.vector_store %arg11[%c0_11, %c0_12, %c0_13], %21 {strides = array<i32>} : memref<5x9x128xbf16, #tpu.memory_space<vmem>>, vector<5x1x128xbf16>,
    %c0_14 = arith.constant 0 : index
    %c0_15 = arith.constant 0 : index
    %23 = vector.load %arg2[%c0_14, %c0_15] : memref<32x128xf32, #tpu.memory_space<vmem>>, vector<32x128xf32>
    %24 = vector.broadcast %0 : vector<1x128xf32> to vector<32x128xf32>
    %25 = arith.mulf %23, %24 : vector<32x128xf32>
    %26 = vector.broadcast %1 : vector<1x128xf32> to vector<32x128xf32>
    %27 = arith.addf %25, %26 : vector<32x128xf32>
    %cst_16 = arith.constant 0.000000e+00 : f32
    %28 = vector.broadcast %cst_16 : f32 to vector<32x128xf32>
    %29 = arith.cmpf ogt, %27, %28 : vector<32x128xf32>
    %cst_17 = arith.constant 0.000000e+00 : f32
    %30 = vector.broadcast %cst_17 : f32 to vector<32x128xf32>
    %31 = arith.minimumf %27, %30 : vector<32x128xf32>
    %32 = math.exp %31 : vector<32x128xf32>
    %cst_18 = arith.constant 1.000000e+00 : f32
    %33 = vector.broadcast %cst_18 : f32 to vector<32x128xf32>
    %34 = arith.subf %32, %33 : vector<32x128xf32>
    %35 = arith.select %29, %27, %34 : vector<32x128xi1>, vector<32x128xf32>
    %36 = arith.truncf %35 : vector<32x128xf32> to vector<32x128xbf16>
    %37 = vector.shape_cast %36 : vector<32x128xbf16> to vector<4x8x128xbf16>
    %c1_19 = arith.constant 1 : index
    %c1_20 = arith.constant 1 : index
    %c0_21 = arith.constant 0 : index
    %38 = vector.load %arg11[%c1_19, %c1_20, %c0_21] : memref<5x9x128xbf16, #tpu.memory_space<vmem>>, vector<4x8x128xbf16>
    tpu.vector_store %arg11[%c1_19, %c1_20, %c0_21], %37 {strides = array<i32>} : memref<5x9x128xbf16, #tpu.memory_space<vmem>>, vector<4x8x128xbf16>,
    %c0_22 = arith.constant 0 : index
    %c0_23 = arith.constant 0 : index
    %c0_24 = arith.constant 0 : index
    %39 = vector.load %arg11[%c0_22, %c0_23, %c0_24] : memref<5x9x128xbf16, #tpu.memory_space<vmem>>, vector<4x8x128xbf16>
    %40 = vector.shape_cast %39 : vector<4x8x128xbf16> to vector<32x128xbf16>
    %c0_25 = arith.constant 0 : index
    %c1_26 = arith.constant 1 : index
    %c0_27 = arith.constant 0 : index
    %41 = vector.load %arg11[%c0_25, %c1_26, %c0_27] : memref<5x9x128xbf16, #tpu.memory_space<vmem>>, vector<4x8x128xbf16>
    %42 = vector.shape_cast %41 : vector<4x8x128xbf16> to vector<32x128xbf16>
    %c1_28 = arith.constant 1 : index
    %c0_29 = arith.constant 0 : index
    %c0_30 = arith.constant 0 : index
    %43 = vector.load %arg11[%c1_28, %c0_29, %c0_30] : memref<5x9x128xbf16, #tpu.memory_space<vmem>>, vector<4x8x128xbf16>
    %44 = vector.shape_cast %43 : vector<4x8x128xbf16> to vector<32x128xbf16>
    %c1_31 = arith.constant 1 : index
    %c1_32 = arith.constant 1 : index
    %c0_33 = arith.constant 0 : index
    %45 = vector.load %arg11[%c1_31, %c1_32, %c0_33] : memref<5x9x128xbf16, #tpu.memory_space<vmem>>, vector<4x8x128xbf16>
    %46 = vector.shape_cast %45 : vector<4x8x128xbf16> to vector<32x128xbf16>
    %47 = tpu.concatenate %40, %42, %44, %46 in 1 : vector<32x128xbf16>, vector<32x128xbf16>, vector<32x128xbf16>, vector<32x128xbf16> -> vector<32x512xbf16>
    %c0_34 = arith.constant 0 : index
    %c0_35 = arith.constant 0 : index
    %48 = vector.load %arg6[%c0_34, %c0_35] : memref<512x256xbf16, #tpu.memory_space<vmem>>, vector<512x256xbf16>
    %cst_36 = arith.constant dense<0.000000e+00> : vector<32x256xf32>
    %49 = tpu.matmul %47, %48, %cst_36 {dimension_numbers = #tpu.dot_dimension_numbers<[1], [0], [0], [1], [0, 0, 1, 1], [], []>} : vector<32x512xbf16>, vector<512x256xbf16>, vector<32x256xf32> -> vector<32x256xf32>
    %c0_37 = arith.constant 0 : index
    %c0_38 = arith.constant 0 : index
    %50 = vector.load %arg7[%c0_37, %c0_38] : memref<1x256xf32, #tpu.memory_space<vmem>>, vector<1x256xf32>
    %51 = vector.broadcast %50 : vector<1x256xf32> to vector<32x256xf32>
    %52 = arith.addf %49, %51 : vector<32x256xf32>
    %53 = vector.extract_strided_slice %52 {offsets = [0, 0], sizes = [32, 128], strides = [1, 1]} : vector<32x256xf32> to vector<32x128xf32>
    %54 = vector.extract_strided_slice %52 {offsets = [0, 128], sizes = [32, 128], strides = [1, 1]} : vector<32x256xf32> to vector<32x128xf32>
    %55 = arith.truncf %53 : vector<32x128xf32> to vector<32x128xbf16>
    %c0_39 = arith.constant 0 : index
    %c0_40 = arith.constant 0 : index
    %56 = vector.load %arg8[%c0_39, %c0_40] : memref<32x128xbf16, #tpu.memory_space<vmem>>, vector<32x128xbf16>
    tpu.vector_store %arg8[%c0_39, %c0_40], %55 {strides = array<i32>} : memref<32x128xbf16, #tpu.memory_space<vmem>>, vector<32x128xbf16>,
    %57 = arith.truncf %54 : vector<32x128xf32> to vector<32x128xbf16>
    %c0_41 = arith.constant 0 : index
    %c0_42 = arith.constant 0 : index
    %58 = vector.load %arg9[%c0_41, %c0_42] : memref<32x128xbf16, #tpu.memory_space<vmem>>, vector<32x128xbf16>
    tpu.vector_store %arg9[%c0_41, %c0_42], %57 {strides = array<i32>} : memref<32x128xbf16, #tpu.memory_space<vmem>>, vector<32x128xbf16>,
    %cst_43 = arith.constant dense<0.000000e+00> : vector<128xf32>
    %59 = vector.multi_reduction <add>, %54, %cst_43 [0] : vector<32x128xf32> to vector<128xf32>
    %60 = vector.shape_cast %59 : vector<128xf32> to vector<1x128xf32>
    %61 = arith.mulf %54, %54 : vector<32x128xf32>
    %cst_44 = arith.constant dense<0.000000e+00> : vector<128xf32>
    %62 = vector.multi_reduction <add>, %61, %cst_44 [0] : vector<32x128xf32> to vector<128xf32>
    %63 = vector.shape_cast %62 : vector<128xf32> to vector<1x128xf32>
    %64 = tpu.concatenate %60, %63 in 0 : vector<1x128xf32>, vector<1x128xf32> -> vector<2x128xf32>
    %65 = vector.shape_cast %64 : vector<2x128xf32> to vector<1x1x2x128xf32>
    %c0_45 = arith.constant 0 : index
    %c0_46 = arith.constant 0 : index
    %c0_47 = arith.constant 0 : index
    %c0_48 = arith.constant 0 : index
    %66 = vector.load %arg10[%c0_45, %c0_46, %c0_47, %c0_48] : memref<1x1x2x128xf32, #tpu.memory_space<vmem>>, vector<1x1x2x128xf32>
    tpu.vector_store %arg10[%c0_45, %c0_46, %c0_47, %c0_48], %65 {strides = array<i32>} : memref<1x1x2x128xf32, #tpu.memory_space<vmem>>, vector<1x1x2x128xf32>,
    return
  }
  func.func @transform_0(%arg0: i32, %arg1: i32) -> (i32, i32) {
    %c2_i32 = arith.constant 2 : i32
    %0 = arith.muli %arg0, %c2_i32 : i32
    %1 = arith.addi %0, %arg1 : i32
    %c0_i32 = arith.constant 0 : i32
    %c0_i32_0 = arith.constant 0 : i32
    return %1, %c0_i32 : i32, i32
  }
  func.func @transform_1(%arg0: i32, %arg1: i32) -> (i32, i32) {
    %c8_i32 = arith.constant 8 : i32
    %0 = arith.muli %arg0, %c8_i32 : i32
    %c4_i32 = arith.constant 4 : i32
    %1 = arith.muli %arg1, %c4_i32 : i32
    %2 = arith.addi %0, %1 : i32
    %c1_i32 = arith.constant 1 : i32
    %3 = arith.subi %2, %c1_i32 : i32
    %c8_i32_0 = arith.constant 8 : i32
    %4 = arith.muli %arg0, %c8_i32_0 : i32
    %5 = arith.maxsi %3, %4 : i32
    %c0_i32 = arith.constant 0 : i32
    %c0_i32_1 = arith.constant 0 : i32
    return %5, %c0_i32 : i32, i32
  }
  func.func @transform_2(%arg0: i32, %arg1: i32) -> (i32, i32) {
    %c0_i32 = arith.constant 0 : i32
    %c0_i32_0 = arith.constant 0 : i32
    %c0_i32_1 = arith.constant 0 : i32
    return %c0_i32, %c0_i32_0 : i32, i32
  }
  func.func @transform_3(%arg0: i32, %arg1: i32) -> (i32, i32) {
    %c0_i32 = arith.constant 0 : i32
    %c0_i32_0 = arith.constant 0 : i32
    %c0_i32_1 = arith.constant 0 : i32
    return %c0_i32, %c0_i32_0 : i32, i32
  }
  func.func @transform_4(%arg0: i32, %arg1: i32) -> (i32, i32) {
    %c0_i32 = arith.constant 0 : i32
    %c0_i32_0 = arith.constant 0 : i32
    %c0_i32_1 = arith.constant 0 : i32
    return %c0_i32, %c0_i32_0 : i32, i32
  }
  func.func @transform_5(%arg0: i32, %arg1: i32) -> (i32, i32) {
    %c0_i32 = arith.constant 0 : i32
    %c0_i32_0 = arith.constant 0 : i32
    %c0_i32_1 = arith.constant 0 : i32
    return %c0_i32, %c0_i32_0 : i32, i32
  }
  func.func @transform_6(%arg0: i32, %arg1: i32) -> (i32, i32) {
    %c2_i32 = arith.constant 2 : i32
    %0 = arith.muli %arg0, %c2_i32 : i32
    %1 = arith.addi %0, %arg1 : i32
    %c0_i32 = arith.constant 0 : i32
    %c0_i32_0 = arith.constant 0 : i32
    return %1, %c0_i32 : i32, i32
  }
  func.func @transform_7(%arg0: i32, %arg1: i32) -> (i32, i32) {
    %c2_i32 = arith.constant 2 : i32
    %0 = arith.muli %arg0, %c2_i32 : i32
    %1 = arith.addi %0, %arg1 : i32
    %c0_i32 = arith.constant 0 : i32
    %c0_i32_0 = arith.constant 0 : i32
    return %1, %c0_i32 : i32, i32
  }
  func.func @transform_8(%arg0: i32, %arg1: i32) -> (i32, i32, i32, i32) {
    %c0_i32 = arith.constant 0 : i32
    %c0_i32_0 = arith.constant 0 : i32
    %c0_i32_1 = arith.constant 0 : i32
    return %arg0, %arg1, %c0_i32, %c0_i32_0 : i32, i32, i32, i32
  }
}

module attributes {stable_mosaic.version = 11 : i64} {
  func.func @_conv2_kernel(%arg0: i32, %arg1: i32, %arg2: memref<32x128xbf16, #tpu.memory_space<vmem>>, %arg3: memref<8x128xbf16, #tpu.memory_space<vmem>>, %arg4: memref<8x128xbf16, #tpu.memory_space<vmem>>, %arg5: memref<1x128xf32, #tpu.memory_space<vmem>>, %arg6: memref<1x128xf32, #tpu.memory_space<vmem>>, %arg7: memref<1152x128xbf16, #tpu.memory_space<vmem>>, %arg8: memref<1x128xf32, #tpu.memory_space<vmem>>, %arg9: memref<32x128xbf16, #tpu.memory_space<vmem>>, %arg10: memref<32x128xf32, #tpu.memory_space<vmem>>, %arg11: memref<6x10x128xbf16, #tpu.memory_space<vmem>>) attributes {dimension_semantics = [#tpu.dimension_semantics<parallel>, #tpu.dimension_semantics<parallel>], iteration_bounds = array<i64: 2, 2>, scalar_prefetch = 0 : i64, scratch_operands = 1 : i64, tpu.core_type = #tpu.core_type<tc>, window_params = [{transform_indices = @transform_0, window_bounds = array<i64: 32, 128>}, {transform_indices = @transform_1, window_bounds = array<i64: 8, 128>}, {transform_indices = @transform_2, window_bounds = array<i64: 8, 128>}, {pipeline_mode = #tpu.pipeline_mode<synchronous>, transform_indices = @transform_3, window_bounds = array<i64: 1, 128>}, {pipeline_mode = #tpu.pipeline_mode<synchronous>, transform_indices = @transform_4, window_bounds = array<i64: 1, 128>}, {pipeline_mode = #tpu.pipeline_mode<synchronous>, transform_indices = @transform_5, window_bounds = array<i64: 1152, 128>}, {pipeline_mode = #tpu.pipeline_mode<synchronous>, transform_indices = @transform_6, window_bounds = array<i64: 1, 128>}, {transform_indices = @transform_7, window_bounds = array<i64: 32, 128>}, {transform_indices = @transform_8, window_bounds = array<i64: 32, 128>}]} {
    %c0 = arith.constant 0 : index
    %c0_0 = arith.constant 0 : index
    %0 = vector.load %arg5[%c0, %c0_0] : memref<1x128xf32, #tpu.memory_space<vmem>>, vector<1x128xf32>
    %c0_1 = arith.constant 0 : index
    %c0_2 = arith.constant 0 : index
    %1 = vector.load %arg6[%c0_1, %c0_2] : memref<1x128xf32, #tpu.memory_space<vmem>>, vector<1x128xf32>
    %c0_3 = arith.constant 0 : index
    %c0_4 = arith.constant 0 : index
    %2 = vector.load %arg3[%c0_3, %c0_4] : memref<8x128xbf16, #tpu.memory_space<vmem>>, vector<8x128xbf16>
    %3 = arith.extf %2 : vector<8x128xbf16> to vector<8x128xf32>
    %4 = vector.broadcast %0 : vector<1x128xf32> to vector<8x128xf32>
    %5 = arith.mulf %3, %4 : vector<8x128xf32>
    %6 = vector.broadcast %1 : vector<1x128xf32> to vector<8x128xf32>
    %7 = arith.addf %5, %6 : vector<8x128xf32>
    %cst = arith.constant 0.000000e+00 : f32
    %8 = vector.broadcast %cst : f32 to vector<8x128xf32>
    %9 = arith.cmpf ogt, %7, %8 : vector<8x128xf32>
    %cst_5 = arith.constant 0.000000e+00 : f32
    %10 = vector.broadcast %cst_5 : f32 to vector<8x128xf32>
    %11 = arith.minimumf %7, %10 : vector<8x128xf32>
    %12 = math.exp %11 : vector<8x128xf32>
    %cst_6 = arith.constant 1.000000e+00 : f32
    %13 = vector.broadcast %cst_6 : f32 to vector<8x128xf32>
    %14 = arith.subf %12, %13 : vector<8x128xf32>
    %15 = arith.select %9, %7, %14 : vector<8x128xi1>, vector<8x128xf32>
    %16 = arith.truncf %15 : vector<8x128xf32> to vector<8x128xbf16>
    %c0_i32 = arith.constant 0 : i32
    %17 = arith.cmpi eq, %arg1, %c0_i32 : i32
    %cst_7 = arith.constant 0.000000e+00 : bf16
    %18 = vector.broadcast %cst_7 : bf16 to vector<8x128xbf16>
    %19 = arith.select %17, %18, %16 : vector<8x128xbf16>
    %c0_8 = arith.constant 0 : index
    %c0_9 = arith.constant 0 : index
    %20 = vector.load %arg4[%c0_8, %c0_9] : memref<8x128xbf16, #tpu.memory_space<vmem>>, vector<8x128xbf16>
    %21 = arith.extf %20 : vector<8x128xbf16> to vector<8x128xf32>
    %22 = vector.broadcast %0 : vector<1x128xf32> to vector<8x128xf32>
    %23 = arith.mulf %21, %22 : vector<8x128xf32>
    %24 = vector.broadcast %1 : vector<1x128xf32> to vector<8x128xf32>
    %25 = arith.addf %23, %24 : vector<8x128xf32>
    %cst_10 = arith.constant 0.000000e+00 : f32
    %26 = vector.broadcast %cst_10 : f32 to vector<8x128xf32>
    %27 = arith.cmpf ogt, %25, %26 : vector<8x128xf32>
    %cst_11 = arith.constant 0.000000e+00 : f32
    %28 = vector.broadcast %cst_11 : f32 to vector<8x128xf32>
    %29 = arith.minimumf %25, %28 : vector<8x128xf32>
    %30 = math.exp %29 : vector<8x128xf32>
    %cst_12 = arith.constant 1.000000e+00 : f32
    %31 = vector.broadcast %cst_12 : f32 to vector<8x128xf32>
    %32 = arith.subf %30, %31 : vector<8x128xf32>
    %33 = arith.select %27, %25, %32 : vector<8x128xi1>, vector<8x128xf32>
    %34 = arith.truncf %33 : vector<8x128xf32> to vector<8x128xbf16>
    %c1_i32 = arith.constant 1 : i32
    %35 = arith.cmpi eq, %arg1, %c1_i32 : i32
    %cst_13 = arith.constant 0.000000e+00 : bf16
    %36 = vector.broadcast %cst_13 : bf16 to vector<8x128xbf16>
    %37 = arith.select %35, %36, %34 : vector<8x128xbf16>
    %38 = vector.shape_cast %19 : vector<8x128xbf16> to vector<1x8x128xbf16>
    %c0_14 = arith.constant 0 : index
    %c1 = arith.constant 1 : index
    %c0_15 = arith.constant 0 : index
    %39 = vector.load %arg11[%c0_14, %c1, %c0_15] : memref<6x10x128xbf16, #tpu.memory_space<vmem>>, vector<1x8x128xbf16>
    tpu.vector_store %arg11[%c0_14, %c1, %c0_15], %38 {strides = array<i32>} : memref<6x10x128xbf16, #tpu.memory_space<vmem>>, vector<1x8x128xbf16>,
    %40 = vector.shape_cast %37 : vector<8x128xbf16> to vector<1x8x128xbf16>
    %c5 = arith.constant 5 : index
    %c1_16 = arith.constant 1 : index
    %c0_17 = arith.constant 0 : index
    %41 = vector.load %arg11[%c5, %c1_16, %c0_17] : memref<6x10x128xbf16, #tpu.memory_space<vmem>>, vector<1x8x128xbf16>
    tpu.vector_store %arg11[%c5, %c1_16, %c0_17], %40 {strides = array<i32>} : memref<6x10x128xbf16, #tpu.memory_space<vmem>>, vector<1x8x128xbf16>,
    %cst_18 = arith.constant 0.000000e+00 : bf16
    %42 = vector.broadcast %cst_18 : bf16 to vector<6x1x128xbf16>
    %c0_19 = arith.constant 0 : index
    %c0_20 = arith.constant 0 : index
    %c0_21 = arith.constant 0 : index
    %43 = vector.load %arg11[%c0_19, %c0_20, %c0_21] : memref<6x10x128xbf16, #tpu.memory_space<vmem>>, vector<6x1x128xbf16>
    tpu.vector_store %arg11[%c0_19, %c0_20, %c0_21], %42 {strides = array<i32>} : memref<6x10x128xbf16, #tpu.memory_space<vmem>>, vector<6x1x128xbf16>,
    %cst_22 = arith.constant 0.000000e+00 : bf16
    %44 = vector.broadcast %cst_22 : bf16 to vector<6x1x128xbf16>
    %c0_23 = arith.constant 0 : index
    %c9 = arith.constant 9 : index
    %c0_24 = arith.constant 0 : index
    %45 = vector.load %arg11[%c0_23, %c9, %c0_24] : memref<6x10x128xbf16, #tpu.memory_space<vmem>>, vector<6x1x128xbf16>
    tpu.vector_store %arg11[%c0_23, %c9, %c0_24], %44 {strides = array<i32>} : memref<6x10x128xbf16, #tpu.memory_space<vmem>>, vector<6x1x128xbf16>,
    %c0_25 = arith.constant 0 : index
    %c0_26 = arith.constant 0 : index
    %46 = vector.load %arg2[%c0_25, %c0_26] : memref<32x128xbf16, #tpu.memory_space<vmem>>, vector<32x128xbf16>
    %47 = arith.extf %46 : vector<32x128xbf16> to vector<32x128xf32>
    %48 = vector.broadcast %0 : vector<1x128xf32> to vector<32x128xf32>
    %49 = arith.mulf %47, %48 : vector<32x128xf32>
    %50 = vector.broadcast %1 : vector<1x128xf32> to vector<32x128xf32>
    %51 = arith.addf %49, %50 : vector<32x128xf32>
    %cst_27 = arith.constant 0.000000e+00 : f32
    %52 = vector.broadcast %cst_27 : f32 to vector<32x128xf32>
    %53 = arith.cmpf ogt, %51, %52 : vector<32x128xf32>
    %cst_28 = arith.constant 0.000000e+00 : f32
    %54 = vector.broadcast %cst_28 : f32 to vector<32x128xf32>
    %55 = arith.minimumf %51, %54 : vector<32x128xf32>
    %56 = math.exp %55 : vector<32x128xf32>
    %cst_29 = arith.constant 1.000000e+00 : f32
    %57 = vector.broadcast %cst_29 : f32 to vector<32x128xf32>
    %58 = arith.subf %56, %57 : vector<32x128xf32>
    %59 = arith.select %53, %51, %58 : vector<32x128xi1>, vector<32x128xf32>
    %60 = arith.truncf %59 : vector<32x128xf32> to vector<32x128xbf16>
    %61 = vector.shape_cast %60 : vector<32x128xbf16> to vector<4x8x128xbf16>
    %c1_30 = arith.constant 1 : index
    %c1_31 = arith.constant 1 : index
    %c0_32 = arith.constant 0 : index
    %62 = vector.load %arg11[%c1_30, %c1_31, %c0_32] : memref<6x10x128xbf16, #tpu.memory_space<vmem>>, vector<4x8x128xbf16>
    tpu.vector_store %arg11[%c1_30, %c1_31, %c0_32], %61 {strides = array<i32>} : memref<6x10x128xbf16, #tpu.memory_space<vmem>>, vector<4x8x128xbf16>,
    %c0_33 = arith.constant 0 : index
    %c0_34 = arith.constant 0 : index
    %c0_35 = arith.constant 0 : index
    %63 = vector.load %arg11[%c0_33, %c0_34, %c0_35] : memref<6x10x128xbf16, #tpu.memory_space<vmem>>, vector<4x8x128xbf16>
    %64 = vector.shape_cast %63 : vector<4x8x128xbf16> to vector<32x128xbf16>
    %c0_36 = arith.constant 0 : index
    %c1_37 = arith.constant 1 : index
    %c0_38 = arith.constant 0 : index
    %65 = vector.load %arg11[%c0_36, %c1_37, %c0_38] : memref<6x10x128xbf16, #tpu.memory_space<vmem>>, vector<4x8x128xbf16>
    %66 = vector.shape_cast %65 : vector<4x8x128xbf16> to vector<32x128xbf16>
    %c0_39 = arith.constant 0 : index
    %c2 = arith.constant 2 : index
    %c0_40 = arith.constant 0 : index
    %67 = vector.load %arg11[%c0_39, %c2, %c0_40] : memref<6x10x128xbf16, #tpu.memory_space<vmem>>, vector<4x8x128xbf16>
    %68 = vector.shape_cast %67 : vector<4x8x128xbf16> to vector<32x128xbf16>
    %c1_41 = arith.constant 1 : index
    %c0_42 = arith.constant 0 : index
    %c0_43 = arith.constant 0 : index
    %69 = vector.load %arg11[%c1_41, %c0_42, %c0_43] : memref<6x10x128xbf16, #tpu.memory_space<vmem>>, vector<4x8x128xbf16>
    %70 = vector.shape_cast %69 : vector<4x8x128xbf16> to vector<32x128xbf16>
    %c1_44 = arith.constant 1 : index
    %c1_45 = arith.constant 1 : index
    %c0_46 = arith.constant 0 : index
    %71 = vector.load %arg11[%c1_44, %c1_45, %c0_46] : memref<6x10x128xbf16, #tpu.memory_space<vmem>>, vector<4x8x128xbf16>
    %72 = vector.shape_cast %71 : vector<4x8x128xbf16> to vector<32x128xbf16>
    %c1_47 = arith.constant 1 : index
    %c2_48 = arith.constant 2 : index
    %c0_49 = arith.constant 0 : index
    %73 = vector.load %arg11[%c1_47, %c2_48, %c0_49] : memref<6x10x128xbf16, #tpu.memory_space<vmem>>, vector<4x8x128xbf16>
    %74 = vector.shape_cast %73 : vector<4x8x128xbf16> to vector<32x128xbf16>
    %c2_50 = arith.constant 2 : index
    %c0_51 = arith.constant 0 : index
    %c0_52 = arith.constant 0 : index
    %75 = vector.load %arg11[%c2_50, %c0_51, %c0_52] : memref<6x10x128xbf16, #tpu.memory_space<vmem>>, vector<4x8x128xbf16>
    %76 = vector.shape_cast %75 : vector<4x8x128xbf16> to vector<32x128xbf16>
    %c2_53 = arith.constant 2 : index
    %c1_54 = arith.constant 1 : index
    %c0_55 = arith.constant 0 : index
    %77 = vector.load %arg11[%c2_53, %c1_54, %c0_55] : memref<6x10x128xbf16, #tpu.memory_space<vmem>>, vector<4x8x128xbf16>
    %78 = vector.shape_cast %77 : vector<4x8x128xbf16> to vector<32x128xbf16>
    %c2_56 = arith.constant 2 : index
    %c2_57 = arith.constant 2 : index
    %c0_58 = arith.constant 0 : index
    %79 = vector.load %arg11[%c2_56, %c2_57, %c0_58] : memref<6x10x128xbf16, #tpu.memory_space<vmem>>, vector<4x8x128xbf16>
    %80 = vector.shape_cast %79 : vector<4x8x128xbf16> to vector<32x128xbf16>
    %81 = tpu.concatenate %64, %66, %68, %70, %72, %74, %76, %78, %80 in 1 : vector<32x128xbf16>, vector<32x128xbf16>, vector<32x128xbf16>, vector<32x128xbf16>, vector<32x128xbf16>, vector<32x128xbf16>, vector<32x128xbf16>, vector<32x128xbf16>, vector<32x128xbf16> -> vector<32x1152xbf16>
    %c0_59 = arith.constant 0 : index
    %c0_60 = arith.constant 0 : index
    %82 = vector.load %arg7[%c0_59, %c0_60] : memref<1152x128xbf16, #tpu.memory_space<vmem>>, vector<1152x128xbf16>
    %cst_61 = arith.constant dense<0.000000e+00> : vector<32x128xf32>
    %83 = tpu.matmul %81, %82, %cst_61 {dimension_numbers = #tpu.dot_dimension_numbers<[1], [0], [0], [1], [0, 0, 1, 1], [], []>} : vector<32x1152xbf16>, vector<1152x128xbf16>, vector<32x128xf32> -> vector<32x128xf32>
    %c0_62 = arith.constant 0 : index
    %c0_63 = arith.constant 0 : index
    %84 = vector.load %arg8[%c0_62, %c0_63] : memref<1x128xf32, #tpu.memory_space<vmem>>, vector<1x128xf32>
    %85 = vector.broadcast %84 : vector<1x128xf32> to vector<32x128xf32>
    %86 = arith.addf %83, %85 : vector<32x128xf32>
    %c0_64 = arith.constant 0 : index
    %c0_65 = arith.constant 0 : index
    %87 = vector.load %arg9[%c0_64, %c0_65] : memref<32x128xbf16, #tpu.memory_space<vmem>>, vector<32x128xbf16>
    %88 = arith.extf %87 : vector<32x128xbf16> to vector<32x128xf32>
    %89 = arith.addf %86, %88 : vector<32x128xf32>
    %c0_66 = arith.constant 0 : index
    %c0_67 = arith.constant 0 : index
    %90 = vector.load %arg10[%c0_66, %c0_67] : memref<32x128xf32, #tpu.memory_space<vmem>>, vector<32x128xf32>
    tpu.vector_store %arg10[%c0_66, %c0_67], %89 {strides = array<i32>} : memref<32x128xf32, #tpu.memory_space<vmem>>, vector<32x128xf32>,
    return
  }
  func.func @transform_0(%arg0: i32, %arg1: i32) -> (i32, i32) {
    %c2_i32 = arith.constant 2 : i32
    %0 = arith.muli %arg0, %c2_i32 : i32
    %1 = arith.addi %0, %arg1 : i32
    %c0_i32 = arith.constant 0 : i32
    %c0_i32_0 = arith.constant 0 : i32
    return %1, %c0_i32 : i32, i32
  }
  func.func @transform_1(%arg0: i32, %arg1: i32) -> (i32, i32) {
    %c8_i32 = arith.constant 8 : i32
    %0 = arith.muli %arg0, %c8_i32 : i32
    %c4_i32 = arith.constant 4 : i32
    %1 = arith.muli %arg1, %c4_i32 : i32
    %2 = arith.addi %0, %1 : i32
    %c1_i32 = arith.constant 1 : i32
    %3 = arith.subi %2, %c1_i32 : i32
    %c8_i32_0 = arith.constant 8 : i32
    %4 = arith.muli %arg0, %c8_i32_0 : i32
    %5 = arith.maxsi %3, %4 : i32
    %c0_i32 = arith.constant 0 : i32
    %c0_i32_1 = arith.constant 0 : i32
    return %5, %c0_i32 : i32, i32
  }
  func.func @transform_2(%arg0: i32, %arg1: i32) -> (i32, i32) {
    %c8_i32 = arith.constant 8 : i32
    %0 = arith.muli %arg0, %c8_i32 : i32
    %c1_i32 = arith.constant 1 : i32
    %1 = arith.addi %arg1, %c1_i32 : i32
    %c4_i32 = arith.constant 4 : i32
    %2 = arith.muli %1, %c4_i32 : i32
    %3 = arith.addi %0, %2 : i32
    %c8_i32_0 = arith.constant 8 : i32
    %4 = arith.muli %arg0, %c8_i32_0 : i32
    %c8_i32_1 = arith.constant 8 : i32
    %5 = arith.addi %4, %c8_i32_1 : i32
    %c1_i32_2 = arith.constant 1 : i32
    %6 = arith.subi %5, %c1_i32_2 : i32
    %7 = arith.minsi %3, %6 : i32
    %c0_i32 = arith.constant 0 : i32
    %c0_i32_3 = arith.constant 0 : i32
    return %7, %c0_i32 : i32, i32
  }
  func.func @transform_3(%arg0: i32, %arg1: i32) -> (i32, i32) {
    %c0_i32 = arith.constant 0 : i32
    %c0_i32_0 = arith.constant 0 : i32
    %c0_i32_1 = arith.constant 0 : i32
    return %c0_i32, %c0_i32_0 : i32, i32
  }
  func.func @transform_4(%arg0: i32, %arg1: i32) -> (i32, i32) {
    %c0_i32 = arith.constant 0 : i32
    %c0_i32_0 = arith.constant 0 : i32
    %c0_i32_1 = arith.constant 0 : i32
    return %c0_i32, %c0_i32_0 : i32, i32
  }
  func.func @transform_5(%arg0: i32, %arg1: i32) -> (i32, i32) {
    %c0_i32 = arith.constant 0 : i32
    %c0_i32_0 = arith.constant 0 : i32
    %c0_i32_1 = arith.constant 0 : i32
    return %c0_i32, %c0_i32_0 : i32, i32
  }
  func.func @transform_6(%arg0: i32, %arg1: i32) -> (i32, i32) {
    %c0_i32 = arith.constant 0 : i32
    %c0_i32_0 = arith.constant 0 : i32
    %c0_i32_1 = arith.constant 0 : i32
    return %c0_i32, %c0_i32_0 : i32, i32
  }
  func.func @transform_7(%arg0: i32, %arg1: i32) -> (i32, i32) {
    %c2_i32 = arith.constant 2 : i32
    %0 = arith.muli %arg0, %c2_i32 : i32
    %1 = arith.addi %0, %arg1 : i32
    %c0_i32 = arith.constant 0 : i32
    %c0_i32_0 = arith.constant 0 : i32
    return %1, %c0_i32 : i32, i32
  }
  func.func @transform_8(%arg0: i32, %arg1: i32) -> (i32, i32) {
    %c2_i32 = arith.constant 2 : i32
    %0 = arith.muli %arg0, %c2_i32 : i32
    %1 = arith.addi %0, %arg1 : i32
    %c0_i32 = arith.constant 0 : i32
    %c0_i32_0 = arith.constant 0 : i32
    return %1, %c0_i32 : i32, i32
  }
}

</mosaic_0001>

<llo_original>
// kernel: squeeze.13
$region0: #{squeeze.13}
  %s0 = inlined_call_operand.vmem [shape: f32[16], index: 0, kind: input, shape index: {}]
  %s1 = inlined_call_operand.vmem [shape: f32[4,4], index: 1, kind: output, shape index: {}]
  $region1: #{squeeze.13} parent=0
    #allocation0 [shape = 'u8[4096]{0}', space=vmem, size = 0x1000, scoped, tag = 'scoped mem for output reshape']
    #allocation1 [shape = 'u8[4096]{0}', space=vmem, size = 0x1000, scoped, tag = 'scoped mem for input reshape']
    %s3 = ssub.s32 2, 1
    %v4 = vld [vmem:[%s0] sm:%s3]
    %5 = vst [vmem:[#allocation1] sm:%s3] %v4
    %v6 = vld [vmem:[#allocation1] sm:$0x1]
    %vm7 = vcmask 31744
    %8 = vst.msk [vmem:[#allocation0] sm:$0x1] %vm7, %v6
    %v9 = vld [vmem:[#allocation1] sm:$0x1]
    %10 = vrot.lane.b32.xlu0 %v9, 124
    %v11 = vpop.permute.xlu0 %10
    %vm12 = vcmask 31744
    %s13 = scalar_lea.vmem [#allocation0], 1
    %14 = vst.msk [vmem:[%s13] sm:$0x1] %vm12, %v11
    %v15 = vld [vmem:[#allocation1] sm:$0x1]
    %16 = vrot.lane.b32.xlu0 %v15, 120
    %v17 = vpop.permute.xlu0 %16
    %vm18 = vcmask 31744
    %s19 = scalar_lea.vmem [#allocation0], 2
    %20 = vst.msk [vmem:[%s19] sm:$0x1] %vm18, %v17
    %v21 = vld [vmem:[#allocation1] sm:$0x1]
    %22 = vrot.lane.b32.xlu0 %v21, 116
    %v23 = vpop.permute.xlu0 %22
    %vm24 = vcmask 31744
    %s25 = scalar_lea.vmem [#allocation0], 3
    %26 = vst.msk [vmem:[%s25] sm:$0x1] %vm24, %v23
    %s28 = ssub.s32 16, 1
    %v29 = vld [vmem:[#allocation0] sm:%s28]
    %s31 = ssub.s32 16, 1
    %32 = vst [vmem:[%s1] sm:%s31] %v29

// kernel: tile.19
$region0: #{tile.19}
  %s0 = inlined_call_operand.vmem [shape: f32[4,4], index: 0, kind: input, shape index: {}]
  %s1 = inlined_call_operand.vmem [shape: f32[16], index: 1, kind: output, shape index: {}]
  $region1: #{tile.19} parent=0
    #allocation0 [shape = 'u8[4096]{0}', space=vmem, size = 0x1000, scoped, tag = 'scoped mem for output reshape']
    #allocation1 [shape = 'u8[4096]{0}', space=vmem, size = 0x1000, scoped, tag = 'scoped mem for input reshape']
    %s3 = ssub.s32 16, 1
    %v4 = vld [vmem:[%s0] sm:%s3]
    %5 = vst [vmem:[#allocation1] sm:%s3] %v4
    %v6 = vld [vmem:[#allocation1] sm:$0x1]
    %vm7 = vcmask 31744
    %8 = vst.msk [vmem:[#allocation0] sm:$0x1] %vm7, %v6
    %s9 = scalar_lea.vmem [#allocation1], 3
    %v10 = vld [vmem:[%s9] sm:$0x1]
    %11 = vrot.lane.b32.xlu0 %v10, 12
    %v12 = vpop.permute.xlu0 %11
    %vm13 = vcmask 130144
    %14 = vst.msk [vmem:[#allocation0] sm:$0x1] %vm13, %v12
    %s15 = scalar_lea.vmem [#allocation1], 2
    %v16 = vld [vmem:[%s15] sm:$0x1]
    %17 = vrot.lane.b32.xlu0 %v16, 8
    %v18 = vpop.permute.xlu0 %17
    %vm19 = vcmask 97344
    %20 = vst.msk [vmem:[#allocation0] sm:$0x1] %vm19, %v18
    %s21 = scalar_lea.vmem [#allocation1], 1
    %v22 = vld [vmem:[%s21] sm:$0x1]
    %23 = vrot.lane.b32.xlu0 %v22, 4
    %v24 = vpop.permute.xlu0 %23
    %vm25 = vcmask 64544
    %26 = vst.msk [vmem:[#allocation0] sm:$0x1] %vm25, %v24
    %s28 = ssub.s32 2, 1
    %v29 = vld [vmem:[#allocation0] sm:%s28]
    %s31 = ssub.s32 2, 1
    %32 = vst [vmem:[%s1] sm:%s31] %v29

// kernel: tile.18
$region0: #{tile.18}
  #allocation0 [shape = 's32[1]{0}', space=sflag, size = 0x4, scoped, tag = 'scoped memory for tile.18']
  %s0 = inlined_call_operand.vmem [shape: f32[4], index: 0, kind: input, shape index: {}]
  %s1 = inlined_call_operand.vmem [shape: f32[4,4], index: 1, kind: output, shape index: {}]
  // Predicated region
  $region2: #{tile.18} parent=0 // pred_check
    _
  $region3: #{tile.18} parent=0 // pred_check_branch
    %3 = sbr.rel (0) target = $region5
  $region4: #{tile.18} parent=0 // pred_region
    _
  $region5: #{tile.18} parent=0 // pred_fallthru
    _
  %v4 = vld [vmem:[%s0] ss:$0 sm:$0xff]
  %5 = vst [vmem:[%s1] sm:$0xf] %v4

// kernel: res_down_forward.3
$region0: #{res_down_forward.3}
  #allocation0 [shape = 'u32[]', space=smem, size = 0x4, offset = 0x4, fixed_abs, tag = 'smem constant byte address 0x4 - core index']
  #allocation1 [shape = 'u32[72,128]{1,0:T(1,128)}', space=vmem, size = 0x9000, scoped, tag = 'internal scratch']
  %s0 = inlined_call_operand.vmem [shape: f32[128,128], index: 0, kind: input, shape index: {}]
  %s1 = inlined_call_operand.vmem [shape: f32[1,2,128], index: 1, kind: output, shape index: {}]
  %s2 = sld [smem:[#allocation0]]
  $region14: #{res_down_forward.3} parent=0
    _
  %s4 = ssub.s32 1, %s2
  %s5 = scalar_select 0, %s4, %s2
  // Predicated region
  $region2: #{res_down_forward.3} parent=0 // pred_check
    _
  $region3: #{res_down_forward.3} parent=0 // pred_check_branch
    %7 = sbr.rel (0) target = $region5
  $region4: #{res_down_forward.3} parent=0 // pred_region
    _
  $region5: #{res_down_forward.3} parent=0 // pred_fallthru
    _
  %v8 = vld [vmem:[%s0] sm:$0xff]
  %v9 = vld [vmem:[%s0 + $0x8] sm:$0xff]
  %v10 = vld [vmem:[%s0 + $0x10] sm:$0xff]
  %v11 = vld [vmem:[%s0 + $0x18] sm:$0xff]
  %v12 = vld [vmem:[%s0 + $0x20] sm:$0xff]
  %v13 = vld [vmem:[%s0 + $0x28] sm:$0xff]
  %v14 = vld [vmem:[%s0 + $0x30] sm:$0xff]
  %v15 = vld [vmem:[%s0 + $0x38] sm:$0xff]
  %v16 = vld [vmem:[%s0 + $0x40] sm:$0xff]
  %v17 = vld [vmem:[%s0 + $0x48] sm:$0xff]
  %v18 = vld [vmem:[%s0 + $0x50] sm:$0xff]
  %v19 = vld [vmem:[%s0 + $0x58] sm:$0xff]
  %v20 = vld [vmem:[%s0 + $0x60] sm:$0xff]
  %v21 = vld [vmem:[%s0 + $0x68] sm:$0xff]
  %v22 = vld [vmem:[%s0 + $0x70] sm:$0xff]
  %v23 = vld [vmem:[%s0 + $0x78] sm:$0xff]
  %v24 = vadd.f32 %v8, %v9
  %v25 = vadd.f32 %v24, %v10
  %v26 = vadd.f32 %v25, %v11
  %v27 = vadd.f32 %v26, %v12
  %v28 = vadd.f32 %v27, %v13
  %v29 = vadd.f32 %v28, %v14
  %v30 = vadd.f32 %v29, %v15
  %v31 = vadd.f32 %v30, %v16
  %v32 = vadd.f32 %v31, %v17
  %v33 = vadd.f32 %v32, %v18
  %v34 = vadd.f32 %v33, %v19
  %v35 = vadd.f32 %v34, %v20
  %v36 = vadd.f32 %v35, %v21
  %v37 = vadd.f32 %v36, %v22
  %v38 = vadd.f32 %v37, %v23
  %v39 = vrot.slane %v38, 4
  %v40 = vadd.f32 %v38, %v39
  %v41 = vrot.slane %v40, 2
  %v42 = vadd.f32 %v40, %v41
  %v43 = vrot.slane %v42, 1
  %v44 = vadd.f32 %v42, %v43
  %v45 = vmul.f32 %v8, %v8
  %v46 = vmul.f32 %v9, %v9
  %v47 = vmul.f32 %v10, %v10
  %v48 = vmul.f32 %v11, %v11
  %v49 = vmul.f32 %v12, %v12
  %v50 = vmul.f32 %v13, %v13
  %v51 = vmul.f32 %v14, %v14
  %v52 = vmul.f32 %v15, %v15
  %v53 = vmul.f32 %v16, %v16
  %v54 = vmul.f32 %v17, %v17
  %v55 = vmul.f32 %v18, %v18
  %v56 = vmul.f32 %v19, %v19
  %v57 = vmul.f32 %v20, %v20
  %v58 = vmul.f32 %v21, %v21
  %v59 = vmul.f32 %v22, %v22
  %v60 = vmul.f32 %v23, %v23
  %v61 = vadd.f32 %v45, %v46
  %v62 = vadd.f32 %v61, %v47
  %v63 = vadd.f32 %v62, %v48
  %v64 = vadd.f32 %v63, %v49
  %v65 = vadd.f32 %v64, %v50
  %v66 = vadd.f32 %v65, %v51
  %v67 = vadd.f32 %v66, %v52
  %v68 = vadd.f32 %v67, %v53
  %v69 = vadd.f32 %v68, %v54
  %v70 = vadd.f32 %v69, %v55
  %v71 = vadd.f32 %v70, %v56
  %v72 = vadd.f32 %v71, %v57
  %v73 = vadd.f32 %v72, %v58
  %v74 = vadd.f32 %v73, %v59
  %v75 = vadd.f32 %v74, %v60
  %v76 = vrot.slane %v75, 4
  %v77 = vadd.f32 %v75, %v76
  %v78 = vrot.slane %v77, 2
  %v79 = vadd.f32 %v77, %v78
  %v80 = vrot.slane %v79, 1
  %v81 = vadd.f32 %v79, %v80
  %vm82 = vcmask 1040384
  %v83 = vsel %vm82, %v44, %v81
  %84 = vst [vmem:[%s1] sm:$0x3] %v83
  // Predicated region
  $region6: #{res_down_forward.3} parent=0 // pred_check
    _
  $region7: #{res_down_forward.3} parent=0 // pred_check_branch
    %86 = sbr.rel (0) target = $region9
  $region8: #{res_down_forward.3} parent=0 // pred_region
    _
  $region9: #{res_down_forward.3} parent=0 // pred_fallthru
    _
  // Predicated region
  $region10: #{res_down_forward.3} parent=0 // pred_check
    _
  $region11: #{res_down_forward.3} parent=0 // pred_check_branch
    %88 = sbr.rel (0) target = $region13
  $region12: #{res_down_forward.3} parent=0 // pred_region
    _
  $region13: #{res_down_forward.3} parent=0 // pred_fallthru
    _

// kernel: res_down_forward.4
$region0: #{res_down_forward.4}
  #allocation0 [shape = 'u32[]', space=smem, size = 0x4, offset = 0x4, fixed_abs, tag = 'smem constant byte address 0x4 - core index']
  #allocation1 [shape = 'u32[72,128]{1,0:T(1,128)}', space=vmem, size = 0x9000, scoped, tag = 'internal scratch']
  #allocation2 [shape = 'bf16[5,9,128]{2,1,0:T(8,128)(2,1)}', space=vmem, size = 0x5000, scoped, tag = 'scratch operand']
  %s0 = inlined_call_operand.vmem [shape: f32[128,128], index: 0, kind: input, shape index: {}, may-alias: {0,1}]
  %s1 = inlined_call_operand.vmem [shape: f32[128,128], index: 1, kind: input, shape index: {}, may-alias: {0,1}]
  %s2 = inlined_call_operand.vmem [shape: f32[1,128], index: 2, kind: input, shape index: {}]
  %s3 = inlined_call_operand.vmem [shape: f32[1,128], index: 3, kind: input, shape index: {}]
  %s4 = inlined_call_operand.vmem [shape: bf16[512,256], index: 4, kind: input, shape index: {}]
  %s5 = inlined_call_operand.vmem [shape: f32[1,256], index: 5, kind: input, shape index: {}]
  %s6 = inlined_call_operand.vmem [shape: bf16[128,128], index: 6, kind: output, shape index: {0}]
  %s7 = inlined_call_operand.vmem [shape: bf16[128,128], index: 7, kind: output, shape index: {1}]
  %s8 = inlined_call_operand.vmem [shape: f32[2,2,2,128], index: 8, kind: output, shape index: {2}]
  %9 = xla_tuple %s6, %s7, %s8
  %s10 = sld [smem:[#allocation0]]
  $region73: #{res_down_forward.4} parent=0
    _
  %s12 = ssub.s32 1, %s10
  %s13 = scalar_select 0, %s12, %s10
  loop: start=0, step=1, limit=6
  $region2: #{res_down_forward.4} parent=0 // loop_pre_header
    _
  $region3: #{res_down_forward.4} parent=0 // loop_header
    %s15 = sphi 0, %s19
    %p16 = scmp.ge.s32.totalorder %s15, 6
    %s22 = sphi 0, %s34
    %s23 = sphi 0, %s30
    %s24 = sphi 0, %s22
    %s25 = sphi 0, %s23
    %s26 = sphi 0, %s24
    %s27 = sphi 0, %s25
    %s41 = sphi 0, %s43
    %s44 = sphi 0, %s41
    %s45 = sphi 0, %s44
    %s61 = sphi 0, %s45
    %s79 = sphi 0, %s81
    %s82 = sphi 0, %s79
    %s83 = sphi 0, %s82
    %s99 = sphi 0, %s83
    %s103 = sphi 0, %s103
    %s105 = sphi 0, %s103
    %s106 = sphi 0, %s105
    %s120 = sphi 0, %s106
    %s124 = sphi 0, %s124
    %s126 = sphi 0, %s124
    %s127 = sphi 0, %s126
    %s141 = sphi 0, %s127
    %s145 = sphi 0, %s145
    %s147 = sphi 0, %s145
    %s148 = sphi 0, %s147
    %s162 = sphi 0, %s148
    %s166 = sphi 0, %s166
    %s168 = sphi 0, %s166
    %s169 = sphi 0, %s168
    %s183 = sphi 0, %s169
    %s193 = sphi 0, %s195
    %s196 = sphi 0, %s193
    %s197 = sphi 0, %s196
    %s213 = sphi 0, %s197
    %s223 = sphi 0, %s225
    %s226 = sphi 0, %s223
    %s227 = sphi 0, %s226
    %s243 = sphi 0, %s227
    %s251 = sphi 0, %s253
    %s254 = sphi 0, %s251
    %s255 = sphi 0, %s254
    %s271 = sphi 0, %s255
  $region4: #{res_down_forward.4} parent=0 // loop_header_branch
    %18 = sbr.rel (%p16) target = $region8
  $region5: #{res_down_forward.4} parent=0 // loop_body
    %s20 = ssub.s32 %s15, 1
    %s21 = ssub.s32 %s15, 2
    %s28 = sadd.s32 1, %s23
    %p29 = scmp.ge.s32.totalorder %s28, 2
    %s30 = scalar_select %p29, 0, %s28
    %s31 = sadd.s32 1, %s22
    %s32 = scalar_select %p29, %s31, %s22
    %p33 = scmp.ge.s32.totalorder %s32, 2
    %s34 = scalar_select %p33, 0, %s32
    %s35 = smul.u32 %s22, 2
    %s36 = sadd.s32 %s35, %s23
    %s37 = smul.u32 %s34, 2
    %s38 = sadd.s32 %s37, %s30
    %s39 = ssub.s32 %s36, %s38
    %p40 = scmp.eq.s32.totalorder %s39, 0
    %s42 = sadd.s32 %s41, 1
    %s43 = scalar_select %p40, %s41, %s42
    %p46 = pneg %p40
    %p47 = scmp.eq.s32.totalorder %s15, 3
    %p48 = por %p46, %p47
    %p49 = scmp.ne.s32.totalorder %s41, %s44
    %p50 = scmp.eq.s32.totalorder %s15, 0
    %p51 = por %p49, %p50
    %p52 = scmp.ne.s32.totalorder %s41, %s44
    %p53 = scmp.eq.s32.totalorder %s20, 3
    %p54 = por %p52, %p53
    %p55 = scmp.ne.s32.totalorder %s44, %s45
    %p56 = scmp.eq.s32.totalorder %s20, 0
    %p57 = por %p55, %p56
    %p58 = scmp.ne.s32.totalorder %s44, %s45
    %p59 = scmp.eq.s32.totalorder %s21, 3
    %p60 = por %p58, %p59
    %p62 = scmp.ne.s32.totalorder %s45, %s61
    %p63 = scmp.eq.s32.totalorder %s21, 0
    %p64 = por %p62, %p63
    %s65 = smul.u32 %s22, 8
    %s66 = smul.u32 %s23, 4
    %s67 = sadd.s32 %s65, %s66
    %s68 = ssub.s32 %s67, 1
    %p69 = scmp.gt.s32.totalorder %s68, %s65
    %s70 = scalar_select %p69, %s68, %s65
    %s71 = smul.u32 %s34, 8
    %s72 = smul.u32 %s30, 4
    %s73 = sadd.s32 %s71, %s72
    %s74 = ssub.s32 %s73, 1
    %p75 = scmp.gt.s32.totalorder %s74, %s71
    %s76 = scalar_select %p75, %s74, %s71
    %s77 = ssub.s32 %s70, %s76
    %p78 = scmp.eq.s32.totalorder %s77, 0
    %s80 = sadd.s32 %s79, 1
    %s81 = scalar_select %p78, %s79, %s80
    %p84 = pneg %p78
    %p85 = scmp.eq.s32.totalorder %s15, 3
    %p86 = por %p84, %p85
    %p87 = scmp.ne.s32.totalorder %s79, %s82
    %p88 = scmp.eq.s32.totalorder %s15, 0
    %p89 = por %p87, %p88
    %p90 = scmp.ne.s32.totalorder %s79, %s82
    %p91 = scmp.eq.s32.totalorder %s20, 3
    %p92 = por %p90, %p91
    %p93 = scmp.ne.s32.totalorder %s82, %s83
    %p94 = scmp.eq.s32.totalorder %s20, 0
    %p95 = por %p93, %p94
    %p96 = scmp.ne.s32.totalorder %s82, %s83
    %p97 = scmp.eq.s32.totalorder %s21, 3
    %p98 = por %p96, %p97
    %p100 = scmp.ne.s32.totalorder %s83, %s99
    %p101 = scmp.eq.s32.totalorder %s21, 0
    %p102 = por %p100, %p101
    %s104 = sadd.s32 %s103, 1
    %p107 = scmp.eq.s32.totalorder %s15, 3
    %p108 = scmp.ne.s32.totalorder %s103, %s105
    %p109 = scmp.eq.s32.totalorder %s15, 0
    %p110 = por %p108, %p109
    %p111 = scmp.ne.s32.totalorder %s103, %s105
    %p112 = scmp.eq.s32.totalorder %s20, 3
    %p113 = por %p111, %p112
    %p114 = scmp.ne.s32.totalorder %s105, %s106
    %p115 = scmp.eq.s32.totalorder %s20, 0
    %p116 = por %p114, %p115
    %p117 = scmp.ne.s32.totalorder %s105, %s106
    %p118 = scmp.eq.s32.totalorder %s21, 3
    %p119 = por %p117, %p118
    %p121 = scmp.ne.s32.totalorder %s106, %s120
    %p122 = scmp.eq.s32.totalorder %s21, 0
    %p123 = por %p121, %p122
    %s125 = sadd.s32 %s124, 1
    %p128 = scmp.eq.s32.totalorder %s15, 3
    %p129 = scmp.ne.s32.totalorder %s124, %s126
    %p130 = scmp.eq.s32.totalorder %s15, 0
    %p131 = por %p129, %p130
    %p132 = scmp.ne.s32.totalorder %s124, %s126
    %p133 = scmp.eq.s32.totalorder %s20, 3
    %p134 = por %p132, %p133
    %p135 = scmp.ne.s32.totalorder %s126, %s127
    %p136 = scmp.eq.s32.totalorder %s20, 0
    %p137 = por %p135, %p136
    %p138 = scmp.ne.s32.totalorder %s126, %s127
    %p139 = scmp.eq.s32.totalorder %s21, 3
    %p140 = por %p138, %p139
    %p142 = scmp.ne.s32.totalorder %s127, %s141
    %p143 = scmp.eq.s32.totalorder %s21, 0
    %p144 = por %p142, %p143
    %s146 = sadd.s32 %s145, 1
    %p149 = scmp.eq.s32.totalorder %s15, 3
    %p150 = scmp.ne.s32.totalorder %s145, %s147
    %p151 = scmp.eq.s32.totalorder %s15, 0
    %p152 = por %p150, %p151
    %p153 = scmp.ne.s32.totalorder %s145, %s147
    %p154 = scmp.eq.s32.totalorder %s20, 3
    %p155 = por %p153, %p154
    %p156 = scmp.ne.s32.totalorder %s147, %s148
    %p157 = scmp.eq.s32.totalorder %s20, 0
    %p158 = por %p156, %p157
    %p159 = scmp.ne.s32.totalorder %s147, %s148
    %p160 = scmp.eq.s32.totalorder %s21, 3
    %p161 = por %p159, %p160
    %p163 = scmp.ne.s32.totalorder %s148, %s162
    %p164 = scmp.eq.s32.totalorder %s21, 0
    %p165 = por %p163, %p164
    %s167 = sadd.s32 %s166, 1
    %p170 = scmp.eq.s32.totalorder %s15, 3
    %p171 = scmp.ne.s32.totalorder %s166, %s168
    %p172 = scmp.eq.s32.totalorder %s15, 0
    %p173 = por %p171, %p172
    %p174 = scmp.ne.s32.totalorder %s166, %s168
    %p175 = scmp.eq.s32.totalorder %s20, 3
    %p176 = por %p174, %p175
    %p177 = scmp.ne.s32.totalorder %s168, %s169
    %p178 = scmp.eq.s32.totalorder %s20, 0
    %p179 = por %p177, %p178
    %p180 = scmp.ne.s32.totalorder %s168, %s169
    %p181 = scmp.eq.s32.totalorder %s21, 3
    %p182 = por %p180, %p181
    %p184 = scmp.ne.s32.totalorder %s169, %s183
    %p185 = scmp.eq.s32.totalorder %s21, 0
    %p186 = por %p184, %p185
    %s187 = smul.u32 %s22, 2
    %s188 = sadd.s32 %s187, %s23
    %s189 = smul.u32 %s34, 2
    %s190 = sadd.s32 %s189, %s30
    %s191 = ssub.s32 %s188, %s190
    %p192 = scmp.eq.s32.totalorder %s191, 0
    %s194 = sadd.s32 %s193, 1
    %s195 = scalar_select %p192, %s193, %s194
    %p198 = pneg %p192
    %p199 = scmp.eq.s32.totalorder %s15, 3
    %p200 = por %p198, %p199
    %p201 = scmp.ne.s32.totalorder %s193, %s196
    %p202 = scmp.eq.s32.totalorder %s15, 0
    %p203 = por %p201, %p202
    %p204 = scmp.ne.s32.totalorder %s193, %s196
    %p205 = scmp.eq.s32.totalorder %s20, 3
    %p206 = por %p204, %p205
    %p207 = scmp.ne.s32.totalorder %s196, %s197
    %p208 = scmp.eq.s32.totalorder %s20, 0
    %p209 = por %p207, %p208
    %p210 = scmp.ne.s32.totalorder %s196, %s197
    %p211 = scmp.eq.s32.totalorder %s21, 3
    %p212 = por %p210, %p211
    %p214 = scmp.ne.s32.totalorder %s197, %s213
    %p215 = scmp.eq.s32.totalorder %s21, 0
    %p216 = por %p214, %p215
    %s217 = smul.u32 %s22, 2
    %s218 = sadd.s32 %s217, %s23
    %s219 = smul.u32 %s34, 2
    %s220 = sadd.s32 %s219, %s30
    %s221 = ssub.s32 %s218, %s220
    %p222 = scmp.eq.s32.totalorder %s221, 0
    %s224 = sadd.s32 %s223, 1
    %s225 = scalar_select %p222, %s223, %s224
    %p228 = pneg %p222
    %p229 = scmp.eq.s32.totalorder %s15, 3
    %p230 = por %p228, %p229
    %p231 = scmp.ne.s32.totalorder %s223, %s226
    %p232 = scmp.eq.s32.totalorder %s15, 0
    %p233 = por %p231, %p232
    %p234 = scmp.ne.s32.totalorder %s223, %s226
    %p235 = scmp.eq.s32.totalorder %s20, 3
    %p236 = por %p234, %p235
    %p237 = scmp.ne.s32.totalorder %s226, %s227
    %p238 = scmp.eq.s32.totalorder %s20, 0
    %p239 = por %p237, %p238
    %p240 = scmp.ne.s32.totalorder %s226, %s227
    %p241 = scmp.eq.s32.totalorder %s21, 3
    %p242 = por %p240, %p241
    %p244 = scmp.ne.s32.totalorder %s227, %s243
    %p245 = scmp.eq.s32.totalorder %s21, 0
    %p246 = por %p244, %p245
    %s247 = ssub.s32 %s22, %s34
    %s248 = ssub.s32 %s23, %s30
    %s249 = sor.u32 %s247, %s248
    %p250 = scmp.eq.s32.totalorder %s249, 0
    %s252 = sadd.s32 %s251, 1
    %s253 = scalar_select %p250, %s251, %s252
    %p256 = pneg %p250
    %p257 = scmp.eq.s32.totalorder %s15, 3
    %p258 = por %p256, %p257
    %p259 = scmp.ne.s32.totalorder %s251, %s254
    %p260 = scmp.eq.s32.totalorder %s15, 0
    %p261 = por %p259, %p260
    %p262 = scmp.ne.s32.totalorder %s251, %s254
    %p263 = scmp.eq.s32.totalorder %s20, 3
    %p264 = por %p262, %p263
    %p265 = scmp.ne.s32.totalorder %s254, %s255
    %p266 = scmp.eq.s32.totalorder %s20, 0
    %p267 = por %p265, %p266
    %p268 = scmp.ne.s32.totalorder %s254, %s255
    %p269 = scmp.eq.s32.totalorder %s21, 3
    %p270 = por %p268, %p269
    %p272 = scmp.ne.s32.totalorder %s255, %s271
    %p273 = scmp.eq.s32.totalorder %s21, 0
    %p274 = por %p272, %p273
    %p275 = scmp.le.s32.totalorder 1, %s15
    %p276 = scmp.lt.s32.totalorder %s15, 5
    %p277 = pnand %p275, %p276
    %p278 = pneg %p277
    // Predicated region
    $region9: #{res_down_forward.4} parent=5 // pred_check
      _
    $region10: #{res_down_forward.4} parent=5 // pred_check_branch
      %280 = sbr.rel (%p277) target = $region12
    $region11: #{res_down_forward.4} parent=5 // pred_region
      %s281 = ssub.s32 %s15, 1
      // Predicated region
      $region13: #{res_down_forward.4} parent=11 // pred_check
        %p282 = pneg %p116
      $region14: #{res_down_forward.4} parent=11 // pred_check_branch
        %284 = sbr.rel (%p282) target = $region16
      $region15: #{res_down_forward.4} parent=11 // pred_region
        _
      $region16: #{res_down_forward.4} parent=11 // pred_fallthru
        _
      // Predicated region
      $region17: #{res_down_forward.4} parent=11 // pred_check
        %p285 = pneg %p137
      $region18: #{res_down_forward.4} parent=11 // pred_check_branch
        %287 = sbr.rel (%p285) target = $region20
      $region19: #{res_down_forward.4} parent=11 // pred_region
        _
      $region20: #{res_down_forward.4} parent=11 // pred_fallthru
        _
      // Predicated region
      $region21: #{res_down_forward.4} parent=11 // pred_check
        %p288 = pneg %p158
      $region22: #{res_down_forward.4} parent=11 // pred_check_branch
        %290 = sbr.rel (%p288) target = $region24
      $region23: #{res_down_forward.4} parent=11 // pred_region
        _
      $region24: #{res_down_forward.4} parent=11 // pred_fallthru
        _
      // Predicated region
      $region25: #{res_down_forward.4} parent=11 // pred_check
        %p291 = pneg %p179
      $region26: #{res_down_forward.4} parent=11 // pred_check_branch
        %293 = sbr.rel (%p291) target = $region28
      $region27: #{res_down_forward.4} parent=11 // pred_region
        _
      $region28: #{res_down_forward.4} parent=11 // pred_fallthru
        _
    $region12: #{res_down_forward.4} parent=5 // pred_fallthru
      _
    %p294 = scmp.lt.s32.totalorder %s15, 4
    // Predicated region
    $region29: #{res_down_forward.4} parent=5 // pred_check
      %p295 = pneg %p294
    $region30: #{res_down_forward.4} parent=5 // pred_check_branch
      %297 = sbr.rel (%p295) target = $region32
    $region31: #{res_down_forward.4} parent=5 // pred_region
      // Predicated region
      $region33: #{res_down_forward.4} parent=31 // pred_check
        %p298 = pneg %p51
      $region34: #{res_down_forward.4} parent=31 // pred_check_branch
        %300 = sbr.rel (%p298) target = $region36
      $region35: #{res_down_forward.4} parent=31 // pred_region
        %s301 = smul.u32 %s22, 2
        %s302 = sadd.s32 %s301, %s23
        %s303 = smul.u32 4, %s302
        %p304 = scmp.lt.s32.totalorder %s303, 15
        %s305 = scalar_select %p304, %s303, 15
        %s306 = smul.addr %s305, 8
        %s307 = scalar_lea.vmem %s0, %s306
        %s308 = smul.u32 %s22, 2
        %s309 = sadd.s32 %s308, %s23
        %s310 = smul.u32 4, %s309
      $region36: #{res_down_forward.4} parent=31 // pred_fallthru
        _
      // Predicated region
      $region37: #{res_down_forward.4} parent=31 // pred_check
        %p311 = pneg %p89
      $region38: #{res_down_forward.4} parent=31 // pred_check_branch
        %313 = sbr.rel (%p311) target = $region40
      $region39: #{res_down_forward.4} parent=31 // pred_region
        %s314 = smul.u32 %s22, 8
        %s315 = smul.u32 %s23, 4
        %s316 = sadd.s32 %s314, %s315
        %s317 = ssub.s32 %s316, 1
        %p318 = scmp.gt.s32.totalorder %s317, %s314
        %s319 = scalar_select %p318, %s317, %s314
        %p320 = scmp.lt.s32.totalorder %s319, 15
        %s321 = scalar_select %p320, %s319, 15
        %s322 = smul.addr %s321, 8
        %s323 = scalar_lea.vmem %s1, %s322
        %s324 = smul.u32 %s22, 8
        %s325 = smul.u32 %s23, 4
        %s326 = sadd.s32 %s324, %s325
        %s327 = ssub.s32 %s326, 1
        %p328 = scmp.gt.s32.totalorder %s327, %s324
        %s329 = scalar_select %p328, %s327, %s324
      $region40: #{res_down_forward.4} parent=31 // pred_fallthru
        _
    $region32: #{res_down_forward.4} parent=5 // pred_fallthru
      _
    %p330 = scmp.le.s32.totalorder 1, %s15
    %p331 = scmp.lt.s32.totalorder %s15, 5
    %p332 = pnand %p330, %p331
    %p333 = pneg %p332
    // Predicated region
    $region41: #{res_down_forward.4} parent=5 // pred_check
      _
    $region42: #{res_down_forward.4} parent=5 // pred_check_branch
      %335 = sbr.rel (%p332) target = $region44
    $region43: #{res_down_forward.4} parent=5 // pred_region
      %s336 = ssub.s32 %s15, 1
      %s337 = smul.u32 %s24, 2
      %s338 = sadd.s32 %s337, %s25
      %s339 = smul.u32 4, %s338
      %p340 = scmp.lt.s32.totalorder %s339, 15
      %s341 = scalar_select %p340, %s339, 15
      %s342 = smul.addr %s341, 8
      %s343 = scalar_lea.vmem %s0, %s342
      %p344 = pneg %p57
      %p345 = pneg %p54
      %s346 = smul.u32 %s24, 8
      %s347 = smul.u32 %s25, 4
      %s348 = sadd.s32 %s346, %s347
      %s349 = ssub.s32 %s348, 1
      %p350 = scmp.gt.s32.totalorder %s349, %s346
      %s351 = scalar_select %p350, %s349, %s346
      %p352 = scmp.lt.s32.totalorder %s351, 15
      %s353 = scalar_select %p352, %s351, 15
      %s354 = smul.addr %s353, 8
      %s355 = scalar_lea.vmem %s1, %s354
      %p356 = pneg %p95
      %p357 = pneg %p92
      %p358 = pneg %p116
      %p359 = pneg %p113
      %p360 = pneg %p137
      %p361 = pneg %p134
      %p362 = pneg %p158
      %p363 = pneg %p155
      %p364 = pneg %p179
      %p365 = pneg %p176
      %p366 = pneg %p209
      %p367 = pneg %p206
      %s368 = smul.u32 %s24, 2
      %s369 = sadd.s32 %s368, %s25
      %s370 = smul.u32 4, %s369
      %p371 = scmp.lt.s32.totalorder %s370, 15
      %s372 = scalar_select %p371, %s370, 15
      %s373 = smul.addr %s372, 4
      %s374 = scalar_lea.vmem %s6, %s373
      %p375 = pneg %p239
      %p376 = pneg %p236
      %s377 = smul.u32 %s24, 2
      %s378 = sadd.s32 %s377, %s25
      %s379 = smul.u32 4, %s378
      %p380 = scmp.lt.s32.totalorder %s379, 15
      %s381 = scalar_select %p380, %s379, 15
      %s382 = smul.addr %s381, 4
      %s383 = scalar_lea.vmem %s7, %s382
      %p384 = pneg %p267
      %p385 = pneg %p264
      %p386 = scmp.lt.s32.totalorder %s24, 1
      %s387 = scalar_select %p386, %s24, 1
      %p388 = scmp.lt.s32.totalorder %s25, 1
      %s389 = scalar_select %p388, %s25, 1
      %s390 = smul.addr %s387, 2
      %s391 = sadd.s32 %s389, %s390
      %s392 = smul.addr %s391, 2
      %s393 = scalar_lea.vmem %s8, %s392
      %s394 = smul.u32 %s24, 2
      %s395 = sadd.s32 %s394, %s25
      %s396 = smul.u32 4, %s395
      %p397 = scmp.lt.s32.totalorder %s396, 15
      %s398 = scalar_select %p397, %s396, 15
      %s399 = smul.addr %s398, 8
      %s400 = scalar_lea.vmem %s0, %s399
      %s401 = smul.u32 %s24, 2
      %s402 = sadd.s32 %s401, %s25
      %s403 = smul.u32 4, %s402
      %s404 = smul.u32 %s24, 8
      %s405 = smul.u32 %s25, 4
      %s406 = sadd.s32 %s404, %s405
      %s407 = ssub.s32 %s406, 1
      %p408 = scmp.gt.s32.totalorder %s407, %s404
      %s409 = scalar_select %p408, %s407, %s404
      %p410 = scmp.lt.s32.totalorder %s409, 15
      %s411 = scalar_select %p410, %s409, 15
      %s412 = smul.addr %s411, 8
      %s413 = scalar_lea.vmem %s1, %s412
      %s414 = smul.u32 %s24, 8
      %s415 = smul.u32 %s25, 4
      %s416 = sadd.s32 %s414, %s415
      %s417 = ssub.s32 %s416, 1
      %p418 = scmp.gt.s32.totalorder %s417, %s414
      %s419 = scalar_select %p418, %s417, %s414
      %s420 = smul.u32 %s24, 2
      %s421 = sadd.s32 %s420, %s25
      %s422 = smul.u32 4, %s421
      %p423 = scmp.lt.s32.totalorder %s422, 15
      %s424 = scalar_select %p423, %s422, 15
      %s425 = smul.addr %s424, 4
      %s426 = scalar_lea.vmem %s6, %s425
      %s427 = smul.u32 %s24, 2
      %s428 = sadd.s32 %s427, %s25
      %s429 = smul.u32 4, %s428
      %s430 = smul.u32 %s24, 2
      %s431 = sadd.s32 %s430, %s25
      %s432 = smul.u32 4, %s431
      %p433 = scmp.lt.s32.totalorder %s432, 15
      %s434 = scalar_select %p433, %s432, 15
      %s435 = smul.addr %s434, 4
      %s436 = scalar_lea.vmem %s7, %s435
      %s437 = smul.u32 %s24, 2
      %s438 = sadd.s32 %s437, %s25
      %s439 = smul.u32 4, %s438
      %p440 = scmp.lt.s32.totalorder %s24, 1
      %s441 = scalar_select %p440, %s24, 1
      %p442 = scmp.lt.s32.totalorder %s25, 1
      %s443 = scalar_select %p442, %s25, 1
      %s444 = smul.addr %s441, 2
      %s445 = sadd.s32 %s443, %s444
      %s446 = smul.addr %s445, 2
      %s447 = scalar_lea.vmem %s8, %s446
      %v449 = vld [vmem:[%s2] sm:$0x1]
      %v450 = vld [vmem:[%s3] sm:$0x1]
      %v451 = vld [vmem:[%s413] sm:$0xff]
      %v453 = vperm.slane %v449, 0
      %v455 = vmul.f32 %v451, %v453
      %v457 = vperm.slane %v450, 0
      %v459 = vadd.f32 %v455, %v457
      %vm460 = vcmp.gt.f32.partialorder %v459, 0.0
      %v461 = vmin.f32 %v459, 0.0
      %v462 = vmul.f32 %v461, 1.442695
      %v463 = vpow.pop %v462
      %v464 = vsub.f32 %v463, 1.0
      %v465 = vsel %vm460, %v459, %v464
      %v466 = vpack.c.bf16 %v465, %v465
      %p467 = scmp.eq.s32.totalorder %s25, 0
      %s468 = scalar_select %p467, 1, 0
      %v469 = vstv %s468
      %vm470 = vcmp.eq.s32.totalorder %v469, 1
      %v471 = vsel %vm470, 0, %v466
      %v473 = vshrl.u32 %v471, 16
      %v475 = vrot.slane %v473, 7
      %v476 = vshll.u32 %v471, 16
      %v478 = vor.u32 %v475, %v476
      %v479 = vrot.slane %v475, 4
      %vm482 = vcmask 1043456
      %vm483 = vsmask.f32 7938
      %vm484 = vmand %vm482, %vm483
      %v485 = vld [vmem:[#allocation2] sm:$0xf]
      %v486 = vsel %vm484, %v478, %v485
      %487 = vst [vmem:[#allocation2] sm:$0xf] %v486
      %vm488 = vcmask 1040384
      %vm489 = vsmask.f32 256
      %vm490 = vmand %vm488, %vm489
      %v491 = vld [vmem:[#allocation2 + $0x4] sm:$0x1]
      %v492 = vsel %vm490, %v479, %v491
      %493 = vst [vmem:[#allocation2 + $0x4] sm:$0x1] %v492
      %v494 = vld [vmem:[#allocation2] sm:$0x1]
      %v495 = vsel %vm490, 0, %v494
      %496 = vst [vmem:[#allocation2] sm:$0x1] %v495
      %v497 = vld [vmem:[#allocation2 + $0x8] sm:$0x1]
      %v498 = vsel %vm490, 0, %v497
      %499 = vst [vmem:[#allocation2 + $0x8] sm:$0x1] %v498
      %v500 = vld [vmem:[#allocation2 + $0x10] sm:$0x1]
      %v501 = vsel %vm490, 0, %v500
      %502 = vst [vmem:[#allocation2 + $0x10] sm:$0x1] %v501
      %v503 = vld [vmem:[#allocation2 + $0x18] sm:$0x1]
      %v504 = vsel %vm490, 0, %v503
      %505 = vst [vmem:[#allocation2 + $0x18] sm:$0x1] %v504
      %v506 = vld [vmem:[#allocation2 + $0x20] sm:$0x1]
      %v507 = vsel %vm490, 0, %v506
      %508 = vst [vmem:[#allocation2 + $0x20] sm:$0x1] %v507
      %v509 = vld [vmem:[%s400] sm:$0xff]
      %v510 = vld [vmem:[%s400 + $0x8] sm:$0xff]
      %v511 = vld [vmem:[%s400 + $0x10] sm:$0xff]
      %v512 = vld [vmem:[%s400 + $0x18] sm:$0xff]
      %v513 = vmul.f32 %v509, %v453
      %v514 = vmul.f32 %v510, %v453
      %v515 = vmul.f32 %v511, %v453
      %v516 = vmul.f32 %v512, %v453
      %v517 = vadd.f32 %v513, %v457
      %v518 = vadd.f32 %v514, %v457
      %v519 = vadd.f32 %v515, %v457
      %v520 = vadd.f32 %v516, %v457
      %vm521 = vcmp.gt.f32.partialorder %v517, 0.0
      %vm522 = vcmp.gt.f32.partialorder %v518, 0.0
      %vm523 = vcmp.gt.f32.partialorder %v519, 0.0
      %vm524 = vcmp.gt.f32.partialorder %v520, 0.0
      %v525 = vmin.f32 %v517, 0.0
      %v526 = vmin.f32 %v518, 0.0
      %v527 = vmin.f32 %v519, 0.0
      %v528 = vmin.f32 %v520, 0.0
      %v529 = vmul.f32 %v525, 1.442695
      %v530 = vpow.pop %v529
      %v531 = vmul.f32 %v526, 1.442695
      %v532 = vpow.pop %v531
      %v533 = vmul.f32 %v527, 1.442695
      %v534 = vpow.pop %v533
      %v535 = vmul.f32 %v528, 1.442695
      %v536 = vpow.pop %v535
      %v537 = vsub.f32 %v530, 1.0
      %v538 = vsub.f32 %v532, 1.0
      %v539 = vsub.f32 %v534, 1.0
      %v540 = vsub.f32 %v536, 1.0
      %v541 = vsel %vm521, %v517, %v537
      %v542 = vsel %vm522, %v518, %v538
      %v543 = vsel %vm523, %v519, %v539
      %v544 = vsel %vm524, %v520, %v540
      %v545 = vpack.c.bf16 %v541, %v541
      %v546 = vpack.c.bf16 %v542, %v542
      %v547 = vpack.c.bf16 %v543, %v543
      %v548 = vpack.c.bf16 %v544, %v544
      %v550 = vshrl.u32 %v545, 16
      %v552 = vrot.slane %v550, 7
      %v553 = vshll.u32 %v545, 16
      %v555 = vor.u32 %v552, %v553
      %v556 = vrot.slane %v552, 4
      %v558 = vshrl.u32 %v546, 16
      %v560 = vrot.slane %v558, 7
      %v561 = vshll.u32 %v546, 16
      %v563 = vor.u32 %v560, %v561
      %v564 = vrot.slane %v560, 4
      %v566 = vshrl.u32 %v547, 16
      %v568 = vrot.slane %v566, 7
      %v569 = vshll.u32 %v547, 16
      %v571 = vor.u32 %v568, %v569
      %v572 = vrot.slane %v568, 4
      %v574 = vshrl.u32 %v548, 16
      %v576 = vrot.slane %v574, 7
      %v577 = vshll.u32 %v548, 16
      %v579 = vor.u32 %v576, %v577
      %v580 = vrot.slane %v576, 4
      %s589 = scalar_lea.vmem [#allocation2], 8
      %v590 = vld [vmem:[%s589] sm:$0xf]
      %v591 = vsel %vm484, %v555, %v590
      %592 = vst [vmem:[%s589] sm:$0xf] %v591
      %v593 = vld [vmem:[%s589 + $0x4] sm:$0x1]
      %v594 = vsel %vm490, %v556, %v593
      %595 = vst [vmem:[%s589 + $0x4] sm:$0x1] %v594
      %v596 = vld [vmem:[%s589 + $0x8] sm:$0xf]
      %v597 = vsel %vm484, %v563, %v596
      %598 = vst [vmem:[%s589 + $0x8] sm:$0xf] %v597
      %v599 = vld [vmem:[%s589 + $0xc] sm:$0x1]
      %v600 = vsel %vm490, %v564, %v599
      %601 = vst [vmem:[%s589 + $0xc] sm:$0x1] %v600
      %v602 = vld [vmem:[%s589 + $0x10] sm:$0xf]
      %v603 = vsel %vm484, %v571, %v602
      %604 = vst [vmem:[%s589 + $0x10] sm:$0xf] %v603
      %v605 = vld [vmem:[%s589 + $0x14] sm:$0x1]
      %v606 = vsel %vm490, %v572, %v605
      %607 = vst [vmem:[%s589 + $0x14] sm:$0x1] %v606
      %v608 = vld [vmem:[%s589 + $0x18] sm:$0xf]
      %v609 = vsel %vm484, %v579, %v608
      %610 = vst [vmem:[%s589 + $0x18] sm:$0xf] %v609
      %v611 = vld [vmem:[%s589 + $0x1c] sm:$0x1]
      %v612 = vsel %vm490, %v580, %v611
      %613 = vst [vmem:[%s589 + $0x1c] sm:$0x1] %v612
      %v614 = vld [vmem:[#allocation2] sm:$0xf]
      %v615 = vld [vmem:[#allocation2 + $0x8] sm:$0xf]
      %v616 = vld [vmem:[#allocation2 + $0x10] sm:$0xf]
      %v617 = vld [vmem:[#allocation2 + $0x18] sm:$0xf]
      %v618 = vld [vmem:[#allocation2 + $0x4] sm:$0x1]
      %v619 = vld [vmem:[#allocation2 + $0xc] sm:$0x1]
      %v620 = vld [vmem:[#allocation2 + $0x14] sm:$0x1]
      %v621 = vld [vmem:[#allocation2 + $0x1c] sm:$0x1]
      %vm622 = vsmask.f32 3328
      %vm623 = vsmask.f32 7440
      %vm624 = vmor %vm622, %vm623
      %v626 = vshrl.u32 %v614, 16
      %v628 = vrot.slane %v626, 4
      %v629 = vshll.u32 %v614, 16
      %v631 = vrot.slane %v629, 5
      %v632 = vor.u32 %v628, %v631
      %v633 = vrot.slane %v632, 4
      %v635 = vshll.u32 %v618, 16
      %v637 = vrot.slane %v635, 5
      %v638 = vsel %vm624, %v633, %v637
      %v640 = vshrl.u32 %v615, 16
      %v642 = vrot.slane %v640, 4
      %v643 = vshll.u32 %v615, 16
      %v645 = vrot.slane %v643, 5
      %v646 = vor.u32 %v642, %v645
      %v647 = vrot.slane %v646, 4
      %v649 = vshll.u32 %v619, 16
      %v651 = vrot.slane %v649, 5
      %v652 = vsel %vm624, %v647, %v651
      %v654 = vshrl.u32 %v616, 16
      %v656 = vrot.slane %v654, 4
      %v657 = vshll.u32 %v616, 16
      %v659 = vrot.slane %v657, 5
      %v660 = vor.u32 %v656, %v659
      %v661 = vrot.slane %v660, 4
      %v663 = vshll.u32 %v620, 16
      %v665 = vrot.slane %v663, 5
      %v666 = vsel %vm624, %v661, %v665
      %v668 = vshrl.u32 %v617, 16
      %v670 = vrot.slane %v668, 4
      %v671 = vshll.u32 %v617, 16
      %v673 = vrot.slane %v671, 5
      %v674 = vor.u32 %v670, %v673
      %v675 = vrot.slane %v674, 4
      %v677 = vshll.u32 %v621, 16
      %v679 = vrot.slane %v677, 5
      %v680 = vsel %vm624, %v675, %v679
      %v681 = vld [vmem:[%s589] sm:$0xf]
      %v682 = vld [vmem:[%s589 + $0x8] sm:$0xf]
      %v683 = vld [vmem:[%s589 + $0x10] sm:$0xf]
      %v684 = vld [vmem:[%s589 + $0x18] sm:$0xf]
      %v685 = vld [vmem:[%s589 + $0x4] sm:$0x1]
      %v686 = vld [vmem:[%s589 + $0xc] sm:$0x1]
      %v687 = vld [vmem:[%s589 + $0x14] sm:$0x1]
      %v688 = vld [vmem:[%s589 + $0x1c] sm:$0x1]
      %v690 = vshrl.u32 %v681, 16
      %v692 = vrot.slane %v690, 4
      %v693 = vshll.u32 %v681, 16
      %v695 = vrot.slane %v693, 5
      %v696 = vor.u32 %v692, %v695
      %v697 = vrot.slane %v696, 4
      %v699 = vshll.u32 %v685, 16
      %v701 = vrot.slane %v699, 5
      %v702 = vsel %vm624, %v697, %v701
      %v704 = vshrl.u32 %v682, 16
      %v706 = vrot.slane %v704, 4
      %v707 = vshll.u32 %v682, 16
      %v709 = vrot.slane %v707, 5
      %v710 = vor.u32 %v706, %v709
      %v711 = vrot.slane %v710, 4
      %v713 = vshll.u32 %v686, 16
      %v715 = vrot.slane %v713, 5
      %v716 = vsel %vm624, %v711, %v715
      %v718 = vshrl.u32 %v683, 16
      %v720 = vrot.slane %v718, 4
      %v721 = vshll.u32 %v683, 16
      %v723 = vrot.slane %v721, 5
      %v724 = vor.u32 %v720, %v723
      %v725 = vrot.slane %v724, 4
      %v727 = vshll.u32 %v687, 16
      %v729 = vrot.slane %v727, 5
      %v730 = vsel %vm624, %v725, %v729
      %v732 = vshrl.u32 %v684, 16
      %v734 = vrot.slane %v732, 4
      %v735 = vshll.u32 %v684, 16
      %v737 = vrot.slane %v735, 5
      %v738 = vor.u32 %v734, %v737
      %v739 = vrot.slane %v738, 4
      %v741 = vshll.u32 %v688, 16
      %v743 = vrot.slane %v741, 5
      %v744 = vsel %vm624, %v739, %v743
      %v749 = vunpack.c.l.b16 %v614
      %v750 = vunpack.c.l.b16 %v615
      %v751 = vunpack.c.l.b16 %v616
      %v752 = vunpack.c.l.b16 %v617
      %v753 = vpack.c.b16 %v750, %v749
      %v754 = vpack.c.b16 %v752, %v751
      %v757 = vunpack.c.l.b16 %v638
      %v758 = vunpack.c.l.b16 %v652
      %v759 = vunpack.c.l.b16 %v666
      %v760 = vunpack.c.l.b16 %v680
      %v761 = vpack.c.b16 %v758, %v757
      %v762 = vpack.c.b16 %v760, %v759
      %v769 = vunpack.c.l.b16 %v681
      %v770 = vunpack.c.l.b16 %v682
      %v771 = vunpack.c.l.b16 %v683
      %v772 = vunpack.c.l.b16 %v684
      %v773 = vpack.c.b16 %v770, %v769
      %v774 = vpack.c.b16 %v772, %v771
      %v777 = vunpack.c.l.b16 %v702
      %v778 = vunpack.c.l.b16 %v716
      %v779 = vunpack.c.l.b16 %v730
      %v780 = vunpack.c.l.b16 %v744
      %v781 = vpack.c.b16 %v778, %v777
      %v782 = vpack.c.b16 %v780, %v779
      %v785 = vld [vmem:[%s4] sm:$0xff]
      %v786 = vld [vmem:[%s4 + $0x8] sm:$0xff]
      %v787 = vld [vmem:[%s4 + $0x10] sm:$0xff]
      %v788 = vld [vmem:[%s4 + $0x18] sm:$0xff]
      %v789 = vld [vmem:[%s4 + $0x20] sm:$0xff]
      %v790 = vld [vmem:[%s4 + $0x28] sm:$0xff]
      %v791 = vld [vmem:[%s4 + $0x30] sm:$0xff]
      %v792 = vld [vmem:[%s4 + $0x38] sm:$0xff]
      %v793 = vld [vmem:[%s4 + $0x40] sm:$0xff]
      %v794 = vld [vmem:[%s4 + $0x48] sm:$0xff]
      %v795 = vld [vmem:[%s4 + $0x50] sm:$0xff]
      %v796 = vld [vmem:[%s4 + $0x58] sm:$0xff]
      %v797 = vld [vmem:[%s4 + $0x60] sm:$0xff]
      %v798 = vld [vmem:[%s4 + $0x68] sm:$0xff]
      %v799 = vld [vmem:[%s4 + $0x70] sm:$0xff]
      %v800 = vld [vmem:[%s4 + $0x78] sm:$0xff]
      %v801 = vld [vmem:[%s4 + $0x80] sm:$0xff]
      %v802 = vld [vmem:[%s4 + $0x88] sm:$0xff]
      %v803 = vld [vmem:[%s4 + $0x90] sm:$0xff]
      %v804 = vld [vmem:[%s4 + $0x98] sm:$0xff]
      %v805 = vld [vmem:[%s4 + $0xa0] sm:$0xff]
      %v806 = vld [vmem:[%s4 + $0xa8] sm:$0xff]
      %v807 = vld [vmem:[%s4 + $0xb0] sm:$0xff]
      %v808 = vld [vmem:[%s4 + $0xb8] sm:$0xff]
      %v809 = vld [vmem:[%s4 + $0xc0] sm:$0xff]
      %v810 = vld [vmem:[%s4 + $0xc8] sm:$0xff]
      %v811 = vld [vmem:[%s4 + $0xd0] sm:$0xff]
      %v812 = vld [vmem:[%s4 + $0xd8] sm:$0xff]
      %v813 = vld [vmem:[%s4 + $0xe0] sm:$0xff]
      %v814 = vld [vmem:[%s4 + $0xe8] sm:$0xff]
      %v815 = vld [vmem:[%s4 + $0xf0] sm:$0xff]
      %v816 = vld [vmem:[%s4 + $0xf8] sm:$0xff]
      %v817 = vld [vmem:[%s4 + $0x100] sm:$0xff]
      %v818 = vld [vmem:[%s4 + $0x108] sm:$0xff]
      %v819 = vld [vmem:[%s4 + $0x110] sm:$0xff]
      %v820 = vld [vmem:[%s4 + $0x118] sm:$0xff]
      %v821 = vld [vmem:[%s4 + $0x120] sm:$0xff]
      %v822 = vld [vmem:[%s4 + $0x128] sm:$0xff]
      %v823 = vld [vmem:[%s4 + $0x130] sm:$0xff]
      %v824 = vld [vmem:[%s4 + $0x138] sm:$0xff]
      %v825 = vld [vmem:[%s4 + $0x140] sm:$0xff]
      %v826 = vld [vmem:[%s4 + $0x148] sm:$0xff]
      %v827 = vld [vmem:[%s4 + $0x150] sm:$0xff]
      %v828 = vld [vmem:[%s4 + $0x158] sm:$0xff]
      %v829 = vld [vmem:[%s4 + $0x160] sm:$0xff]
      %v830 = vld [vmem:[%s4 + $0x168] sm:$0xff]
      %v831 = vld [vmem:[%s4 + $0x170] sm:$0xff]
      %v832 = vld [vmem:[%s4 + $0x178] sm:$0xff]
      %v833 = vld [vmem:[%s4 + $0x180] sm:$0xff]
      %v834 = vld [vmem:[%s4 + $0x188] sm:$0xff]
      %v835 = vld [vmem:[%s4 + $0x190] sm:$0xff]
      %v836 = vld [vmem:[%s4 + $0x198] sm:$0xff]
      %v837 = vld [vmem:[%s4 + $0x1a0] sm:$0xff]
      %v838 = vld [vmem:[%s4 + $0x1a8] sm:$0xff]
      %v839 = vld [vmem:[%s4 + $0x1b0] sm:$0xff]
      %v840 = vld [vmem:[%s4 + $0x1b8] sm:$0xff]
      %v841 = vld [vmem:[%s4 + $0x1c0] sm:$0xff]
      %v842 = vld [vmem:[%s4 + $0x1c8] sm:$0xff]
      %v843 = vld [vmem:[%s4 + $0x1d0] sm:$0xff]
      %v844 = vld [vmem:[%s4 + $0x1d8] sm:$0xff]
      %v845 = vld [vmem:[%s4 + $0x1e0] sm:$0xff]
      %v846 = vld [vmem:[%s4 + $0x1e8] sm:$0xff]
      %v847 = vld [vmem:[%s4 + $0x1f0] sm:$0xff]
      %v848 = vld [vmem:[%s4 + $0x1f8] sm:$0xff]
      %v849 = vld [vmem:[%s5] sm:$0x3]
      %v851 = vperm.slane %v849, 0
      %v852 = vperm.slane %v849, 1
      %v919 = vunpack.c.l.b16 %v785
      %v920 = vunpack.c.h.b16 %v785
      %v921 = vunpack.c.l.b16 %v786
      %v922 = vunpack.c.h.b16 %v786
      %v923 = vunpack.c.l.b16 %v787
      %v924 = vunpack.c.h.b16 %v787
      %v925 = vunpack.c.l.b16 %v788
      %v926 = vunpack.c.h.b16 %v788
      %v927 = vunpack.c.l.b16 %v789
      %v928 = vunpack.c.h.b16 %v789
      %v929 = vunpack.c.l.b16 %v790
      %v930 = vunpack.c.h.b16 %v790
      %v931 = vunpack.c.l.b16 %v791
      %v932 = vunpack.c.h.b16 %v791
      %v933 = vunpack.c.l.b16 %v792
      %v934 = vunpack.c.h.b16 %v792
      %v935 = vunpack.c.l.b16 %v793
      %v936 = vunpack.c.h.b16 %v793
      %v937 = vunpack.c.l.b16 %v794
      %v938 = vunpack.c.h.b16 %v794
      %v939 = vunpack.c.l.b16 %v795
      %v940 = vunpack.c.h.b16 %v795
      %v941 = vunpack.c.l.b16 %v796
      %v942 = vunpack.c.h.b16 %v796
      %v943 = vunpack.c.l.b16 %v797
      %v944 = vunpack.c.h.b16 %v797
      %v945 = vunpack.c.l.b16 %v798
      %v946 = vunpack.c.h.b16 %v798
      %v947 = vunpack.c.l.b16 %v799
      %v948 = vunpack.c.h.b16 %v799
      %v949 = vunpack.c.l.b16 %v800
      %v950 = vunpack.c.h.b16 %v800
      %v951 = vunpack.c.l.b16 %v801
      %v952 = vunpack.c.h.b16 %v801
      %v953 = vunpack.c.l.b16 %v802
      %v954 = vunpack.c.h.b16 %v802
      %v955 = vunpack.c.l.b16 %v803
      %v956 = vunpack.c.h.b16 %v803
      %v957 = vunpack.c.l.b16 %v804
      %v958 = vunpack.c.h.b16 %v804
      %v959 = vunpack.c.l.b16 %v805
      %v960 = vunpack.c.h.b16 %v805
      %v961 = vunpack.c.l.b16 %v806
      %v962 = vunpack.c.h.b16 %v806
      %v963 = vunpack.c.l.b16 %v807
      %v964 = vunpack.c.h.b16 %v807
      %v965 = vunpack.c.l.b16 %v808
      %v966 = vunpack.c.h.b16 %v808
      %v967 = vunpack.c.l.b16 %v809
      %v968 = vunpack.c.h.b16 %v809
      %v969 = vunpack.c.l.b16 %v810
      %v970 = vunpack.c.h.b16 %v810
      %v971 = vunpack.c.l.b16 %v811
      %v972 = vunpack.c.h.b16 %v811
      %v973 = vunpack.c.l.b16 %v812
      %v974 = vunpack.c.h.b16 %v812
      %v975 = vunpack.c.l.b16 %v813
      %v976 = vunpack.c.h.b16 %v813
      %v977 = vunpack.c.l.b16 %v814
      %v978 = vunpack.c.h.b16 %v814
      %v979 = vunpack.c.l.b16 %v815
      %v980 = vunpack.c.h.b16 %v815
      %v981 = vunpack.c.l.b16 %v816
      %v982 = vunpack.c.h.b16 %v816
      %v983 = vunpack.c.l.b16 %v817
      %v984 = vunpack.c.h.b16 %v817
      %v985 = vunpack.c.l.b16 %v818
      %v986 = vunpack.c.h.b16 %v818
      %v987 = vunpack.c.l.b16 %v819
      %v988 = vunpack.c.h.b16 %v819
      %v989 = vunpack.c.l.b16 %v820
      %v990 = vunpack.c.h.b16 %v820
      %v991 = vunpack.c.l.b16 %v821
      %v992 = vunpack.c.h.b16 %v821
      %v993 = vunpack.c.l.b16 %v822
      %v994 = vunpack.c.h.b16 %v822
      %v995 = vunpack.c.l.b16 %v823
      %v996 = vunpack.c.h.b16 %v823
      %v997 = vunpack.c.l.b16 %v824
      %v998 = vunpack.c.h.b16 %v824
      %v999 = vunpack.c.l.b16 %v825
      %v1000 = vunpack.c.h.b16 %v825
      %v1001 = vunpack.c.l.b16 %v826
      %v1002 = vunpack.c.h.b16 %v826
      %v1003 = vunpack.c.l.b16 %v827
      %v1004 = vunpack.c.h.b16 %v827
      %v1005 = vunpack.c.l.b16 %v828
      %v1006 = vunpack.c.h.b16 %v828
      %v1007 = vunpack.c.l.b16 %v829
      %v1008 = vunpack.c.h.b16 %v829
      %v1009 = vunpack.c.l.b16 %v830
      %v1010 = vunpack.c.h.b16 %v830
      %v1011 = vunpack.c.l.b16 %v831
      %v1012 = vunpack.c.h.b16 %v831
      %v1013 = vunpack.c.l.b16 %v832
      %v1014 = vunpack.c.h.b16 %v832
      %v1015 = vunpack.c.l.b16 %v833
      %v1016 = vunpack.c.h.b16 %v833
      %v1017 = vunpack.c.l.b16 %v834
      %v1018 = vunpack.c.h.b16 %v834
      %v1019 = vunpack.c.l.b16 %v835
      %v1020 = vunpack.c.h.b16 %v835
      %v1021 = vunpack.c.l.b16 %v836
      %v1022 = vunpack.c.h.b16 %v836
      %v1023 = vunpack.c.l.b16 %v837
      %v1024 = vunpack.c.h.b16 %v837
      %v1025 = vunpack.c.l.b16 %v838
      %v1026 = vunpack.c.h.b16 %v838
      %v1027 = vunpack.c.l.b16 %v839
      %v1028 = vunpack.c.h.b16 %v839
      %v1029 = vunpack.c.l.b16 %v840
      %v1030 = vunpack.c.h.b16 %v840
      %v1031 = vunpack.c.l.b16 %v841
      %v1032 = vunpack.c.h.b16 %v841
      %v1033 = vunpack.c.l.b16 %v842
      %v1034 = vunpack.c.h.b16 %v842
      %v1035 = vunpack.c.l.b16 %v843
      %v1036 = vunpack.c.h.b16 %v843
      %v1037 = vunpack.c.l.b16 %v844
      %v1038 = vunpack.c.h.b16 %v844
      %v1039 = vunpack.c.l.b16 %v845
      %v1040 = vunpack.c.h.b16 %v845
      %v1041 = vunpack.c.l.b16 %v846
      %v1042 = vunpack.c.h.b16 %v846
      %v1043 = vunpack.c.l.b16 %v847
      %v1044 = vunpack.c.h.b16 %v847
      %v1045 = vunpack.c.l.b16 %v848
      %v1046 = vunpack.c.h.b16 %v848
      %v1047 = vpack.c.b16 %v921, %v919
      %v1048 = vpack.c.b16 %v922, %v920
      %v1049 = vpack.c.b16 %v925, %v923
      %v1050 = vpack.c.b16 %v926, %v924
      %v1051 = vpack.c.b16 %v929, %v927
      %v1052 = vpack.c.b16 %v930, %v928
      %v1053 = vpack.c.b16 %v933, %v931
      %v1054 = vpack.c.b16 %v934, %v932
      %v1055 = vpack.c.b16 %v937, %v935
      %v1056 = vpack.c.b16 %v938, %v936
      %v1057 = vpack.c.b16 %v941, %v939
      %v1058 = vpack.c.b16 %v942, %v940
      %v1059 = vpack.c.b16 %v945, %v943
      %v1060 = vpack.c.b16 %v946, %v944
      %v1061 = vpack.c.b16 %v949, %v947
      %v1062 = vpack.c.b16 %v950, %v948
      %v1063 = vpack.c.b16 %v953, %v951
      %v1064 = vpack.c.b16 %v954, %v952
      %v1065 = vpack.c.b16 %v957, %v955
      %v1066 = vpack.c.b16 %v958, %v956
      %v1067 = vpack.c.b16 %v961, %v959
      %v1068 = vpack.c.b16 %v962, %v960
      %v1069 = vpack.c.b16 %v965, %v963
      %v1070 = vpack.c.b16 %v966, %v964
      %v1071 = vpack.c.b16 %v969, %v967
      %v1072 = vpack.c.b16 %v970, %v968
      %v1073 = vpack.c.b16 %v973, %v971
      %v1074 = vpack.c.b16 %v974, %v972
      %v1075 = vpack.c.b16 %v977, %v975
      %v1076 = vpack.c.b16 %v978, %v976
      %v1077 = vpack.c.b16 %v981, %v979
      %v1078 = vpack.c.b16 %v982, %v980
      %v1079 = vpack.c.b16 %v985, %v983
      %v1080 = vpack.c.b16 %v986, %v984
      %v1081 = vpack.c.b16 %v989, %v987
      %v1082 = vpack.c.b16 %v990, %v988
      %v1083 = vpack.c.b16 %v993, %v991
      %v1084 = vpack.c.b16 %v994, %v992
      %v1085 = vpack.c.b16 %v997, %v995
      %v1086 = vpack.c.b16 %v998, %v996
      %v1087 = vpack.c.b16 %v1001, %v999
      %v1088 = vpack.c.b16 %v1002, %v1000
      %v1089 = vpack.c.b16 %v1005, %v1003
      %v1090 = vpack.c.b16 %v1006, %v1004
      %v1091 = vpack.c.b16 %v1009, %v1007
      %v1092 = vpack.c.b16 %v1010, %v1008
      %v1093 = vpack.c.b16 %v1013, %v1011
      %v1094 = vpack.c.b16 %v1014, %v1012
      %v1095 = vpack.c.b16 %v1017, %v1015
      %v1096 = vpack.c.b16 %v1018, %v1016
      %v1097 = vpack.c.b16 %v1021, %v1019
      %v1098 = vpack.c.b16 %v1022, %v1020
      %v1099 = vpack.c.b16 %v1025, %v1023
      %v1100 = vpack.c.b16 %v1026, %v1024
      %v1101 = vpack.c.b16 %v1029, %v1027
      %v1102 = vpack.c.b16 %v1030, %v1028
      %v1103 = vpack.c.b16 %v1033, %v1031
      %v1104 = vpack.c.b16 %v1034, %v1032
      %v1105 = vpack.c.b16 %v1037, %v1035
      %v1106 = vpack.c.b16 %v1038, %v1036
      %v1107 = vpack.c.b16 %v1041, %v1039
      %v1108 = vpack.c.b16 %v1042, %v1040
      %v1109 = vpack.c.b16 %v1045, %v1043
      %v1110 = vpack.c.b16 %v1046, %v1044
      %1175 = vmatpush.bf16.msra.mxu0 %v1061
      %1176 = vmatpush.bf16.msra.mxu0 %v1059
      %1177 = vmatpush.bf16.msra.mxu0 %v1057
      %1178 = vmatpush.bf16.msra.mxu0 %v1055
      %1179 = vmatpush.bf16.msra.mxu0 %v1053
      %1180 = vmatpush.bf16.msra.mxu0 %v1051
      %1181 = vmatpush.bf16.msra.mxu0 %v1049
      %1182 = vmatpush.bf16.msra.mxu0 %v1047
      %1183 = vmatmul.bf16.gmra.mxu0 %v753
      %v1184 = vpop.f32.mrf.mxu0
      %v1185 = vadd.f32 %v851, %v1184
      %v1186 = vpop.f32.mrf.mxu0
      %v1187 = vadd.f32 %v851, %v1186
      %1188 = vmatmul.bf16.gmra.mxu0 %v754
      %v1189 = vpop.f32.mrf.mxu0
      %v1190 = vadd.f32 %v851, %v1189
      %v1191 = vpop.f32.mrf.mxu0
      %v1192 = vadd.f32 %v851, %v1191
      %1193 = vdwg.mxu0
      %1194 = vmatpush.bf16.msra.mxu0 %v1077
      %1195 = vmatpush.bf16.msra.mxu0 %v1075
      %1196 = vmatpush.bf16.msra.mxu0 %v1073
      %1197 = vmatpush.bf16.msra.mxu0 %v1071
      %1198 = vmatpush.bf16.msra.mxu0 %v1069
      %1199 = vmatpush.bf16.msra.mxu0 %v1067
      %1200 = vmatpush.bf16.msra.mxu0 %v1065
      %1201 = vmatpush.bf16.msra.mxu0 %v1063
      %1202 = vmatmul.bf16.gmra.mxu0 %v761
      %v1203 = vpop.f32.mrf.mxu0
      %v1204 = vadd.f32 %v1185, %v1203
      %v1205 = vpop.f32.mrf.mxu0
      %v1206 = vadd.f32 %v1187, %v1205
      %1207 = vmatmul.bf16.gmra.mxu0 %v762
      %v1208 = vpop.f32.mrf.mxu0
      %v1209 = vadd.f32 %v1190, %v1208
      %v1210 = vpop.f32.mrf.mxu0
      %v1211 = vadd.f32 %v1192, %v1210
      %1212 = vdwg.mxu0
      %1213 = vmatpush.bf16.msra.mxu0 %v1093
      %1214 = vmatpush.bf16.msra.mxu0 %v1091
      %1215 = vmatpush.bf16.msra.mxu0 %v1089
      %1216 = vmatpush.bf16.msra.mxu0 %v1087
      %1217 = vmatpush.bf16.msra.mxu0 %v1085
      %1218 = vmatpush.bf16.msra.mxu0 %v1083
      %1219 = vmatpush.bf16.msra.mxu0 %v1081
      %1220 = vmatpush.bf16.msra.mxu0 %v1079
      %1221 = vmatmul.bf16.gmra.mxu0 %v773
      %v1222 = vpop.f32.mrf.mxu0
      %v1223 = vadd.f32 %v1204, %v1222
      %v1224 = vpop.f32.mrf.mxu0
      %v1225 = vadd.f32 %v1206, %v1224
      %1226 = vmatmul.bf16.gmra.mxu0 %v774
      %v1227 = vpop.f32.mrf.mxu0
      %v1228 = vadd.f32 %v1209, %v1227
      %v1229 = vpop.f32.mrf.mxu0
      %v1230 = vadd.f32 %v1211, %v1229
      %1231 = vdwg.mxu0
      %1232 = vmatpush.bf16.msra.mxu0 %v1109
      %1233 = vmatpush.bf16.msra.mxu0 %v1107
      %1234 = vmatpush.bf16.msra.mxu0 %v1105
      %1235 = vmatpush.bf16.msra.mxu0 %v1103
      %1236 = vmatpush.bf16.msra.mxu0 %v1101
      %1237 = vmatpush.bf16.msra.mxu0 %v1099
      %1238 = vmatpush.bf16.msra.mxu0 %v1097
      %1239 = vmatpush.bf16.msra.mxu0 %v1095
      %1240 = vmatmul.bf16.gmra.mxu0 %v781
      %v1241 = vpop.f32.mrf.mxu0
      %v1242 = vadd.f32 %v1223, %v1241
      %v1243 = vpop.f32.mrf.mxu0
      %v1244 = vadd.f32 %v1225, %v1243
      %1245 = vmatmul.bf16.gmra.mxu0 %v782
      %v1246 = vpop.f32.mrf.mxu0
      %v1247 = vadd.f32 %v1228, %v1246
      %v1248 = vpop.f32.mrf.mxu0
      %v1249 = vadd.f32 %v1230, %v1248
      %1250 = vdwg.mxu0
      %1251 = vmatpush.bf16.msra.mxu0 %v1062
      %1252 = vmatpush.bf16.msra.mxu0 %v1060
      %1253 = vmatpush.bf16.msra.mxu0 %v1058
      %1254 = vmatpush.bf16.msra.mxu0 %v1056
      %1255 = vmatpush.bf16.msra.mxu0 %v1054
      %1256 = vmatpush.bf16.msra.mxu0 %v1052
      %1257 = vmatpush.bf16.msra.mxu0 %v1050
      %1258 = vmatpush.bf16.msra.mxu0 %v1048
      %1259 = vmatmul.bf16.gmra.mxu0 %v753
      %v1260 = vpop.f32.mrf.mxu0
      %v1261 = vadd.f32 %v852, %v1260
      %v1262 = vpop.f32.mrf.mxu0
      %v1263 = vadd.f32 %v852, %v1262
      %1264 = vmatmul.bf16.gmra.mxu0 %v754
      %v1265 = vpop.f32.mrf.mxu0
      %v1266 = vadd.f32 %v852, %v1265
      %v1267 = vpop.f32.mrf.mxu0
      %v1268 = vadd.f32 %v852, %v1267
      %1269 = vdwg.mxu0
      %1270 = vmatpush.bf16.msra.mxu0 %v1078
      %1271 = vmatpush.bf16.msra.mxu0 %v1076
      %1272 = vmatpush.bf16.msra.mxu0 %v1074
      %1273 = vmatpush.bf16.msra.mxu0 %v1072
      %1274 = vmatpush.bf16.msra.mxu0 %v1070
      %1275 = vmatpush.bf16.msra.mxu0 %v1068
      %1276 = vmatpush.bf16.msra.mxu0 %v1066
      %1277 = vmatpush.bf16.msra.mxu0 %v1064
      %1278 = vmatmul.bf16.gmra.mxu0 %v761
      %v1279 = vpop.f32.mrf.mxu0
      %v1280 = vadd.f32 %v1261, %v1279
      %v1281 = vpop.f32.mrf.mxu0
      %v1282 = vadd.f32 %v1263, %v1281
      %1283 = vmatmul.bf16.gmra.mxu0 %v762
      %v1284 = vpop.f32.mrf.mxu0
      %v1285 = vadd.f32 %v1266, %v1284
      %v1286 = vpop.f32.mrf.mxu0
      %v1287 = vadd.f32 %v1268, %v1286
      %1288 = vdwg.mxu0
      %1289 = vmatpush.bf16.msra.mxu0 %v1094
      %1290 = vmatpush.bf16.msra.mxu0 %v1092
      %1291 = vmatpush.bf16.msra.mxu0 %v1090
      %1292 = vmatpush.bf16.msra.mxu0 %v1088
      %1293 = vmatpush.bf16.msra.mxu0 %v1086
      %1294 = vmatpush.bf16.msra.mxu0 %v1084
      %1295 = vmatpush.bf16.msra.mxu0 %v1082
      %1296 = vmatpush.bf16.msra.mxu0 %v1080
      %1297 = vmatmul.bf16.gmra.mxu0 %v773
      %v1298 = vpop.f32.mrf.mxu0
      %v1299 = vadd.f32 %v1280, %v1298
      %v1300 = vpop.f32.mrf.mxu0
      %v1301 = vadd.f32 %v1282, %v1300
      %1302 = vmatmul.bf16.gmra.mxu0 %v774
      %v1303 = vpop.f32.mrf.mxu0
      %v1304 = vadd.f32 %v1285, %v1303
      %v1305 = vpop.f32.mrf.mxu0
      %v1306 = vadd.f32 %v1287, %v1305
      %1307 = vdwg.mxu0
      %1308 = vmatpush.bf16.msra.mxu0 %v1110
      %1309 = vmatpush.bf16.msra.mxu0 %v1108
      %1310 = vmatpush.bf16.msra.mxu0 %v1106
      %1311 = vmatpush.bf16.msra.mxu0 %v1104
      %1312 = vmatpush.bf16.msra.mxu0 %v1102
      %1313 = vmatpush.bf16.msra.mxu0 %v1100
      %1314 = vmatpush.bf16.msra.mxu0 %v1098
      %1315 = vmatpush.bf16.msra.mxu0 %v1096
      %1316 = vmatmul.bf16.gmra.mxu0 %v781
      %v1317 = vpop.f32.mrf.mxu0
      %v1318 = vadd.f32 %v1299, %v1317
      %v1319 = vpop.f32.mrf.mxu0
      %v1320 = vadd.f32 %v1301, %v1319
      %1321 = vmatmul.bf16.gmra.mxu0 %v782
      %v1322 = vpop.f32.mrf.mxu0
      %v1323 = vadd.f32 %v1304, %v1322
      %v1324 = vpop.f32.mrf.mxu0
      %v1325 = vadd.f32 %v1306, %v1324
      %1326 = vdwg.mxu0
      %v1327 = vpack.c.bf16 %v1242, %v1242
      %v1328 = vpack.c.bf16 %v1244, %v1244
      %v1329 = vpack.c.bf16 %v1247, %v1247
      %v1330 = vpack.c.bf16 %v1249, %v1249
      %1331 = vst [vmem:[%s426] sm:$0xf] %v1327
      %1332 = vst [vmem:[%s426 + $0x4] sm:$0xf] %v1328
      %1333 = vst [vmem:[%s426 + $0x8] sm:$0xf] %v1329
      %1334 = vst [vmem:[%s426 + $0xc] sm:$0xf] %v1330
      %v1335 = vpack.c.bf16 %v1318, %v1318
      %v1336 = vpack.c.bf16 %v1320, %v1320
      %v1337 = vpack.c.bf16 %v1323, %v1323
      %v1338 = vpack.c.bf16 %v1325, %v1325
      %1339 = vst [vmem:[%s436] sm:$0xf] %v1335
      %1340 = vst [vmem:[%s436 + $0x4] sm:$0xf] %v1336
      %1341 = vst [vmem:[%s436 + $0x8] sm:$0xf] %v1337
      %1342 = vst [vmem:[%s436 + $0xc] sm:$0xf] %v1338
      %v1343 = vadd.f32 %v1318, %v1320
      %v1344 = vadd.f32 %v1343, %v1323
      %v1345 = vadd.f32 %v1344, %v1325
      %v1346 = vrot.slane %v1345, 4
      %v1347 = vadd.f32 %v1345, %v1346
      %v1348 = vrot.slane %v1347, 2
      %v1349 = vadd.f32 %v1347, %v1348
      %v1350 = vrot.slane %v1349, 1
      %v1351 = vadd.f32 %v1349, %v1350
      %v1352 = vmul.f32 %v1318, %v1318
      %v1353 = vmul.f32 %v1320, %v1320
      %v1354 = vmul.f32 %v1323, %v1323
      %v1355 = vmul.f32 %v1325, %v1325
      %v1356 = vadd.f32 %v1352, %v1353
      %v1357 = vadd.f32 %v1356, %v1354
      %v1358 = vadd.f32 %v1357, %v1355
      %v1359 = vrot.slane %v1358, 4
      %v1360 = vadd.f32 %v1358, %v1359
      %v1361 = vrot.slane %v1360, 2
      %v1362 = vadd.f32 %v1360, %v1361
      %v1363 = vrot.slane %v1362, 1
      %v1364 = vadd.f32 %v1362, %v1363
      %vm1365 = vcmask 1040384
      %v1366 = vsel %vm1365, %v1351, %v1364
      %1367 = vst [vmem:[%s447] sm:$0x3] %v1366
      %s1368 = smul.u32 %s24, 2
      %s1369 = sadd.s32 %s1368, %s25
      %s1370 = smul.u32 4, %s1369
      %p1371 = scmp.lt.s32.totalorder %s1370, 15
      %s1372 = scalar_select %p1371, %s1370, 15
      %s1373 = smul.addr %s1372, 4
      %s1374 = scalar_lea.vmem %s6, %s1373
      %s1375 = smul.u32 %s24, 2
      %s1376 = sadd.s32 %s1375, %s25
      %s1377 = smul.u32 4, %s1376
      %p1378 = scmp.lt.s32.totalorder %s1377, 15
      %s1379 = scalar_select %p1378, %s1377, 15
      %s1380 = smul.addr %s1379, 4
      %s1381 = scalar_lea.vmem %s7, %s1380
      %p1382 = scmp.lt.s32.totalorder %s24, 1
      %s1383 = scalar_select %p1382, %s24, 1
      %p1384 = scmp.lt.s32.totalorder %s25, 1
      %s1385 = scalar_select %p1384, %s25, 1
      %s1386 = smul.addr %s1383, 2
      %s1387 = sadd.s32 %s1385, %s1386
      %s1388 = smul.addr %s1387, 2
      %s1389 = scalar_lea.vmem %s8, %s1388
      // Predicated region
      $region45: #{res_down_forward.4} parent=43 // pred_check
        %p1390 = pneg %p206
      $region46: #{res_down_forward.4} parent=43 // pred_check_branch
        %1392 = sbr.rel (%p1390) target = $region48
      $region47: #{res_down_forward.4} parent=43 // pred_region
        %s1393 = smul.u32 %s24, 2
        %s1394 = sadd.s32 %s1393, %s25
        %s1395 = smul.u32 4, %s1394
      $region48: #{res_down_forward.4} parent=43 // pred_fallthru
        _
      // Predicated region
      $region49: #{res_down_forward.4} parent=43 // pred_check
        %p1396 = pneg %p236
      $region50: #{res_down_forward.4} parent=43 // pred_check_branch
        %1398 = sbr.rel (%p1396) target = $region52
      $region51: #{res_down_forward.4} parent=43 // pred_region
        %s1399 = smul.u32 %s24, 2
        %s1400 = sadd.s32 %s1399, %s25
        %s1401 = smul.u32 4, %s1400
      $region52: #{res_down_forward.4} parent=43 // pred_fallthru
        _
      // Predicated region
      $region53: #{res_down_forward.4} parent=43 // pred_check
        %p1402 = pneg %p264
      $region54: #{res_down_forward.4} parent=43 // pred_check_branch
        %1404 = sbr.rel (%p1402) target = $region56
      $region55: #{res_down_forward.4} parent=43 // pred_region
        _
      $region56: #{res_down_forward.4} parent=43 // pred_fallthru
        _
    $region44: #{res_down_forward.4} parent=5 // pred_fallthru
      _
    %p1405 = scmp.le.s32.totalorder 2, %s15
    // Predicated region
    $region57: #{res_down_forward.4} parent=5 // pred_check
      %p1406 = pneg %p1405
    $region58: #{res_down_forward.4} parent=5 // pred_check_branch
      %1408 = sbr.rel (%p1406) target = $region60
    $region59: #{res_down_forward.4} parent=5 // pred_region
      %s1409 = ssub.s32 %s15, 2
      // Predicated region
      $region61: #{res_down_forward.4} parent=59 // pred_check
        %p1410 = pneg %p212
      $region62: #{res_down_forward.4} parent=59 // pred_check_branch
        %1412 = sbr.rel (%p1410) target = $region64
      $region63: #{res_down_forward.4} parent=59 // pred_region
        %s1413 = smul.u32 %s26, 2
        %s1414 = sadd.s32 %s1413, %s27
        %s1415 = smul.u32 4, %s1414
        %p1416 = scmp.lt.s32.totalorder %s1415, 15
        %s1417 = scalar_select %p1416, %s1415, 15
        %s1418 = smul.addr %s1417, 4
        %s1419 = scalar_lea.vmem %s6, %s1418
      $region64: #{res_down_forward.4} parent=59 // pred_fallthru
        _
      // Predicated region
      $region65: #{res_down_forward.4} parent=59 // pred_check
        %p1420 = pneg %p242
      $region66: #{res_down_forward.4} parent=59 // pred_check_branch
        %1422 = sbr.rel (%p1420) target = $region68
      $region67: #{res_down_forward.4} parent=59 // pred_region
        %s1423 = smul.u32 %s26, 2
        %s1424 = sadd.s32 %s1423, %s27
        %s1425 = smul.u32 4, %s1424
        %p1426 = scmp.lt.s32.totalorder %s1425, 15
        %s1427 = scalar_select %p1426, %s1425, 15
        %s1428 = smul.addr %s1427, 4
        %s1429 = scalar_lea.vmem %s7, %s1428
      $region68: #{res_down_forward.4} parent=59 // pred_fallthru
        _
      // Predicated region
      $region69: #{res_down_forward.4} parent=59 // pred_check
        %p1430 = pneg %p270
      $region70: #{res_down_forward.4} parent=59 // pred_check_branch
        %1432 = sbr.rel (%p1430) target = $region72
      $region71: #{res_down_forward.4} parent=59 // pred_region
        %p1433 = scmp.lt.s32.totalorder %s26, 1
        %s1434 = scalar_select %p1433, %s26, 1
        %p1435 = scmp.lt.s32.totalorder %s27, 1
        %s1436 = scalar_select %p1435, %s27, 1
        %s1437 = smul.addr %s1434, 2
        %s1438 = sadd.s32 %s1436, %s1437
        %s1439 = smul.addr %s1438, 2
        %s1440 = scalar_lea.vmem %s8, %s1439
      $region72: #{res_down_forward.4} parent=59 // pred_fallthru
        _
    $region60: #{res_down_forward.4} parent=5 // pred_fallthru
      _
  $region6: #{res_down_forward.4} parent=0 // loop_footer
    %s19 = sadd.s32 1, %s15
  $region7: #{res_down_forward.4} parent=0 // loop_footer_branch
    %14 = sbr.rel target = $region3
  $region8: #{res_down_forward.4} parent=0 // loop_exit
    _

// kernel: res_down_forward.5
$region0: #{res_down_forward.5}
  #allocation0 [shape = 'u32[]', space=smem, size = 0x4, offset = 0x4, fixed_abs, tag = 'smem constant byte address 0x4 - core index']
  #allocation1 [shape = 'u32[72,128]{1,0:T(1,128)}', space=vmem, size = 0x9000, scoped, tag = 'internal scratch']
  #allocation2 [shape = 'bf16[6,10,128]{2,1,0:T(8,128)(2,1)}', space=vmem, size = 0x6000, scoped, tag = 'scratch operand']
  %s0 = inlined_call_operand.vmem [shape: bf16[128,128], index: 0, kind: input, shape index: {}, may-alias: {0,1,2}]
  %s1 = inlined_call_operand.vmem [shape: bf16[128,128], index: 1, kind: input, shape index: {}, may-alias: {0,1,2}]
  %s2 = inlined_call_operand.vmem [shape: bf16[128,128], index: 2, kind: input, shape index: {}, may-alias: {0,1,2}]
  %s3 = inlined_call_operand.vmem [shape: f32[1,128], index: 3, kind: input, shape index: {}]
  %s4 = inlined_call_operand.vmem [shape: f32[1,128], index: 4, kind: input, shape index: {}]
  %s5 = inlined_call_operand.vmem [shape: bf16[1152,128], index: 5, kind: input, shape index: {}]
  %s6 = inlined_call_operand.vmem [shape: f32[1,128], index: 6, kind: input, shape index: {}]
  %s7 = inlined_call_operand.vmem [shape: bf16[128,128], index: 7, kind: input, shape index: {}]
  %s8 = inlined_call_operand.vmem [shape: f32[128,128], index: 8, kind: output, shape index: {}]
  %s9 = sld [smem:[#allocation0]]
  $region65: #{res_down_forward.5} parent=0
    _
  %s11 = ssub.s32 1, %s9
  %s12 = scalar_select 0, %s11, %s9
  loop: start=0, step=1, limit=6
  $region2: #{res_down_forward.5} parent=0 // loop_pre_header
    _
  $region3: #{res_down_forward.5} parent=0 // loop_header
    %s14 = sphi 0, %s18
    %p15 = scmp.ge.s32.totalorder %s14, 6
    %s21 = sphi 0, %s33
    %s22 = sphi 0, %s29
    %s23 = sphi 0, %s21
    %s24 = sphi 0, %s22
    %s25 = sphi 0, %s23
    %s26 = sphi 0, %s24
    %s40 = sphi 0, %s42
    %s43 = sphi 0, %s40
    %s44 = sphi 0, %s43
    %s60 = sphi 0, %s44
    %s78 = sphi 0, %s80
    %s81 = sphi 0, %s78
    %s82 = sphi 0, %s81
    %s98 = sphi 0, %s82
    %s118 = sphi 0, %s120
    %s121 = sphi 0, %s118
    %s122 = sphi 0, %s121
    %s138 = sphi 0, %s122
    %s142 = sphi 0, %s142
    %s144 = sphi 0, %s142
    %s145 = sphi 0, %s144
    %s159 = sphi 0, %s145
    %s163 = sphi 0, %s163
    %s165 = sphi 0, %s163
    %s166 = sphi 0, %s165
    %s180 = sphi 0, %s166
    %s184 = sphi 0, %s184
    %s186 = sphi 0, %s184
    %s187 = sphi 0, %s186
    %s201 = sphi 0, %s187
    %s205 = sphi 0, %s205
    %s207 = sphi 0, %s205
    %s208 = sphi 0, %s207
    %s222 = sphi 0, %s208
    %s232 = sphi 0, %s234
    %s235 = sphi 0, %s232
    %s236 = sphi 0, %s235
    %s252 = sphi 0, %s236
    %s262 = sphi 0, %s264
    %s265 = sphi 0, %s262
    %s266 = sphi 0, %s265
    %s282 = sphi 0, %s266
  $region4: #{res_down_forward.5} parent=0 // loop_header_branch
    %17 = sbr.rel (%p15) target = $region8
  $region5: #{res_down_forward.5} parent=0 // loop_body
    %s19 = ssub.s32 %s14, 1
    %s20 = ssub.s32 %s14, 2
    %s27 = sadd.s32 1, %s22
    %p28 = scmp.ge.s32.totalorder %s27, 2
    %s29 = scalar_select %p28, 0, %s27
    %s30 = sadd.s32 1, %s21
    %s31 = scalar_select %p28, %s30, %s21
    %p32 = scmp.ge.s32.totalorder %s31, 2
    %s33 = scalar_select %p32, 0, %s31
    %s34 = smul.u32 %s21, 2
    %s35 = sadd.s32 %s34, %s22
    %s36 = smul.u32 %s33, 2
    %s37 = sadd.s32 %s36, %s29
    %s38 = ssub.s32 %s35, %s37
    %p39 = scmp.eq.s32.totalorder %s38, 0
    %s41 = sadd.s32 %s40, 1
    %s42 = scalar_select %p39, %s40, %s41
    %p45 = pneg %p39
    %p46 = scmp.eq.s32.totalorder %s14, 3
    %p47 = por %p45, %p46
    %p48 = scmp.ne.s32.totalorder %s40, %s43
    %p49 = scmp.eq.s32.totalorder %s14, 0
    %p50 = por %p48, %p49
    %p51 = scmp.ne.s32.totalorder %s40, %s43
    %p52 = scmp.eq.s32.totalorder %s19, 3
    %p53 = por %p51, %p52
    %p54 = scmp.ne.s32.totalorder %s43, %s44
    %p55 = scmp.eq.s32.totalorder %s19, 0
    %p56 = por %p54, %p55
    %p57 = scmp.ne.s32.totalorder %s43, %s44
    %p58 = scmp.eq.s32.totalorder %s20, 3
    %p59 = por %p57, %p58
    %p61 = scmp.ne.s32.totalorder %s44, %s60
    %p62 = scmp.eq.s32.totalorder %s20, 0
    %p63 = por %p61, %p62
    %s64 = smul.u32 %s21, 8
    %s65 = smul.u32 %s22, 4
    %s66 = sadd.s32 %s64, %s65
    %s67 = ssub.s32 %s66, 1
    %p68 = scmp.gt.s32.totalorder %s67, %s64
    %s69 = scalar_select %p68, %s67, %s64
    %s70 = smul.u32 %s33, 8
    %s71 = smul.u32 %s29, 4
    %s72 = sadd.s32 %s70, %s71
    %s73 = ssub.s32 %s72, 1
    %p74 = scmp.gt.s32.totalorder %s73, %s70
    %s75 = scalar_select %p74, %s73, %s70
    %s76 = ssub.s32 %s69, %s75
    %p77 = scmp.eq.s32.totalorder %s76, 0
    %s79 = sadd.s32 %s78, 1
    %s80 = scalar_select %p77, %s78, %s79
    %p83 = pneg %p77
    %p84 = scmp.eq.s32.totalorder %s14, 3
    %p85 = por %p83, %p84
    %p86 = scmp.ne.s32.totalorder %s78, %s81
    %p87 = scmp.eq.s32.totalorder %s14, 0
    %p88 = por %p86, %p87
    %p89 = scmp.ne.s32.totalorder %s78, %s81
    %p90 = scmp.eq.s32.totalorder %s19, 3
    %p91 = por %p89, %p90
    %p92 = scmp.ne.s32.totalorder %s81, %s82
    %p93 = scmp.eq.s32.totalorder %s19, 0
    %p94 = por %p92, %p93
    %p95 = scmp.ne.s32.totalorder %s81, %s82
    %p96 = scmp.eq.s32.totalorder %s20, 3
    %p97 = por %p95, %p96
    %p99 = scmp.ne.s32.totalorder %s82, %s98
    %p100 = scmp.eq.s32.totalorder %s20, 0
    %p101 = por %p99, %p100
    %s102 = smul.u32 %s21, 8
    %s103 = sadd.s32 %s22, 1
    %s104 = smul.u32 %s103, 4
    %s105 = sadd.s32 %s102, %s104
    %s106 = sadd.s32 %s102, 7
    %p107 = scmp.lt.s32.totalorder %s105, %s106
    %s108 = scalar_select %p107, %s105, %s106
    %s109 = smul.u32 %s33, 8
    %s110 = sadd.s32 %s29, 1
    %s111 = smul.u32 %s110, 4
    %s112 = sadd.s32 %s109, %s111
    %s113 = sadd.s32 %s109, 7
    %p114 = scmp.lt.s32.totalorder %s112, %s113
    %s115 = scalar_select %p114, %s112, %s113
    %s116 = ssub.s32 %s108, %s115
    %p117 = scmp.eq.s32.totalorder %s116, 0
    %s119 = sadd.s32 %s118, 1
    %s120 = scalar_select %p117, %s118, %s119
    %p123 = pneg %p117
    %p124 = scmp.eq.s32.totalorder %s14, 3
    %p125 = por %p123, %p124
    %p126 = scmp.ne.s32.totalorder %s118, %s121
    %p127 = scmp.eq.s32.totalorder %s14, 0
    %p128 = por %p126, %p127
    %p129 = scmp.ne.s32.totalorder %s118, %s121
    %p130 = scmp.eq.s32.totalorder %s19, 3
    %p131 = por %p129, %p130
    %p132 = scmp.ne.s32.totalorder %s121, %s122
    %p133 = scmp.eq.s32.totalorder %s19, 0
    %p134 = por %p132, %p133
    %p135 = scmp.ne.s32.totalorder %s121, %s122
    %p136 = scmp.eq.s32.totalorder %s20, 3
    %p137 = por %p135, %p136
    %p139 = scmp.ne.s32.totalorder %s122, %s138
    %p140 = scmp.eq.s32.totalorder %s20, 0
    %p141 = por %p139, %p140
    %s143 = sadd.s32 %s142, 1
    %p146 = scmp.eq.s32.totalorder %s14, 3
    %p147 = scmp.ne.s32.totalorder %s142, %s144
    %p148 = scmp.eq.s32.totalorder %s14, 0
    %p149 = por %p147, %p148
    %p150 = scmp.ne.s32.totalorder %s142, %s144
    %p151 = scmp.eq.s32.totalorder %s19, 3
    %p152 = por %p150, %p151
    %p153 = scmp.ne.s32.totalorder %s144, %s145
    %p154 = scmp.eq.s32.totalorder %s19, 0
    %p155 = por %p153, %p154
    %p156 = scmp.ne.s32.totalorder %s144, %s145
    %p157 = scmp.eq.s32.totalorder %s20, 3
    %p158 = por %p156, %p157
    %p160 = scmp.ne.s32.totalorder %s145, %s159
    %p161 = scmp.eq.s32.totalorder %s20, 0
    %p162 = por %p160, %p161
    %s164 = sadd.s32 %s163, 1
    %p167 = scmp.eq.s32.totalorder %s14, 3
    %p168 = scmp.ne.s32.totalorder %s163, %s165
    %p169 = scmp.eq.s32.totalorder %s14, 0
    %p170 = por %p168, %p169
    %p171 = scmp.ne.s32.totalorder %s163, %s165
    %p172 = scmp.eq.s32.totalorder %s19, 3
    %p173 = por %p171, %p172
    %p174 = scmp.ne.s32.totalorder %s165, %s166
    %p175 = scmp.eq.s32.totalorder %s19, 0
    %p176 = por %p174, %p175
    %p177 = scmp.ne.s32.totalorder %s165, %s166
    %p178 = scmp.eq.s32.totalorder %s20, 3
    %p179 = por %p177, %p178
    %p181 = scmp.ne.s32.totalorder %s166, %s180
    %p182 = scmp.eq.s32.totalorder %s20, 0
    %p183 = por %p181, %p182
    %s185 = sadd.s32 %s184, 1
    %p188 = scmp.eq.s32.totalorder %s14, 3
    %p189 = scmp.ne.s32.totalorder %s184, %s186
    %p190 = scmp.eq.s32.totalorder %s14, 0
    %p191 = por %p189, %p190
    %p192 = scmp.ne.s32.totalorder %s184, %s186
    %p193 = scmp.eq.s32.totalorder %s19, 3
    %p194 = por %p192, %p193
    %p195 = scmp.ne.s32.totalorder %s186, %s187
    %p196 = scmp.eq.s32.totalorder %s19, 0
    %p197 = por %p195, %p196
    %p198 = scmp.ne.s32.totalorder %s186, %s187
    %p199 = scmp.eq.s32.totalorder %s20, 3
    %p200 = por %p198, %p199
    %p202 = scmp.ne.s32.totalorder %s187, %s201
    %p203 = scmp.eq.s32.totalorder %s20, 0
    %p204 = por %p202, %p203
    %s206 = sadd.s32 %s205, 1
    %p209 = scmp.eq.s32.totalorder %s14, 3
    %p210 = scmp.ne.s32.totalorder %s205, %s207
    %p211 = scmp.eq.s32.totalorder %s14, 0
    %p212 = por %p210, %p211
    %p213 = scmp.ne.s32.totalorder %s205, %s207
    %p214 = scmp.eq.s32.totalorder %s19, 3
    %p215 = por %p213, %p214
    %p216 = scmp.ne.s32.totalorder %s207, %s208
    %p217 = scmp.eq.s32.totalorder %s19, 0
    %p218 = por %p216, %p217
    %p219 = scmp.ne.s32.totalorder %s207, %s208
    %p220 = scmp.eq.s32.totalorder %s20, 3
    %p221 = por %p219, %p220
    %p223 = scmp.ne.s32.totalorder %s208, %s222
    %p224 = scmp.eq.s32.totalorder %s20, 0
    %p225 = por %p223, %p224
    %s226 = smul.u32 %s21, 2
    %s227 = sadd.s32 %s226, %s22
    %s228 = smul.u32 %s33, 2
    %s229 = sadd.s32 %s228, %s29
    %s230 = ssub.s32 %s227, %s229
    %p231 = scmp.eq.s32.totalorder %s230, 0
    %s233 = sadd.s32 %s232, 1
    %s234 = scalar_select %p231, %s232, %s233
    %p237 = pneg %p231
    %p238 = scmp.eq.s32.totalorder %s14, 3
    %p239 = por %p237, %p238
    %p240 = scmp.ne.s32.totalorder %s232, %s235
    %p241 = scmp.eq.s32.totalorder %s14, 0
    %p242 = por %p240, %p241
    %p243 = scmp.ne.s32.totalorder %s232, %s235
    %p244 = scmp.eq.s32.totalorder %s19, 3
    %p245 = por %p243, %p244
    %p246 = scmp.ne.s32.totalorder %s235, %s236
    %p247 = scmp.eq.s32.totalorder %s19, 0
    %p248 = por %p246, %p247
    %p249 = scmp.ne.s32.totalorder %s235, %s236
    %p250 = scmp.eq.s32.totalorder %s20, 3
    %p251 = por %p249, %p250
    %p253 = scmp.ne.s32.totalorder %s236, %s252
    %p254 = scmp.eq.s32.totalorder %s20, 0
    %p255 = por %p253, %p254
    %s256 = smul.u32 %s21, 2
    %s257 = sadd.s32 %s256, %s22
    %s258 = smul.u32 %s33, 2
    %s259 = sadd.s32 %s258, %s29
    %s260 = ssub.s32 %s257, %s259
    %p261 = scmp.eq.s32.totalorder %s260, 0
    %s263 = sadd.s32 %s262, 1
    %s264 = scalar_select %p261, %s262, %s263
    %p267 = pneg %p261
    %p268 = scmp.eq.s32.totalorder %s14, 3
    %p269 = por %p267, %p268
    %p270 = scmp.ne.s32.totalorder %s262, %s265
    %p271 = scmp.eq.s32.totalorder %s14, 0
    %p272 = por %p270, %p271
    %p273 = scmp.ne.s32.totalorder %s262, %s265
    %p274 = scmp.eq.s32.totalorder %s19, 3
    %p275 = por %p273, %p274
    %p276 = scmp.ne.s32.totalorder %s265, %s266
    %p277 = scmp.eq.s32.totalorder %s19, 0
    %p278 = por %p276, %p277
    %p279 = scmp.ne.s32.totalorder %s265, %s266
    %p280 = scmp.eq.s32.totalorder %s20, 3
    %p281 = por %p279, %p280
    %p283 = scmp.ne.s32.totalorder %s266, %s282
    %p284 = scmp.eq.s32.totalorder %s20, 0
    %p285 = por %p283, %p284
    %p286 = scmp.le.s32.totalorder 1, %s14
    %p287 = scmp.lt.s32.totalorder %s14, 5
    %p288 = pnand %p286, %p287
    %p289 = pneg %p288
    // Predicated region
    $region9: #{res_down_forward.5} parent=5 // pred_check
      _
    $region10: #{res_down_forward.5} parent=5 // pred_check_branch
      %291 = sbr.rel (%p288) target = $region12
    $region11: #{res_down_forward.5} parent=5 // pred_region
      %s292 = ssub.s32 %s14, 1
      // Predicated region
      $region13: #{res_down_forward.5} parent=11 // pred_check
        %p293 = pneg %p155
      $region14: #{res_down_forward.5} parent=11 // pred_check_branch
        %295 = sbr.rel (%p293) target = $region16
      $region15: #{res_down_forward.5} parent=11 // pred_region
        _
      $region16: #{res_down_forward.5} parent=11 // pred_fallthru
        _
      // Predicated region
      $region17: #{res_down_forward.5} parent=11 // pred_check
        %p296 = pneg %p176
      $region18: #{res_down_forward.5} parent=11 // pred_check_branch
        %298 = sbr.rel (%p296) target = $region20
      $region19: #{res_down_forward.5} parent=11 // pred_region
        _
      $region20: #{res_down_forward.5} parent=11 // pred_fallthru
        _
      // Predicated region
      $region21: #{res_down_forward.5} parent=11 // pred_check
        %p299 = pneg %p197
      $region22: #{res_down_forward.5} parent=11 // pred_check_branch
        %301 = sbr.rel (%p299) target = $region24
      $region23: #{res_down_forward.5} parent=11 // pred_region
        _
      $region24: #{res_down_forward.5} parent=11 // pred_fallthru
        _
      // Predicated region
      $region25: #{res_down_forward.5} parent=11 // pred_check
        %p302 = pneg %p218
      $region26: #{res_down_forward.5} parent=11 // pred_check_branch
        %304 = sbr.rel (%p302) target = $region28
      $region27: #{res_down_forward.5} parent=11 // pred_region
        _
      $region28: #{res_down_forward.5} parent=11 // pred_fallthru
        _
    $region12: #{res_down_forward.5} parent=5 // pred_fallthru
      _
    %p305 = scmp.lt.s32.totalorder %s14, 4
    // Predicated region
    $region29: #{res_down_forward.5} parent=5 // pred_check
      %p306 = pneg %p305
    $region30: #{res_down_forward.5} parent=5 // pred_check_branch
      %308 = sbr.rel (%p306) target = $region32
    $region31: #{res_down_forward.5} parent=5 // pred_region
      // Predicated region
      $region33: #{res_down_forward.5} parent=31 // pred_check
        %p309 = pneg %p50
      $region34: #{res_down_forward.5} parent=31 // pred_check_branch
        %311 = sbr.rel (%p309) target = $region36
      $region35: #{res_down_forward.5} parent=31 // pred_region
        %s312 = smul.u32 %s21, 2
        %s313 = sadd.s32 %s312, %s22
        %s314 = smul.u32 4, %s313
        %p315 = scmp.lt.s32.totalorder %s314, 15
        %s316 = scalar_select %p315, %s314, 15
        %s317 = smul.addr %s316, 4
        %s318 = scalar_lea.vmem %s0, %s317
        %s319 = smul.u32 %s21, 2
        %s320 = sadd.s32 %s319, %s22
        %s321 = smul.u32 4, %s320
      $region36: #{res_down_forward.5} parent=31 // pred_fallthru
        _
      // Predicated region
      $region37: #{res_down_forward.5} parent=31 // pred_check
        %p322 = pneg %p88
      $region38: #{res_down_forward.5} parent=31 // pred_check_branch
        %324 = sbr.rel (%p322) target = $region40
      $region39: #{res_down_forward.5} parent=31 // pred_region
        %s325 = smul.u32 %s21, 8
        %s326 = smul.u32 %s22, 4
        %s327 = sadd.s32 %s325, %s326
        %s328 = ssub.s32 %s327, 1
        %p329 = scmp.gt.s32.totalorder %s328, %s325
        %s330 = scalar_select %p329, %s328, %s325
        %p331 = scmp.lt.s32.totalorder %s330, 15
        %s332 = scalar_select %p331, %s330, 15
        %s333 = smul.addr %s332, 4
        %s334 = scalar_lea.vmem %s1, %s333
        %s335 = smul.u32 %s21, 8
        %s336 = smul.u32 %s22, 4
        %s337 = sadd.s32 %s335, %s336
        %s338 = ssub.s32 %s337, 1
        %p339 = scmp.gt.s32.totalorder %s338, %s335
        %s340 = scalar_select %p339, %s338, %s335
      $region40: #{res_down_forward.5} parent=31 // pred_fallthru
        _
      // Predicated region
      $region41: #{res_down_forward.5} parent=31 // pred_check
        %p341 = pneg %p128
      $region42: #{res_down_forward.5} parent=31 // pred_check_branch
        %343 = sbr.rel (%p341) target = $region44
      $region43: #{res_down_forward.5} parent=31 // pred_region
        %s344 = smul.u32 %s21, 8
        %s345 = sadd.s32 %s22, 1
        %s346 = smul.u32 %s345, 4
        %s347 = sadd.s32 %s344, %s346
        %s348 = sadd.s32 %s344, 7
        %p349 = scmp.lt.s32.totalorder %s347, %s348
        %s350 = scalar_select %p349, %s347, %s348
        %p351 = scmp.lt.s32.totalorder %s350, 15
        %s352 = scalar_select %p351, %s350, 15
        %s353 = smul.addr %s352, 4
        %s354 = scalar_lea.vmem %s2, %s353
        %s355 = smul.u32 %s21, 8
        %s356 = sadd.s32 %s22, 1
        %s357 = smul.u32 %s356, 4
        %s358 = sadd.s32 %s355, %s357
        %s359 = sadd.s32 %s355, 7
        %p360 = scmp.lt.s32.totalorder %s358, %s359
        %s361 = scalar_select %p360, %s358, %s359
      $region44: #{res_down_forward.5} parent=31 // pred_fallthru
        _
      // Predicated region
      $region45: #{res_down_forward.5} parent=31 // pred_check
        %p362 = pneg %p242
      $region46: #{res_down_forward.5} parent=31 // pred_check_branch
        %364 = sbr.rel (%p362) target = $region48
      $region47: #{res_down_forward.5} parent=31 // pred_region
        %s365 = smul.u32 %s21, 2
        %s366 = sadd.s32 %s365, %s22
        %s367 = smul.u32 4, %s366
        %p368 = scmp.lt.s32.totalorder %s367, 15
        %s369 = scalar_select %p368, %s367, 15
        %s370 = smul.addr %s369, 4
        %s371 = scalar_lea.vmem %s7, %s370
        %s372 = smul.u32 %s21, 2
        %s373 = sadd.s32 %s372, %s22
        %s374 = smul.u32 4, %s373
      $region48: #{res_down_forward.5} parent=31 // pred_fallthru
        _
    $region32: #{res_down_forward.5} parent=5 // pred_fallthru
      _
    %p375 = scmp.le.s32.totalorder 1, %s14
    %p376 = scmp.lt.s32.totalorder %s14, 5
    %p377 = pnand %p375, %p376
    %p378 = pneg %p377
    // Predicated region
    $region49: #{res_down_forward.5} parent=5 // pred_check
      _
    $region50: #{res_down_forward.5} parent=5 // pred_check_branch
      %380 = sbr.rel (%p377) target = $region52
    $region51: #{res_down_forward.5} parent=5 // pred_region
      %s381 = ssub.s32 %s14, 1
      %s382 = smul.u32 %s23, 2
      %s383 = sadd.s32 %s382, %s24
      %s384 = smul.u32 4, %s383
      %p385 = scmp.lt.s32.totalorder %s384, 15
      %s386 = scalar_select %p385, %s384, 15
      %s387 = smul.addr %s386, 4
      %s388 = scalar_lea.vmem %s0, %s387
      %p389 = pneg %p56
      %p390 = pneg %p53
      %s391 = smul.u32 %s23, 8
      %s392 = smul.u32 %s24, 4
      %s393 = sadd.s32 %s391, %s392
      %s394 = ssub.s32 %s393, 1
      %p395 = scmp.gt.s32.totalorder %s394, %s391
      %s396 = scalar_select %p395, %s394, %s391
      %p397 = scmp.lt.s32.totalorder %s396, 15
      %s398 = scalar_select %p397, %s396, 15
      %s399 = smul.addr %s398, 4
      %s400 = scalar_lea.vmem %s1, %s399
      %p401 = pneg %p94
      %p402 = pneg %p91
      %s403 = smul.u32 %s23, 8
      %s404 = sadd.s32 %s24, 1
      %s405 = smul.u32 %s404, 4
      %s406 = sadd.s32 %s403, %s405
      %s407 = sadd.s32 %s403, 7
      %p408 = scmp.lt.s32.totalorder %s406, %s407
      %s409 = scalar_select %p408, %s406, %s407
      %p410 = scmp.lt.s32.totalorder %s409, 15
      %s411 = scalar_select %p410, %s409, 15
      %s412 = smul.addr %s411, 4
      %s413 = scalar_lea.vmem %s2, %s412
      %p414 = pneg %p134
      %p415 = pneg %p131
      %p416 = pneg %p155
      %p417 = pneg %p152
      %p418 = pneg %p176
      %p419 = pneg %p173
      %p420 = pneg %p197
      %p421 = pneg %p194
      %p422 = pneg %p218
      %p423 = pneg %p215
      %s424 = smul.u32 %s23, 2
      %s425 = sadd.s32 %s424, %s24
      %s426 = smul.u32 4, %s425
      %p427 = scmp.lt.s32.totalorder %s426, 15
      %s428 = scalar_select %p427, %s426, 15
      %s429 = smul.addr %s428, 4
      %s430 = scalar_lea.vmem %s7, %s429
      %p431 = pneg %p248
      %p432 = pneg %p245
      %p433 = pneg %p278
      %p434 = pneg %p275
      %s435 = smul.u32 %s23, 2
      %s436 = sadd.s32 %s435, %s24
      %s437 = smul.u32 4, %s436
      %p438 = scmp.lt.s32.totalorder %s437, 15
      %s439 = scalar_select %p438, %s437, 15
      %s440 = smul.addr %s439, 8
      %s441 = scalar_lea.vmem %s8, %s440
      %s442 = smul.u32 %s23, 2
      %s443 = sadd.s32 %s442, %s24
      %s444 = smul.u32 4, %s443
      %p445 = scmp.lt.s32.totalorder %s444, 15
      %s446 = scalar_select %p445, %s444, 15
      %s447 = smul.addr %s446, 4
      %s448 = scalar_lea.vmem %s0, %s447
      %s449 = smul.u32 %s23, 2
      %s450 = sadd.s32 %s449, %s24
      %s451 = smul.u32 4, %s450
      %s452 = smul.u32 %s23, 8
      %s453 = smul.u32 %s24, 4
      %s454 = sadd.s32 %s452, %s453
      %s455 = ssub.s32 %s454, 1
      %p456 = scmp.gt.s32.totalorder %s455, %s452
      %s457 = scalar_select %p456, %s455, %s452
      %p458 = scmp.lt.s32.totalorder %s457, 15
      %s459 = scalar_select %p458, %s457, 15
      %s460 = smul.addr %s459, 4
      %s461 = scalar_lea.vmem %s1, %s460
      %s462 = smul.u32 %s23, 8
      %s463 = smul.u32 %s24, 4
      %s464 = sadd.s32 %s462, %s463
      %s465 = ssub.s32 %s464, 1
      %p466 = scmp.gt.s32.totalorder %s465, %s462
      %s467 = scalar_select %p466, %s465, %s462
      %s468 = smul.u32 %s23, 8
      %s469 = sadd.s32 %s24, 1
      %s470 = smul.u32 %s469, 4
      %s471 = sadd.s32 %s468, %s470
      %s472 = sadd.s32 %s468, 7
      %p473 = scmp.lt.s32.totalorder %s471, %s472
      %s474 = scalar_select %p473, %s471, %s472
      %p475 = scmp.lt.s32.totalorder %s474, 15
      %s476 = scalar_select %p475, %s474, 15
      %s477 = smul.addr %s476, 4
      %s478 = scalar_lea.vmem %s2, %s477
      %s479 = smul.u32 %s23, 8
      %s480 = sadd.s32 %s24, 1
      %s481 = smul.u32 %s480, 4
      %s482 = sadd.s32 %s479, %s481
      %s483 = sadd.s32 %s479, 7
      %p484 = scmp.lt.s32.totalorder %s482, %s483
      %s485 = scalar_select %p484, %s482, %s483
      %s486 = smul.u32 %s23, 2
      %s487 = sadd.s32 %s486, %s24
      %s488 = smul.u32 4, %s487
      %p489 = scmp.lt.s32.totalorder %s488, 15
      %s490 = scalar_select %p489, %s488, 15
      %s491 = smul.addr %s490, 4
      %s492 = scalar_lea.vmem %s7, %s491
      %s493 = smul.u32 %s23, 2
      %s494 = sadd.s32 %s493, %s24
      %s495 = smul.u32 4, %s494
      %s496 = smul.u32 %s23, 2
      %s497 = sadd.s32 %s496, %s24
      %s498 = smul.u32 4, %s497
      %p499 = scmp.lt.s32.totalorder %s498, 15
      %s500 = scalar_select %p499, %s498, 15
      %s501 = smul.addr %s500, 8
      %s502 = scalar_lea.vmem %s8, %s501
      %s503 = smul.u32 %s23, 2
      %s504 = sadd.s32 %s503, %s24
      %s505 = smul.u32 4, %s504
      %v507 = vld [vmem:[%s3] sm:$0x1]
      %v508 = vld [vmem:[%s4] sm:$0x1]
      %v509 = vld [vmem:[%s461] sm:$0xf]
      %v510 = vunpack.c.l.bf16 %v509
      %v512 = vperm.slane %v507, 0
      %v514 = vmul.f32 %v510, %v512
      %v516 = vperm.slane %v508, 0
      %v518 = vadd.f32 %v514, %v516
      %vm519 = vcmp.gt.f32.partialorder %v518, 0.0
      %v520 = vmin.f32 %v518, 0.0
      %v521 = vmul.f32 %v520, 1.442695
      %v522 = vpow.pop %v521
      %v523 = vsub.f32 %v522, 1.0
      %v524 = vsel %vm519, %v518, %v523
      %v525 = vpack.c.bf16 %v524, %v524
      %p526 = scmp.eq.s32.totalorder %s24, 0
      %s527 = scalar_select %p526, 1, 0
      %v528 = vstv %s527
      %vm529 = vcmp.eq.s32.totalorder %v528, 1
      %v530 = vsel %vm529, 0, %v525
      %v531 = vld [vmem:[%s478] sm:$0xf]
      %v532 = vunpack.c.l.bf16 %v531
      %v533 = vmul.f32 %v532, %v512
      %v534 = vadd.f32 %v533, %v516
      %vm535 = vcmp.gt.f32.partialorder %v534, 0.0
      %v536 = vmin.f32 %v534, 0.0
      %v537 = vmul.f32 %v536, 1.442695
      %v538 = vpow.pop %v537
      %v539 = vsub.f32 %v538, 1.0
      %v540 = vsel %vm535, %v534, %v539
      %v541 = vpack.c.bf16 %v540, %v540
      %p542 = scmp.eq.s32.totalorder %s24, 1
      %s543 = scalar_select %p542, 1, 0
      %v544 = vstv %s543
      %vm545 = vcmp.eq.s32.totalorder %v544, 1
      %v546 = vsel %vm545, 0, %v541
      %v548 = vshrl.u32 %v530, 16
      %v550 = vrot.slane %v548, 7
      %v551 = vshll.u32 %v530, 16
      %v553 = vor.u32 %v550, %v551
      %v554 = vrot.slane %v550, 4
      %vm557 = vcmask 1043456
      %vm558 = vsmask.f32 7938
      %vm559 = vmand %vm557, %vm558
      %v560 = vld [vmem:[#allocation2] sm:$0xf]
      %v561 = vsel %vm559, %v553, %v560
      %562 = vst [vmem:[#allocation2] sm:$0xf] %v561
      %vm563 = vcmask 1040384
      %vm564 = vsmask.f32 256
      %vm565 = vmand %vm563, %vm564
      %v566 = vld [vmem:[#allocation2 + $0x4] sm:$0x1]
      %v567 = vsel %vm565, %v554, %v566
      %568 = vst [vmem:[#allocation2 + $0x4] sm:$0x1] %v567
      %v570 = vshrl.u32 %v546, 16
      %v572 = vrot.slane %v570, 7
      %v573 = vshll.u32 %v546, 16
      %v575 = vor.u32 %v572, %v573
      %v576 = vrot.slane %v572, 4
      %s579 = scalar_lea.vmem [#allocation2], 40
      %v580 = vld [vmem:[%s579] sm:$0xf]
      %v581 = vsel %vm559, %v575, %v580
      %582 = vst [vmem:[%s579] sm:$0xf] %v581
      %v583 = vld [vmem:[%s579 + $0x4] sm:$0x1]
      %v584 = vsel %vm565, %v576, %v583
      %585 = vst [vmem:[%s579 + $0x4] sm:$0x1] %v584
      %v586 = vld [vmem:[#allocation2] sm:$0x1]
      %v587 = vsel %vm565, 0, %v586
      %588 = vst [vmem:[#allocation2] sm:$0x1] %v587
      %v589 = vld [vmem:[#allocation2 + $0x8] sm:$0x1]
      %v590 = vsel %vm565, 0, %v589
      %591 = vst [vmem:[#allocation2 + $0x8] sm:$0x1] %v590
      %v592 = vld [vmem:[#allocation2 + $0x10] sm:$0x1]
      %v593 = vsel %vm565, 0, %v592
      %594 = vst [vmem:[#allocation2 + $0x10] sm:$0x1] %v593
      %v595 = vld [vmem:[#allocation2 + $0x18] sm:$0x1]
      %v596 = vsel %vm565, 0, %v595
      %597 = vst [vmem:[#allocation2 + $0x18] sm:$0x1] %v596
      %v598 = vld [vmem:[#allocation2 + $0x20] sm:$0x1]
      %v599 = vsel %vm565, 0, %v598
      %600 = vst [vmem:[#allocation2 + $0x20] sm:$0x1] %v599
      %v601 = vld [vmem:[#allocation2 + $0x28] sm:$0x1]
      %v602 = vsel %vm565, 0, %v601
      %603 = vst [vmem:[#allocation2 + $0x28] sm:$0x1] %v602
      %vm604 = vmand %vm563, %vm558
      %v605 = vld [vmem:[#allocation2 + $0x4] sm:$0x1]
      %v606 = vsel %vm604, 0, %v605
      %607 = vst [vmem:[#allocation2 + $0x4] sm:$0x1] %v606
      %v608 = vld [vmem:[#allocation2 + $0xc] sm:$0x1]
      %v609 = vsel %vm604, 0, %v608
      %610 = vst [vmem:[#allocation2 + $0xc] sm:$0x1] %v609
      %v611 = vld [vmem:[#allocation2 + $0x14] sm:$0x1]
      %v612 = vsel %vm604, 0, %v611
      %613 = vst [vmem:[#allocation2 + $0x14] sm:$0x1] %v612
      %v614 = vld [vmem:[#allocation2 + $0x1c] sm:$0x1]
      %v615 = vsel %vm604, 0, %v614
      %616 = vst [vmem:[#allocation2 + $0x1c] sm:$0x1] %v615
      %v617 = vld [vmem:[#allocation2 + $0x24] sm:$0x1]
      %v618 = vsel %vm604, 0, %v617
      %619 = vst [vmem:[#allocation2 + $0x24] sm:$0x1] %v618
      %v620 = vld [vmem:[#allocation2 + $0x2c] sm:$0x1]
      %v621 = vsel %vm604, 0, %v620
      %622 = vst [vmem:[#allocation2 + $0x2c] sm:$0x1] %v621
      %v623 = vld [vmem:[%s448] sm:$0xf]
      %v624 = vld [vmem:[%s448 + $0x4] sm:$0xf]
      %v625 = vld [vmem:[%s448 + $0x8] sm:$0xf]
      %v626 = vld [vmem:[%s448 + $0xc] sm:$0xf]
      %v627 = vunpack.c.l.bf16 %v623
      %v628 = vunpack.c.l.bf16 %v624
      %v629 = vunpack.c.l.bf16 %v625
      %v630 = vunpack.c.l.bf16 %v626
      %v631 = vmul.f32 %v627, %v512
      %v632 = vmul.f32 %v628, %v512
      %v633 = vmul.f32 %v629, %v512
      %v634 = vmul.f32 %v630, %v512
      %v635 = vadd.f32 %v631, %v516
      %v636 = vadd.f32 %v632, %v516
      %v637 = vadd.f32 %v633, %v516
      %v638 = vadd.f32 %v634, %v516
      %vm639 = vcmp.gt.f32.partialorder %v635, 0.0
      %vm640 = vcmp.gt.f32.partialorder %v636, 0.0
      %vm641 = vcmp.gt.f32.partialorder %v637, 0.0
      %vm642 = vcmp.gt.f32.partialorder %v638, 0.0
      %v643 = vmin.f32 %v635, 0.0
      %v644 = vmin.f32 %v636, 0.0
      %v645 = vmin.f32 %v637, 0.0
      %v646 = vmin.f32 %v638, 0.0
      %v647 = vmul.f32 %v643, 1.442695
      %v648 = vpow.pop %v647
      %v649 = vmul.f32 %v644, 1.442695
      %v650 = vpow.pop %v649
      %v651 = vmul.f32 %v645, 1.442695
      %v652 = vpow.pop %v651
      %v653 = vmul.f32 %v646, 1.442695
      %v654 = vpow.pop %v653
      %v655 = vsub.f32 %v648, 1.0
      %v656 = vsub.f32 %v650, 1.0
      %v657 = vsub.f32 %v652, 1.0
      %v658 = vsub.f32 %v654, 1.0
      %v659 = vsel %vm639, %v635, %v655
      %v660 = vsel %vm640, %v636, %v656
      %v661 = vsel %vm641, %v637, %v657
      %v662 = vsel %vm642, %v638, %v658
      %v663 = vpack.c.bf16 %v659, %v659
      %v664 = vpack.c.bf16 %v660, %v660
      %v665 = vpack.c.bf16 %v661, %v661
      %v666 = vpack.c.bf16 %v662, %v662
      %v668 = vshrl.u32 %v663, 16
      %v670 = vrot.slane %v668, 7
      %v671 = vshll.u32 %v663, 16
      %v673 = vor.u32 %v670, %v671
      %v674 = vrot.slane %v670, 4
      %v676 = vshrl.u32 %v664, 16
      %v678 = vrot.slane %v676, 7
      %v679 = vshll.u32 %v664, 16
      %v681 = vor.u32 %v678, %v679
      %v682 = vrot.slane %v678, 4
      %v684 = vshrl.u32 %v665, 16
      %v686 = vrot.slane %v684, 7
      %v687 = vshll.u32 %v665, 16
      %v689 = vor.u32 %v686, %v687
      %v690 = vrot.slane %v686, 4
      %v692 = vshrl.u32 %v666, 16
      %v694 = vrot.slane %v692, 7
      %v695 = vshll.u32 %v666, 16
      %v697 = vor.u32 %v694, %v695
      %v698 = vrot.slane %v694, 4
      %s707 = scalar_lea.vmem [#allocation2], 8
      %v708 = vld [vmem:[%s707] sm:$0xf]
      %v709 = vsel %vm559, %v673, %v708
      %710 = vst [vmem:[%s707] sm:$0xf] %v709
      %v711 = vld [vmem:[%s707 + $0x4] sm:$0x1]
      %v712 = vsel %vm565, %v674, %v711
      %713 = vst [vmem:[%s707 + $0x4] sm:$0x1] %v712
      %v714 = vld [vmem:[%s707 + $0x8] sm:$0xf]
      %v715 = vsel %vm559, %v681, %v714
      %716 = vst [vmem:[%s707 + $0x8] sm:$0xf] %v715
      %v717 = vld [vmem:[%s707 + $0xc] sm:$0x1]
      %v718 = vsel %vm565, %v682, %v717
      %719 = vst [vmem:[%s707 + $0xc] sm:$0x1] %v718
      %v720 = vld [vmem:[%s707 + $0x10] sm:$0xf]
      %v721 = vsel %vm559, %v689, %v720
      %722 = vst [vmem:[%s707 + $0x10] sm:$0xf] %v721
      %v723 = vld [vmem:[%s707 + $0x14] sm:$0x1]
      %v724 = vsel %vm565, %v690, %v723
      %725 = vst [vmem:[%s707 + $0x14] sm:$0x1] %v724
      %v726 = vld [vmem:[%s707 + $0x18] sm:$0xf]
      %v727 = vsel %vm559, %v697, %v726
      %728 = vst [vmem:[%s707 + $0x18] sm:$0xf] %v727
      %v729 = vld [vmem:[%s707 + $0x1c] sm:$0x1]
      %v730 = vsel %vm565, %v698, %v729
      %731 = vst [vmem:[%s707 + $0x1c] sm:$0x1] %v730
      %v732 = vld [vmem:[#allocation2] sm:$0xf]
      %v733 = vld [vmem:[#allocation2 + $0x8] sm:$0xf]
      %v734 = vld [vmem:[#allocation2 + $0x10] sm:$0xf]
      %v735 = vld [vmem:[#allocation2 + $0x18] sm:$0xf]
      %v736 = vld [vmem:[#allocation2 + $0x4] sm:$0x1]
      %v737 = vld [vmem:[#allocation2 + $0xc] sm:$0x1]
      %v738 = vld [vmem:[#allocation2 + $0x14] sm:$0x1]
      %v739 = vld [vmem:[#allocation2 + $0x1c] sm:$0x1]
      %vm740 = vsmask.f32 3328
      %vm741 = vsmask.f32 7440
      %vm742 = vmor %vm740, %vm741
      %v744 = vshrl.u32 %v732, 16
      %v746 = vrot.slane %v744, 4
      %v747 = vshll.u32 %v732, 16
      %v749 = vrot.slane %v747, 5
      %v750 = vor.u32 %v746, %v749
      %v751 = vrot.slane %v750, 4
      %v753 = vshll.u32 %v736, 16
      %v755 = vrot.slane %v753, 5
      %v756 = vsel %vm742, %v751, %v755
      %v758 = vshrl.u32 %v733, 16
      %v760 = vrot.slane %v758, 4
      %v761 = vshll.u32 %v733, 16
      %v763 = vrot.slane %v761, 5
      %v764 = vor.u32 %v760, %v763
      %v765 = vrot.slane %v764, 4
      %v767 = vshll.u32 %v737, 16
      %v769 = vrot.slane %v767, 5
      %v770 = vsel %vm742, %v765, %v769
      %v772 = vshrl.u32 %v734, 16
      %v774 = vrot.slane %v772, 4
      %v775 = vshll.u32 %v734, 16
      %v777 = vrot.slane %v775, 5
      %v778 = vor.u32 %v774, %v777
      %v779 = vrot.slane %v778, 4
      %v781 = vshll.u32 %v738, 16
      %v783 = vrot.slane %v781, 5
      %v784 = vsel %vm742, %v779, %v783
      %v786 = vshrl.u32 %v735, 16
      %v788 = vrot.slane %v786, 4
      %v789 = vshll.u32 %v735, 16
      %v791 = vrot.slane %v789, 5
      %v792 = vor.u32 %v788, %v791
      %v793 = vrot.slane %v792, 4
      %v795 = vshll.u32 %v739, 16
      %v797 = vrot.slane %v795, 5
      %v798 = vsel %vm742, %v793, %v797
      %v799 = vld [vmem:[#allocation2] sm:$0xe]
      %v800 = vld [vmem:[#allocation2 + $0x8] sm:$0xe]
      %v801 = vld [vmem:[#allocation2 + $0x10] sm:$0xe]
      %v802 = vld [vmem:[#allocation2 + $0x18] sm:$0xe]
      %vm811 = vcmask 1042432
      %vm812 = vcmask 1046532
      %vm813 = vmor %vm811, %vm812
      %v814 = vrot.slane %v799, 5
      %v815 = vrot.slane %v814, 4
      %v816 = vrot.slane %v736, 5
      %v817 = vsel %vm813, %v815, %v816
      %v818 = vrot.slane %v800, 5
      %v819 = vrot.slane %v818, 4
      %v820 = vrot.slane %v737, 5
      %v821 = vsel %vm813, %v819, %v820
      %v822 = vrot.slane %v801, 5
      %v823 = vrot.slane %v822, 4
      %v824 = vrot.slane %v738, 5
      %v825 = vsel %vm813, %v823, %v824
      %v826 = vrot.slane %v802, 5
      %v827 = vrot.slane %v826, 4
      %v828 = vrot.slane %v739, 5
      %v829 = vsel %vm813, %v827, %v828
      %v830 = vld [vmem:[%s707] sm:$0xf]
      %v831 = vld [vmem:[%s707 + $0x8] sm:$0xf]
      %v832 = vld [vmem:[%s707 + $0x10] sm:$0xf]
      %v833 = vld [vmem:[%s707 + $0x18] sm:$0xf]
      %v834 = vld [vmem:[%s707 + $0x4] sm:$0x1]
      %v835 = vld [vmem:[%s707 + $0xc] sm:$0x1]
      %v836 = vld [vmem:[%s707 + $0x14] sm:$0x1]
      %v837 = vld [vmem:[%s707 + $0x1c] sm:$0x1]
      %v839 = vshrl.u32 %v830, 16
      %v841 = vrot.slane %v839, 4
      %v842 = vshll.u32 %v830, 16
      %v844 = vrot.slane %v842, 5
      %v845 = vor.u32 %v841, %v844
      %v846 = vrot.slane %v845, 4
      %v848 = vshll.u32 %v834, 16
      %v850 = vrot.slane %v848, 5
      %v851 = vsel %vm742, %v846, %v850
      %v853 = vshrl.u32 %v831, 16
      %v855 = vrot.slane %v853, 4
      %v856 = vshll.u32 %v831, 16
      %v858 = vrot.slane %v856, 5
      %v859 = vor.u32 %v855, %v858
      %v860 = vrot.slane %v859, 4
      %v862 = vshll.u32 %v835, 16
      %v864 = vrot.slane %v862, 5
      %v865 = vsel %vm742, %v860, %v864
      %v867 = vshrl.u32 %v832, 16
      %v869 = vrot.slane %v867, 4
      %v870 = vshll.u32 %v832, 16
      %v872 = vrot.slane %v870, 5
      %v873 = vor.u32 %v869, %v872
      %v874 = vrot.slane %v873, 4
      %v876 = vshll.u32 %v836, 16
      %v878 = vrot.slane %v876, 5
      %v879 = vsel %vm742, %v874, %v878
      %v881 = vshrl.u32 %v833, 16
      %v883 = vrot.slane %v881, 4
      %v884 = vshll.u32 %v833, 16
      %v886 = vrot.slane %v884, 5
      %v887 = vor.u32 %v883, %v886
      %v888 = vrot.slane %v887, 4
      %v890 = vshll.u32 %v837, 16
      %v892 = vrot.slane %v890, 5
      %v893 = vsel %vm742, %v888, %v892
      %v894 = vld [vmem:[%s707] sm:$0xe]
      %v895 = vld [vmem:[%s707 + $0x8] sm:$0xe]
      %v896 = vld [vmem:[%s707 + $0x10] sm:$0xe]
      %v897 = vld [vmem:[%s707 + $0x18] sm:$0xe]
      %v906 = vrot.slane %v894, 5
      %v907 = vrot.slane %v906, 4
      %v908 = vrot.slane %v834, 5
      %v909 = vsel %vm813, %v907, %v908
      %v910 = vrot.slane %v895, 5
      %v911 = vrot.slane %v910, 4
      %v912 = vrot.slane %v835, 5
      %v913 = vsel %vm813, %v911, %v912
      %v914 = vrot.slane %v896, 5
      %v915 = vrot.slane %v914, 4
      %v916 = vrot.slane %v836, 5
      %v917 = vsel %vm813, %v915, %v916
      %v918 = vrot.slane %v897, 5
      %v919 = vrot.slane %v918, 4
      %v920 = vrot.slane %v837, 5
      %v921 = vsel %vm813, %v919, %v920
      %s922 = scalar_lea.vmem [#allocation2], 16
      %v923 = vld [vmem:[%s922] sm:$0xf]
      %v924 = vld [vmem:[%s922 + $0x8] sm:$0xf]
      %v925 = vld [vmem:[%s922 + $0x10] sm:$0xf]
      %v926 = vld [vmem:[%s922 + $0x18] sm:$0xf]
      %v927 = vld [vmem:[%s922 + $0x4] sm:$0x1]
      %v928 = vld [vmem:[%s922 + $0xc] sm:$0x1]
      %v929 = vld [vmem:[%s922 + $0x14] sm:$0x1]
      %v930 = vld [vmem:[%s922 + $0x1c] sm:$0x1]
      %v932 = vshrl.u32 %v923, 16
      %v934 = vrot.slane %v932, 4
      %v935 = vshll.u32 %v923, 16
      %v937 = vrot.slane %v935, 5
      %v938 = vor.u32 %v934, %v937
      %v939 = vrot.slane %v938, 4
      %v941 = vshll.u32 %v927, 16
      %v943 = vrot.slane %v941, 5
      %v944 = vsel %vm742, %v939, %v943
      %v946 = vshrl.u32 %v924, 16
      %v948 = vrot.slane %v946, 4
      %v949 = vshll.u32 %v924, 16
      %v951 = vrot.slane %v949, 5
      %v952 = vor.u32 %v948, %v951
      %v953 = vrot.slane %v952, 4
      %v955 = vshll.u32 %v928, 16
      %v957 = vrot.slane %v955, 5
      %v958 = vsel %vm742, %v953, %v957
      %v960 = vshrl.u32 %v925, 16
      %v962 = vrot.slane %v960, 4
      %v963 = vshll.u32 %v925, 16
      %v965 = vrot.slane %v963, 5
      %v966 = vor.u32 %v962, %v965
      %v967 = vrot.slane %v966, 4
      %v969 = vshll.u32 %v929, 16
      %v971 = vrot.slane %v969, 5
      %v972 = vsel %vm742, %v967, %v971
      %v974 = vshrl.u32 %v926, 16
      %v976 = vrot.slane %v974, 4
      %v977 = vshll.u32 %v926, 16
      %v979 = vrot.slane %v977, 5
      %v980 = vor.u32 %v976, %v979
      %v981 = vrot.slane %v980, 4
      %v983 = vshll.u32 %v930, 16
      %v985 = vrot.slane %v983, 5
      %v986 = vsel %vm742, %v981, %v985
      %v987 = vld [vmem:[%s922] sm:$0xe]
      %v988 = vld [vmem:[%s922 + $0x8] sm:$0xe]
      %v989 = vld [vmem:[%s922 + $0x10] sm:$0xe]
      %v990 = vld [vmem:[%s922 + $0x18] sm:$0xe]
      %v999 = vrot.slane %v987, 5
      %v1000 = vrot.slane %v999, 4
      %v1001 = vrot.slane %v927, 5
      %v1002 = vsel %vm813, %v1000, %v1001
      %v1003 = vrot.slane %v988, 5
      %v1004 = vrot.slane %v1003, 4
      %v1005 = vrot.slane %v928, 5
      %v1006 = vsel %vm813, %v1004, %v1005
      %v1007 = vrot.slane %v989, 5
      %v1008 = vrot.slane %v1007, 4
      %v1009 = vrot.slane %v929, 5
      %v1010 = vsel %vm813, %v1008, %v1009
      %v1011 = vrot.slane %v990, 5
      %v1012 = vrot.slane %v1011, 4
      %v1013 = vrot.slane %v930, 5
      %v1014 = vsel %vm813, %v1012, %v1013
      %v1019 = vunpack.c.l.b16 %v732
      %v1020 = vunpack.c.l.b16 %v733
      %v1021 = vunpack.c.l.b16 %v734
      %v1022 = vunpack.c.l.b16 %v735
      %v1023 = vpack.c.b16 %v1020, %v1019
      %v1024 = vpack.c.b16 %v1022, %v1021
      %v1027 = vunpack.c.l.b16 %v756
      %v1028 = vunpack.c.l.b16 %v770
      %v1029 = vunpack.c.l.b16 %v784
      %v1030 = vunpack.c.l.b16 %v798
      %v1031 = vpack.c.b16 %v1028, %v1027
      %v1032 = vpack.c.b16 %v1030, %v1029
      %v1035 = vunpack.c.l.b16 %v817
      %v1036 = vunpack.c.l.b16 %v821
      %v1037 = vunpack.c.l.b16 %v825
      %v1038 = vunpack.c.l.b16 %v829
      %v1039 = vpack.c.b16 %v1036, %v1035
      %v1040 = vpack.c.b16 %v1038, %v1037
      %v1047 = vunpack.c.l.b16 %v830
      %v1048 = vunpack.c.l.b16 %v831
      %v1049 = vunpack.c.l.b16 %v832
      %v1050 = vunpack.c.l.b16 %v833
      %v1051 = vpack.c.b16 %v1048, %v1047
      %v1052 = vpack.c.b16 %v1050, %v1049
      %v1055 = vunpack.c.l.b16 %v851
      %v1056 = vunpack.c.l.b16 %v865
      %v1057 = vunpack.c.l.b16 %v879
      %v1058 = vunpack.c.l.b16 %v893
      %v1059 = vpack.c.b16 %v1056, %v1055
      %v1060 = vpack.c.b16 %v1058, %v1057
      %v1063 = vunpack.c.l.b16 %v909
      %v1064 = vunpack.c.l.b16 %v913
      %v1065 = vunpack.c.l.b16 %v917
      %v1066 = vunpack.c.l.b16 %v921
      %v1067 = vpack.c.b16 %v1064, %v1063
      %v1068 = vpack.c.b16 %v1066, %v1065
      %v1075 = vunpack.c.l.b16 %v923
      %v1076 = vunpack.c.l.b16 %v924
      %v1077 = vunpack.c.l.b16 %v925
      %v1078 = vunpack.c.l.b16 %v926
      %v1079 = vpack.c.b16 %v1076, %v1075
      %v1080 = vpack.c.b16 %v1078, %v1077
      %v1083 = vunpack.c.l.b16 %v944
      %v1084 = vunpack.c.l.b16 %v958
      %v1085 = vunpack.c.l.b16 %v972
      %v1086 = vunpack.c.l.b16 %v986
      %v1087 = vpack.c.b16 %v1084, %v1083
      %v1088 = vpack.c.b16 %v1086, %v1085
      %v1091 = vunpack.c.l.b16 %v1002
      %v1092 = vunpack.c.l.b16 %v1006
      %v1093 = vunpack.c.l.b16 %v1010
      %v1094 = vunpack.c.l.b16 %v1014
      %v1095 = vpack.c.b16 %v1092, %v1091
      %v1096 = vpack.c.b16 %v1094, %v1093
      %v1099 = vld [vmem:[%s5] sm:$0xf]
      %v1100 = vld [vmem:[%s5 + $0x4] sm:$0xf]
      %v1101 = vld [vmem:[%s5 + $0x8] sm:$0xf]
      %v1102 = vld [vmem:[%s5 + $0xc] sm:$0xf]
      %v1103 = vld [vmem:[%s5 + $0x10] sm:$0xf]
      %v1104 = vld [vmem:[%s5 + $0x14] sm:$0xf]
      %v1105 = vld [vmem:[%s5 + $0x18] sm:$0xf]
      %v1106 = vld [vmem:[%s5 + $0x1c] sm:$0xf]
      %v1107 = vld [vmem:[%s5 + $0x20] sm:$0xf]
      %v1108 = vld [vmem:[%s5 + $0x24] sm:$0xf]
      %v1109 = vld [vmem:[%s5 + $0x28] sm:$0xf]
      %v1110 = vld [vmem:[%s5 + $0x2c] sm:$0xf]
      %v1111 = vld [vmem:[%s5 + $0x30] sm:$0xf]
      %v1112 = vld [vmem:[%s5 + $0x34] sm:$0xf]
      %v1113 = vld [vmem:[%s5 + $0x38] sm:$0xf]
      %v1114 = vld [vmem:[%s5 + $0x3c] sm:$0xf]
      %v1115 = vld [vmem:[%s5 + $0x40] sm:$0xf]
      %v1116 = vld [vmem:[%s5 + $0x44] sm:$0xf]
      %v1117 = vld [vmem:[%s5 + $0x48] sm:$0xf]
      %v1118 = vld [vmem:[%s5 + $0x4c] sm:$0xf]
      %v1119 = vld [vmem:[%s5 + $0x50] sm:$0xf]
      %v1120 = vld [vmem:[%s5 + $0x54] sm:$0xf]
      %v1121 = vld [vmem:[%s5 + $0x58] sm:$0xf]
      %v1122 = vld [vmem:[%s5 + $0x5c] sm:$0xf]
      %v1123 = vld [vmem:[%s5 + $0x60] sm:$0xf]
      %v1124 = vld [vmem:[%s5 + $0x64] sm:$0xf]
      %v1125 = vld [vmem:[%s5 + $0x68] sm:$0xf]
      %v1126 = vld [vmem:[%s5 + $0x6c] sm:$0xf]
      %v1127 = vld [vmem:[%s5 + $0x70] sm:$0xf]
      %v1128 = vld [vmem:[%s5 + $0x74] sm:$0xf]
      %v1129 = vld [vmem:[%s5 + $0x78] sm:$0xf]
      %v1130 = vld [vmem:[%s5 + $0x7c] sm:$0xf]
      %v1131 = vld [vmem:[%s5 + $0x80] sm:$0xf]
      %v1132 = vld [vmem:[%s5 + $0x84] sm:$0xf]
      %v1133 = vld [vmem:[%s5 + $0x88] sm:$0xf]
      %v1134 = vld [vmem:[%s5 + $0x8c] sm:$0xf]
      %v1135 = vld [vmem:[%s5 + $0x90] sm:$0xf]
      %v1136 = vld [vmem:[%s5 + $0x94] sm:$0xf]
      %v1137 = vld [vmem:[%s5 + $0x98] sm:$0xf]
      %v1138 = vld [vmem:[%s5 + $0x9c] sm:$0xf]
      %v1139 = vld [vmem:[%s5 + $0xa0] sm:$0xf]
      %v1140 = vld [vmem:[%s5 + $0xa4] sm:$0xf]
      %v1141 = vld [vmem:[%s5 + $0xa8] sm:$0xf]
      %v1142 = vld [vmem:[%s5 + $0xac] sm:$0xf]
      %v1143 = vld [vmem:[%s5 + $0xb0] sm:$0xf]
      %v1144 = vld [vmem:[%s5 + $0xb4] sm:$0xf]
      %v1145 = vld [vmem:[%s5 + $0xb8] sm:$0xf]
      %v1146 = vld [vmem:[%s5 + $0xbc] sm:$0xf]
      %v1147 = vld [vmem:[%s5 + $0xc0] sm:$0xf]
      %v1148 = vld [vmem:[%s5 + $0xc4] sm:$0xf]
      %v1149 = vld [vmem:[%s5 + $0xc8] sm:$0xf]
      %v1150 = vld [vmem:[%s5 + $0xcc] sm:$0xf]
      %v1151 = vld [vmem:[%s5 + $0xd0] sm:$0xf]
      %v1152 = vld [vmem:[%s5 + $0xd4] sm:$0xf]
      %v1153 = vld [vmem:[%s5 + $0xd8] sm:$0xf]
      %v1154 = vld [vmem:[%s5 + $0xdc] sm:$0xf]
      %v1155 = vld [vmem:[%s5 + $0xe0] sm:$0xf]
      %v1156 = vld [vmem:[%s5 + $0xe4] sm:$0xf]
      %v1157 = vld [vmem:[%s5 + $0xe8] sm:$0xf]
      %v1158 = vld [vmem:[%s5 + $0xec] sm:$0xf]
      %v1159 = vld [vmem:[%s5 + $0xf0] sm:$0xf]
      %v1160 = vld [vmem:[%s5 + $0xf4] sm:$0xf]
      %v1161 = vld [vmem:[%s5 + $0xf8] sm:$0xf]
      %v1162 = vld [vmem:[%s5 + $0xfc] sm:$0xf]
      %v1163 = vld [vmem:[%s5 + $0x100] sm:$0xf]
      %v1164 = vld [vmem:[%s5 + $0x104] sm:$0xf]
      %v1165 = vld [vmem:[%s5 + $0x108] sm:$0xf]
      %v1166 = vld [vmem:[%s5 + $0x10c] sm:$0xf]
      %v1167 = vld [vmem:[%s5 + $0x110] sm:$0xf]
      %v1168 = vld [vmem:[%s5 + $0x114] sm:$0xf]
      %v1169 = vld [vmem:[%s5 + $0x118] sm:$0xf]
      %v1170 = vld [vmem:[%s5 + $0x11c] sm:$0xf]
      %v1171 = vld [vmem:[%s5 + $0x120] sm:$0xf]
      %v1172 = vld [vmem:[%s5 + $0x124] sm:$0xf]
      %v1173 = vld [vmem:[%s5 + $0x128] sm:$0xf]
      %v1174 = vld [vmem:[%s5 + $0x12c] sm:$0xf]
      %v1175 = vld [vmem:[%s5 + $0x130] sm:$0xf]
      %v1176 = vld [vmem:[%s5 + $0x134] sm:$0xf]
      %v1177 = vld [vmem:[%s5 + $0x138] sm:$0xf]
      %v1178 = vld [vmem:[%s5 + $0x13c] sm:$0xf]
      %v1179 = vld [vmem:[%s5 + $0x140] sm:$0xf]
      %v1180 = vld [vmem:[%s5 + $0x144] sm:$0xf]
      %v1181 = vld [vmem:[%s5 + $0x148] sm:$0xf]
      %v1182 = vld [vmem:[%s5 + $0x14c] sm:$0xf]
      %v1183 = vld [vmem:[%s5 + $0x150] sm:$0xf]
      %v1184 = vld [vmem:[%s5 + $0x154] sm:$0xf]
      %v1185 = vld [vmem:[%s5 + $0x158] sm:$0xf]
      %v1186 = vld [vmem:[%s5 + $0x15c] sm:$0xf]
      %v1187 = vld [vmem:[%s5 + $0x160] sm:$0xf]
      %v1188 = vld [vmem:[%s5 + $0x164] sm:$0xf]
      %v1189 = vld [vmem:[%s5 + $0x168] sm:$0xf]
      %v1190 = vld [vmem:[%s5 + $0x16c] sm:$0xf]
      %v1191 = vld [vmem:[%s5 + $0x170] sm:$0xf]
      %v1192 = vld [vmem:[%s5 + $0x174] sm:$0xf]
      %v1193 = vld [vmem:[%s5 + $0x178] sm:$0xf]
      %v1194 = vld [vmem:[%s5 + $0x17c] sm:$0xf]
      %v1195 = vld [vmem:[%s5 + $0x180] sm:$0xf]
      %v1196 = vld [vmem:[%s5 + $0x184] sm:$0xf]
      %v1197 = vld [vmem:[%s5 + $0x188] sm:$0xf]
      %v1198 = vld [vmem:[%s5 + $0x18c] sm:$0xf]
      %v1199 = vld [vmem:[%s5 + $0x190] sm:$0xf]
      %v1200 = vld [vmem:[%s5 + $0x194] sm:$0xf]
      %v1201 = vld [vmem:[%s5 + $0x198] sm:$0xf]
      %v1202 = vld [vmem:[%s5 + $0x19c] sm:$0xf]
      %v1203 = vld [vmem:[%s5 + $0x1a0] sm:$0xf]
      %v1204 = vld [vmem:[%s5 + $0x1a4] sm:$0xf]
      %v1205 = vld [vmem:[%s5 + $0x1a8] sm:$0xf]
      %v1206 = vld [vmem:[%s5 + $0x1ac] sm:$0xf]
      %v1207 = vld [vmem:[%s5 + $0x1b0] sm:$0xf]
      %v1208 = vld [vmem:[%s5 + $0x1b4] sm:$0xf]
      %v1209 = vld [vmem:[%s5 + $0x1b8] sm:$0xf]
      %v1210 = vld [vmem:[%s5 + $0x1bc] sm:$0xf]
      %v1211 = vld [vmem:[%s5 + $0x1c0] sm:$0xf]
      %v1212 = vld [vmem:[%s5 + $0x1c4] sm:$0xf]
      %v1213 = vld [vmem:[%s5 + $0x1c8] sm:$0xf]
      %v1214 = vld [vmem:[%s5 + $0x1cc] sm:$0xf]
      %v1215 = vld [vmem:[%s5 + $0x1d0] sm:$0xf]
      %v1216 = vld [vmem:[%s5 + $0x1d4] sm:$0xf]
      %v1217 = vld [vmem:[%s5 + $0x1d8] sm:$0xf]
      %v1218 = vld [vmem:[%s5 + $0x1dc] sm:$0xf]
      %v1219 = vld [vmem:[%s5 + $0x1e0] sm:$0xf]
      %v1220 = vld [vmem:[%s5 + $0x1e4] sm:$0xf]
      %v1221 = vld [vmem:[%s5 + $0x1e8] sm:$0xf]
      %v1222 = vld [vmem:[%s5 + $0x1ec] sm:$0xf]
      %v1223 = vld [vmem:[%s5 + $0x1f0] sm:$0xf]
      %v1224 = vld [vmem:[%s5 + $0x1f4] sm:$0xf]
      %v1225 = vld [vmem:[%s5 + $0x1f8] sm:$0xf]
      %v1226 = vld [vmem:[%s5 + $0x1fc] sm:$0xf]
      %v1227 = vld [vmem:[%s5 + $0x200] sm:$0xf]
      %v1228 = vld [vmem:[%s5 + $0x204] sm:$0xf]
      %v1229 = vld [vmem:[%s5 + $0x208] sm:$0xf]
      %v1230 = vld [vmem:[%s5 + $0x20c] sm:$0xf]
      %v1231 = vld [vmem:[%s5 + $0x210] sm:$0xf]
      %v1232 = vld [vmem:[%s5 + $0x214] sm:$0xf]
      %v1233 = vld [vmem:[%s5 + $0x218] sm:$0xf]
      %v1234 = vld [vmem:[%s5 + $0x21c] sm:$0xf]
      %v1235 = vld [vmem:[%s5 + $0x220] sm:$0xf]
      %v1236 = vld [vmem:[%s5 + $0x224] sm:$0xf]
      %v1237 = vld [vmem:[%s5 + $0x228] sm:$0xf]
      %v1238 = vld [vmem:[%s5 + $0x22c] sm:$0xf]
      %v1239 = vld [vmem:[%s5 + $0x230] sm:$0xf]
      %v1240 = vld [vmem:[%s5 + $0x234] sm:$0xf]
      %v1241 = vld [vmem:[%s5 + $0x238] sm:$0xf]
      %v1242 = vld [vmem:[%s5 + $0x23c] sm:$0xf]
      %v1243 = vld [vmem:[%s6] sm:$0x1]
      %v1245 = vperm.slane %v1243, 0
      %v1391 = vunpack.c.l.b16 %v1099
      %v1392 = vunpack.c.l.b16 %v1100
      %v1393 = vunpack.c.l.b16 %v1101
      %v1394 = vunpack.c.l.b16 %v1102
      %v1395 = vunpack.c.l.b16 %v1103
      %v1396 = vunpack.c.l.b16 %v1104
      %v1397 = vunpack.c.l.b16 %v1105
      %v1398 = vunpack.c.l.b16 %v1106
      %v1399 = vunpack.c.l.b16 %v1107
      %v1400 = vunpack.c.l.b16 %v1108
      %v1401 = vunpack.c.l.b16 %v1109
      %v1402 = vunpack.c.l.b16 %v1110
      %v1403 = vunpack.c.l.b16 %v1111
      %v1404 = vunpack.c.l.b16 %v1112
      %v1405 = vunpack.c.l.b16 %v1113
      %v1406 = vunpack.c.l.b16 %v1114
      %v1407 = vunpack.c.l.b16 %v1115
      %v1408 = vunpack.c.l.b16 %v1116
      %v1409 = vunpack.c.l.b16 %v1117
      %v1410 = vunpack.c.l.b16 %v1118
      %v1411 = vunpack.c.l.b16 %v1119
      %v1412 = vunpack.c.l.b16 %v1120
      %v1413 = vunpack.c.l.b16 %v1121
      %v1414 = vunpack.c.l.b16 %v1122
      %v1415 = vunpack.c.l.b16 %v1123
      %v1416 = vunpack.c.l.b16 %v1124
      %v1417 = vunpack.c.l.b16 %v1125
      %v1418 = vunpack.c.l.b16 %v1126
      %v1419 = vunpack.c.l.b16 %v1127
      %v1420 = vunpack.c.l.b16 %v1128
      %v1421 = vunpack.c.l.b16 %v1129
      %v1422 = vunpack.c.l.b16 %v1130
      %v1423 = vunpack.c.l.b16 %v1131
      %v1424 = vunpack.c.l.b16 %v1132
      %v1425 = vunpack.c.l.b16 %v1133
      %v1426 = vunpack.c.l.b16 %v1134
      %v1427 = vunpack.c.l.b16 %v1135
      %v1428 = vunpack.c.l.b16 %v1136
      %v1429 = vunpack.c.l.b16 %v1137
      %v1430 = vunpack.c.l.b16 %v1138
      %v1431 = vunpack.c.l.b16 %v1139
      %v1432 = vunpack.c.l.b16 %v1140
      %v1433 = vunpack.c.l.b16 %v1141
      %v1434 = vunpack.c.l.b16 %v1142
      %v1435 = vunpack.c.l.b16 %v1143
      %v1436 = vunpack.c.l.b16 %v1144
      %v1437 = vunpack.c.l.b16 %v1145
      %v1438 = vunpack.c.l.b16 %v1146
      %v1439 = vunpack.c.l.b16 %v1147
      %v1440 = vunpack.c.l.b16 %v1148
      %v1441 = vunpack.c.l.b16 %v1149
      %v1442 = vunpack.c.l.b16 %v1150
      %v1443 = vunpack.c.l.b16 %v1151
      %v1444 = vunpack.c.l.b16 %v1152
      %v1445 = vunpack.c.l.b16 %v1153
      %v1446 = vunpack.c.l.b16 %v1154
      %v1447 = vunpack.c.l.b16 %v1155
      %v1448 = vunpack.c.l.b16 %v1156
      %v1449 = vunpack.c.l.b16 %v1157
      %v1450 = vunpack.c.l.b16 %v1158
      %v1451 = vunpack.c.l.b16 %v1159
      %v1452 = vunpack.c.l.b16 %v1160
      %v1453 = vunpack.c.l.b16 %v1161
      %v1454 = vunpack.c.l.b16 %v1162
      %v1455 = vunpack.c.l.b16 %v1163
      %v1456 = vunpack.c.l.b16 %v1164
      %v1457 = vunpack.c.l.b16 %v1165
      %v1458 = vunpack.c.l.b16 %v1166
      %v1459 = vunpack.c.l.b16 %v1167
      %v1460 = vunpack.c.l.b16 %v1168
      %v1461 = vunpack.c.l.b16 %v1169
      %v1462 = vunpack.c.l.b16 %v1170
      %v1463 = vunpack.c.l.b16 %v1171
      %v1464 = vunpack.c.l.b16 %v1172
      %v1465 = vunpack.c.l.b16 %v1173
      %v1466 = vunpack.c.l.b16 %v1174
      %v1467 = vunpack.c.l.b16 %v1175
      %v1468 = vunpack.c.l.b16 %v1176
      %v1469 = vunpack.c.l.b16 %v1177
      %v1470 = vunpack.c.l.b16 %v1178
      %v1471 = vunpack.c.l.b16 %v1179
      %v1472 = vunpack.c.l.b16 %v1180
      %v1473 = vunpack.c.l.b16 %v1181
      %v1474 = vunpack.c.l.b16 %v1182
      %v1475 = vunpack.c.l.b16 %v1183
      %v1476 = vunpack.c.l.b16 %v1184
      %v1477 = vunpack.c.l.b16 %v1185
      %v1478 = vunpack.c.l.b16 %v1186
      %v1479 = vunpack.c.l.b16 %v1187
      %v1480 = vunpack.c.l.b16 %v1188
      %v1481 = vunpack.c.l.b16 %v1189
      %v1482 = vunpack.c.l.b16 %v1190
      %v1483 = vunpack.c.l.b16 %v1191
      %v1484 = vunpack.c.l.b16 %v1192
      %v1485 = vunpack.c.l.b16 %v1193
      %v1486 = vunpack.c.l.b16 %v1194
      %v1487 = vunpack.c.l.b16 %v1195
      %v1488 = vunpack.c.l.b16 %v1196
      %v1489 = vunpack.c.l.b16 %v1197
      %v1490 = vunpack.c.l.b16 %v1198
      %v1491 = vunpack.c.l.b16 %v1199
      %v1492 = vunpack.c.l.b16 %v1200
      %v1493 = vunpack.c.l.b16 %v1201
      %v1494 = vunpack.c.l.b16 %v1202
      %v1495 = vunpack.c.l.b16 %v1203
      %v1496 = vunpack.c.l.b16 %v1204
      %v1497 = vunpack.c.l.b16 %v1205
      %v1498 = vunpack.c.l.b16 %v1206
      %v1499 = vunpack.c.l.b16 %v1207
      %v1500 = vunpack.c.l.b16 %v1208
      %v1501 = vunpack.c.l.b16 %v1209
      %v1502 = vunpack.c.l.b16 %v1210
      %v1503 = vunpack.c.l.b16 %v1211
      %v1504 = vunpack.c.l.b16 %v1212
      %v1505 = vunpack.c.l.b16 %v1213
      %v1506 = vunpack.c.l.b16 %v1214
      %v1507 = vunpack.c.l.b16 %v1215
      %v1508 = vunpack.c.l.b16 %v1216
      %v1509 = vunpack.c.l.b16 %v1217
      %v1510 = vunpack.c.l.b16 %v1218
      %v1511 = vunpack.c.l.b16 %v1219
      %v1512 = vunpack.c.l.b16 %v1220
      %v1513 = vunpack.c.l.b16 %v1221
      %v1514 = vunpack.c.l.b16 %v1222
      %v1515 = vunpack.c.l.b16 %v1223
      %v1516 = vunpack.c.l.b16 %v1224
      %v1517 = vunpack.c.l.b16 %v1225
      %v1518 = vunpack.c.l.b16 %v1226
      %v1519 = vunpack.c.l.b16 %v1227
      %v1520 = vunpack.c.l.b16 %v1228
      %v1521 = vunpack.c.l.b16 %v1229
      %v1522 = vunpack.c.l.b16 %v1230
      %v1523 = vunpack.c.l.b16 %v1231
      %v1524 = vunpack.c.l.b16 %v1232
      %v1525 = vunpack.c.l.b16 %v1233
      %v1526 = vunpack.c.l.b16 %v1234
      %v1527 = vunpack.c.l.b16 %v1235
      %v1528 = vunpack.c.l.b16 %v1236
      %v1529 = vunpack.c.l.b16 %v1237
      %v1530 = vunpack.c.l.b16 %v1238
      %v1531 = vunpack.c.l.b16 %v1239
      %v1532 = vunpack.c.l.b16 %v1240
      %v1533 = vunpack.c.l.b16 %v1241
      %v1534 = vunpack.c.l.b16 %v1242
      %v1535 = vpack.c.b16 %v1392, %v1391
      %v1536 = vpack.c.b16 %v1394, %v1393
      %v1537 = vpack.c.b16 %v1396, %v1395
      %v1538 = vpack.c.b16 %v1398, %v1397
      %v1539 = vpack.c.b16 %v1400, %v1399
      %v1540 = vpack.c.b16 %v1402, %v1401
      %v1541 = vpack.c.b16 %v1404, %v1403
      %v1542 = vpack.c.b16 %v1406, %v1405
      %v1543 = vpack.c.b16 %v1408, %v1407
      %v1544 = vpack.c.b16 %v1410, %v1409
      %v1545 = vpack.c.b16 %v1412, %v1411
      %v1546 = vpack.c.b16 %v1414, %v1413
      %v1547 = vpack.c.b16 %v1416, %v1415
      %v1548 = vpack.c.b16 %v1418, %v1417
      %v1549 = vpack.c.b16 %v1420, %v1419
      %v1550 = vpack.c.b16 %v1422, %v1421
      %v1551 = vpack.c.b16 %v1424, %v1423
      %v1552 = vpack.c.b16 %v1426, %v1425
      %v1553 = vpack.c.b16 %v1428, %v1427
      %v1554 = vpack.c.b16 %v1430, %v1429
      %v1555 = vpack.c.b16 %v1432, %v1431
      %v1556 = vpack.c.b16 %v1434, %v1433
      %v1557 = vpack.c.b16 %v1436, %v1435
      %v1558 = vpack.c.b16 %v1438, %v1437
      %v1559 = vpack.c.b16 %v1440, %v1439
      %v1560 = vpack.c.b16 %v1442, %v1441
      %v1561 = vpack.c.b16 %v1444, %v1443
      %v1562 = vpack.c.b16 %v1446, %v1445
      %v1563 = vpack.c.b16 %v1448, %v1447
      %v1564 = vpack.c.b16 %v1450, %v1449
      %v1565 = vpack.c.b16 %v1452, %v1451
      %v1566 = vpack.c.b16 %v1454, %v1453
      %v1567 = vpack.c.b16 %v1456, %v1455
      %v1568 = vpack.c.b16 %v1458, %v1457
      %v1569 = vpack.c.b16 %v1460, %v1459
      %v1570 = vpack.c.b16 %v1462, %v1461
      %v1571 = vpack.c.b16 %v1464, %v1463
      %v1572 = vpack.c.b16 %v1466, %v1465
      %v1573 = vpack.c.b16 %v1468, %v1467
      %v1574 = vpack.c.b16 %v1470, %v1469
      %v1575 = vpack.c.b16 %v1472, %v1471
      %v1576 = vpack.c.b16 %v1474, %v1473
      %v1577 = vpack.c.b16 %v1476, %v1475
      %v1578 = vpack.c.b16 %v1478, %v1477
      %v1579 = vpack.c.b16 %v1480, %v1479
      %v1580 = vpack.c.b16 %v1482, %v1481
      %v1581 = vpack.c.b16 %v1484, %v1483
      %v1582 = vpack.c.b16 %v1486, %v1485
      %v1583 = vpack.c.b16 %v1488, %v1487
      %v1584 = vpack.c.b16 %v1490, %v1489
      %v1585 = vpack.c.b16 %v1492, %v1491
      %v1586 = vpack.c.b16 %v1494, %v1493
      %v1587 = vpack.c.b16 %v1496, %v1495
      %v1588 = vpack.c.b16 %v1498, %v1497
      %v1589 = vpack.c.b16 %v1500, %v1499
      %v1590 = vpack.c.b16 %v1502, %v1501
      %v1591 = vpack.c.b16 %v1504, %v1503
      %v1592 = vpack.c.b16 %v1506, %v1505
      %v1593 = vpack.c.b16 %v1508, %v1507
      %v1594 = vpack.c.b16 %v1510, %v1509
      %v1595 = vpack.c.b16 %v1512, %v1511
      %v1596 = vpack.c.b16 %v1514, %v1513
      %v1597 = vpack.c.b16 %v1516, %v1515
      %v1598 = vpack.c.b16 %v1518, %v1517
      %v1599 = vpack.c.b16 %v1520, %v1519
      %v1600 = vpack.c.b16 %v1522, %v1521
      %v1601 = vpack.c.b16 %v1524, %v1523
      %v1602 = vpack.c.b16 %v1526, %v1525
      %v1603 = vpack.c.b16 %v1528, %v1527
      %v1604 = vpack.c.b16 %v1530, %v1529
      %v1605 = vpack.c.b16 %v1532, %v1531
      %v1606 = vpack.c.b16 %v1534, %v1533
      %1679 = vmatpush.bf16.msra.mxu0 %v1542
      %1680 = vmatpush.bf16.msra.mxu0 %v1541
      %1681 = vmatpush.bf16.msra.mxu0 %v1540
      %1682 = vmatpush.bf16.msra.mxu0 %v1539
      %1683 = vmatpush.bf16.msra.mxu0 %v1538
      %1684 = vmatpush.bf16.msra.mxu0 %v1537
      %1685 = vmatpush.bf16.msra.mxu0 %v1536
      %1686 = vmatpush.bf16.msra.mxu0 %v1535
      %1687 = vmatmul.bf16.gmra.mxu0 %v1023
      %v1688 = vpop.f32.mrf.mxu0
      %v1689 = vadd.f32 %v1245, %v1688
      %v1690 = vpop.f32.mrf.mxu0
      %v1691 = vadd.f32 %v1245, %v1690
      %1692 = vmatmul.bf16.gmra.mxu0 %v1024
      %v1693 = vpop.f32.mrf.mxu0
      %v1694 = vadd.f32 %v1245, %v1693
      %v1695 = vpop.f32.mrf.mxu0
      %v1696 = vadd.f32 %v1245, %v1695
      %1697 = vdwg.mxu0
      %1698 = vmatpush.bf16.msra.mxu0 %v1550
      %1699 = vmatpush.bf16.msra.mxu0 %v1549
      %1700 = vmatpush.bf16.msra.mxu0 %v1548
      %1701 = vmatpush.bf16.msra.mxu0 %v1547
      %1702 = vmatpush.bf16.msra.mxu0 %v1546
      %1703 = vmatpush.bf16.msra.mxu0 %v1545
      %1704 = vmatpush.bf16.msra.mxu0 %v1544
      %1705 = vmatpush.bf16.msra.mxu0 %v1543
      %1706 = vmatmul.bf16.gmra.mxu0 %v1031
      %v1707 = vpop.f32.mrf.mxu0
      %v1708 = vadd.f32 %v1689, %v1707
      %v1709 = vpop.f32.mrf.mxu0
      %v1710 = vadd.f32 %v1691, %v1709
      %1711 = vmatmul.bf16.gmra.mxu0 %v1032
      %v1712 = vpop.f32.mrf.mxu0
      %v1713 = vadd.f32 %v1694, %v1712
      %v1714 = vpop.f32.mrf.mxu0
      %v1715 = vadd.f32 %v1696, %v1714
      %1716 = vdwg.mxu0
      %1717 = vmatpush.bf16.msra.mxu0 %v1558
      %1718 = vmatpush.bf16.msra.mxu0 %v1557
      %1719 = vmatpush.bf16.msra.mxu0 %v1556
      %1720 = vmatpush.bf16.msra.mxu0 %v1555
      %1721 = vmatpush.bf16.msra.mxu0 %v1554
      %1722 = vmatpush.bf16.msra.mxu0 %v1553
      %1723 = vmatpush.bf16.msra.mxu0 %v1552
      %1724 = vmatpush.bf16.msra.mxu0 %v1551
      %1725 = vmatmul.bf16.gmra.mxu0 %v1039
      %v1726 = vpop.f32.mrf.mxu0
      %v1727 = vadd.f32 %v1708, %v1726
      %v1728 = vpop.f32.mrf.mxu0
      %v1729 = vadd.f32 %v1710, %v1728
      %1730 = vmatmul.bf16.gmra.mxu0 %v1040
      %v1731 = vpop.f32.mrf.mxu0
      %v1732 = vadd.f32 %v1713, %v1731
      %v1733 = vpop.f32.mrf.mxu0
      %v1734 = vadd.f32 %v1715, %v1733
      %1735 = vdwg.mxu0
      %1736 = vmatpush.bf16.msra.mxu0 %v1566
      %1737 = vmatpush.bf16.msra.mxu0 %v1565
      %1738 = vmatpush.bf16.msra.mxu0 %v1564
      %1739 = vmatpush.bf16.msra.mxu0 %v1563
      %1740 = vmatpush.bf16.msra.mxu0 %v1562
      %1741 = vmatpush.bf16.msra.mxu0 %v1561
      %1742 = vmatpush.bf16.msra.mxu0 %v1560
      %1743 = vmatpush.bf16.msra.mxu0 %v1559
      %1744 = vmatmul.bf16.gmra.mxu0 %v1051
      %v1745 = vpop.f32.mrf.mxu0
      %v1746 = vadd.f32 %v1727, %v1745
      %v1747 = vpop.f32.mrf.mxu0
      %v1748 = vadd.f32 %v1729, %v1747
      %1749 = vmatmul.bf16.gmra.mxu0 %v1052
      %v1750 = vpop.f32.mrf.mxu0
      %v1751 = vadd.f32 %v1732, %v1750
      %v1752 = vpop.f32.mrf.mxu0
      %v1753 = vadd.f32 %v1734, %v1752
      %1754 = vdwg.mxu0
      %1755 = vmatpush.bf16.msra.mxu0 %v1574
      %1756 = vmatpush.bf16.msra.mxu0 %v1573
      %1757 = vmatpush.bf16.msra.mxu0 %v1572
      %1758 = vmatpush.bf16.msra.mxu0 %v1571
      %1759 = vmatpush.bf16.msra.mxu0 %v1570
      %1760 = vmatpush.bf16.msra.mxu0 %v1569
      %1761 = vmatpush.bf16.msra.mxu0 %v1568
      %1762 = vmatpush.bf16.msra.mxu0 %v1567
      %1763 = vmatmul.bf16.gmra.mxu0 %v1059
      %v1764 = vpop.f32.mrf.mxu0
      %v1765 = vadd.f32 %v1746, %v1764
      %v1766 = vpop.f32.mrf.mxu0
      %v1767 = vadd.f32 %v1748, %v1766
      %1768 = vmatmul.bf16.gmra.mxu0 %v1060
      %v1769 = vpop.f32.mrf.mxu0
      %v1770 = vadd.f32 %v1751, %v1769
      %v1771 = vpop.f32.mrf.mxu0
      %v1772 = vadd.f32 %v1753, %v1771
      %1773 = vdwg.mxu0
      %1774 = vmatpush.bf16.msra.mxu0 %v1582
      %1775 = vmatpush.bf16.msra.mxu0 %v1581
      %1776 = vmatpush.bf16.msra.mxu0 %v1580
      %1777 = vmatpush.bf16.msra.mxu0 %v1579
      %1778 = vmatpush.bf16.msra.mxu0 %v1578
      %1779 = vmatpush.bf16.msra.mxu0 %v1577
      %1780 = vmatpush.bf16.msra.mxu0 %v1576
      %1781 = vmatpush.bf16.msra.mxu0 %v1575
      %1782 = vmatmul.bf16.gmra.mxu0 %v1067
      %v1783 = vpop.f32.mrf.mxu0
      %v1784 = vadd.f32 %v1765, %v1783
      %v1785 = vpop.f32.mrf.mxu0
      %v1786 = vadd.f32 %v1767, %v1785
      %1787 = vmatmul.bf16.gmra.mxu0 %v1068
      %v1788 = vpop.f32.mrf.mxu0
      %v1789 = vadd.f32 %v1770, %v1788
      %v1790 = vpop.f32.mrf.mxu0
      %v1791 = vadd.f32 %v1772, %v1790
      %1792 = vdwg.mxu0
      %1793 = vmatpush.bf16.msra.mxu0 %v1590
      %1794 = vmatpush.bf16.msra.mxu0 %v1589
      %1795 = vmatpush.bf16.msra.mxu0 %v1588
      %1796 = vmatpush.bf16.msra.mxu0 %v1587
      %1797 = vmatpush.bf16.msra.mxu0 %v1586
      %1798 = vmatpush.bf16.msra.mxu0 %v1585
      %1799 = vmatpush.bf16.msra.mxu0 %v1584
      %1800 = vmatpush.bf16.msra.mxu0 %v1583
      %1801 = vmatmul.bf16.gmra.mxu0 %v1079
      %v1802 = vpop.f32.mrf.mxu0
      %v1803 = vadd.f32 %v1784, %v1802
      %v1804 = vpop.f32.mrf.mxu0
      %v1805 = vadd.f32 %v1786, %v1804
      %1806 = vmatmul.bf16.gmra.mxu0 %v1080
      %v1807 = vpop.f32.mrf.mxu0
      %v1808 = vadd.f32 %v1789, %v1807
      %v1809 = vpop.f32.mrf.mxu0
      %v1810 = vadd.f32 %v1791, %v1809
      %1811 = vdwg.mxu0
      %1812 = vmatpush.bf16.msra.mxu0 %v1598
      %1813 = vmatpush.bf16.msra.mxu0 %v1597
      %1814 = vmatpush.bf16.msra.mxu0 %v1596
      %1815 = vmatpush.bf16.msra.mxu0 %v1595
      %1816 = vmatpush.bf16.msra.mxu0 %v1594
      %1817 = vmatpush.bf16.msra.mxu0 %v1593
      %1818 = vmatpush.bf16.msra.mxu0 %v1592
      %1819 = vmatpush.bf16.msra.mxu0 %v1591
      %1820 = vmatmul.bf16.gmra.mxu0 %v1087
      %v1821 = vpop.f32.mrf.mxu0
      %v1822 = vadd.f32 %v1803, %v1821
      %v1823 = vpop.f32.mrf.mxu0
      %v1824 = vadd.f32 %v1805, %v1823
      %1825 = vmatmul.bf16.gmra.mxu0 %v1088
      %v1826 = vpop.f32.mrf.mxu0
      %v1827 = vadd.f32 %v1808, %v1826
      %v1828 = vpop.f32.mrf.mxu0
      %v1829 = vadd.f32 %v1810, %v1828
      %1830 = vdwg.mxu0
      %1831 = vmatpush.bf16.msra.mxu0 %v1606
      %1832 = vmatpush.bf16.msra.mxu0 %v1605
      %1833 = vmatpush.bf16.msra.mxu0 %v1604
      %1834 = vmatpush.bf16.msra.mxu0 %v1603
      %1835 = vmatpush.bf16.msra.mxu0 %v1602
      %1836 = vmatpush.bf16.msra.mxu0 %v1601
      %1837 = vmatpush.bf16.msra.mxu0 %v1600
      %1838 = vmatpush.bf16.msra.mxu0 %v1599
      %1839 = vmatmul.bf16.gmra.mxu0 %v1095
      %v1840 = vpop.f32.mrf.mxu0
      %v1841 = vadd.f32 %v1822, %v1840
      %v1842 = vpop.f32.mrf.mxu0
      %v1843 = vadd.f32 %v1824, %v1842
      %1844 = vmatmul.bf16.gmra.mxu0 %v1096
      %v1845 = vpop.f32.mrf.mxu0
      %v1846 = vadd.f32 %v1827, %v1845
      %v1847 = vpop.f32.mrf.mxu0
      %v1848 = vadd.f32 %v1829, %v1847
      %1849 = vdwg.mxu0
      %v1850 = vld [vmem:[%s492] sm:$0xf]
      %v1851 = vld [vmem:[%s492 + $0x4] sm:$0xf]
      %v1852 = vld [vmem:[%s492 + $0x8] sm:$0xf]
      %v1853 = vld [vmem:[%s492 + $0xc] sm:$0xf]
      %v1854 = vunpack.c.l.bf16 %v1850
      %v1855 = vunpack.c.l.bf16 %v1851
      %v1856 = vunpack.c.l.bf16 %v1852
      %v1857 = vunpack.c.l.bf16 %v1853
      %v1858 = vadd.f32 %v1841, %v1854
      %v1859 = vadd.f32 %v1843, %v1855
      %v1860 = vadd.f32 %v1846, %v1856
      %v1861 = vadd.f32 %v1848, %v1857
      %1862 = vst [vmem:[%s502] sm:$0xff] %v1858
      %1863 = vst [vmem:[%s502 + $0x8] sm:$0xff] %v1859
      %1864 = vst [vmem:[%s502 + $0x10] sm:$0xff] %v1860
      %1865 = vst [vmem:[%s502 + $0x18] sm:$0xff] %v1861
      %s1866 = smul.u32 %s23, 2
      %s1867 = sadd.s32 %s1866, %s24
      %s1868 = smul.u32 4, %s1867
      %p1869 = scmp.lt.s32.totalorder %s1868, 15
      %s1870 = scalar_select %p1869, %s1868, 15
      %s1871 = smul.addr %s1870, 8
      %s1872 = scalar_lea.vmem %s8, %s1871
      // Predicated region
      $region53: #{res_down_forward.5} parent=51 // pred_check
        %p1873 = pneg %p275
      $region54: #{res_down_forward.5} parent=51 // pred_check_branch
        %1875 = sbr.rel (%p1873) target = $region56
      $region55: #{res_down_forward.5} parent=51 // pred_region
        %s1876 = smul.u32 %s23, 2
        %s1877 = sadd.s32 %s1876, %s24
        %s1878 = smul.u32 4, %s1877
      $region56: #{res_down_forward.5} parent=51 // pred_fallthru
        _
    $region52: #{res_down_forward.5} parent=5 // pred_fallthru
      _
    %p1879 = scmp.le.s32.totalorder 2, %s14
    // Predicated region
    $region57: #{res_down_forward.5} parent=5 // pred_check
      %p1880 = pneg %p1879
    $region58: #{res_down_forward.5} parent=5 // pred_check_branch
      %1882 = sbr.rel (%p1880) target = $region60
    $region59: #{res_down_forward.5} parent=5 // pred_region
      %s1883 = ssub.s32 %s14, 2
      // Predicated region
      $region61: #{res_down_forward.5} parent=59 // pred_check
        %p1884 = pneg %p281
      $region62: #{res_down_forward.5} parent=59 // pred_check_branch
        %1886 = sbr.rel (%p1884) target = $region64
      $region63: #{res_down_forward.5} parent=59 // pred_region
        %s1887 = smul.u32 %s25, 2
        %s1888 = sadd.s32 %s1887, %s26
        %s1889 = smul.u32 4, %s1888
        %p1890 = scmp.lt.s32.totalorder %s1889, 15
        %s1891 = scalar_select %p1890, %s1889, 15
        %s1892 = smul.addr %s1891, 8
        %s1893 = scalar_lea.vmem %s8, %s1892
      $region64: #{res_down_forward.5} parent=59 // pred_fallthru
        _
    $region60: #{res_down_forward.5} parent=5 // pred_fallthru
      _
  $region6: #{res_down_forward.5} parent=0 // loop_footer
    %s18 = sadd.s32 1, %s14
  $region7: #{res_down_forward.5} parent=0 // loop_footer_branch
    %13 = sbr.rel target = $region3
  $region8: #{res_down_forward.5} parent=0 // loop_exit
    _

</llo_original>
